<compile_context>
chip_gen: v7x
topology: tpu7x:2x2x1
jax: 0.10.0
libtpu: 0.0.40
codegen_flags: <defaults>
</compile_context>

<pallas_src>
import jax
import jax.numpy as jnp
from jax.experimental import pallas as pl
from jax.experimental.pallas import tpu as pltpu

# --- model hyper-parameters (the `opt` of the PyTorch module) ---------------
STATE_DIM = 32
ANNOT_DIM = 8
N_EDGE_TYPES = 2
N_NODE = 8
N_STEPS = 5
BATCH = 2

SLAB = 128                        # lane-aligned width of every fused column slab
N_MSG_SLABS = 2 * N_EDGE_TYPES    # message slabs: in_0, in_1, out_0, out_1


# ---------------------------------------------------------------------------
# Pallas kernel: single invocation, whole problem resident in VMEM.
# Inputs:
#   prop_ref : (BN, S)                     flattened prop state
#   ann_ref  : (BN, annot)                 flattened annotation
#   Aall_ref : (BN, 2E*BN)                 [Ain_0|Ain_1|Aout_0|Aout_1] block-diag over batch
#   Wall_ref : (S, (2E+1)*128)             per-slab (128-lane padded):
#                slab e<2E : W_{in/out,e} @ [Wr_a|Wz_a|Wh_a]   (gate space, width 3S)
#                slab 2E   : [Wr_p|Wz_p|0]                      (prop-direct)
#   ball_ref : (1, (2E+1)*128)             matching biases (prop-direct slab carries br|bz|bh)
#   Whp_ref  : (S, S)                      Wh rows applied to (r * prop)
#   Wo1s_ref : (S, S)                      output-head Linear, state rows
#   Wo1a_ref : (annot, S)                  output-head Linear, annotation rows
#   tail_ref : (1, 128)                    [bo1 | Wo2^T | bo2 | pad]
# Output:
#   out_ref  : (BN, 1)                     per-node score (wrapper reshapes to (B, N))
# Scratch:
#   msg_ref  : (2E*BN, 128) VMEM           sublane-stacked gate-space messages
# ---------------------------------------------------------------------------
def ggnn_kernel(prop_ref, ann_ref, Aall_ref, Wall_ref, ball_ref, Whp_ref,
                Wo1s_ref, Wo1a_ref, tail_ref, out_ref, msg_ref):
    S = STATE_DIM
    BN = prop_ref.shape[0]

    prop = prop_ref[...]                                   # (BN, S)
    Wall = Wall_ref[...]                                   # (S, (2E+1)*128)
    ball = ball_ref[...]                                   # (1, (2E+1)*128)
    Aall = Aall_ref[...]                                   # (BN, 2E*BN)
    Whp = Whp_ref[...]                                     # (S, S)

    for _ in range(N_STEPS):                               # static unroll
        # One lane-dense matmul: all per-edge in/out transforms already in gate
        # space, plus the prop-direct r/z contribution; biases folded.
        base = jnp.dot(prop, Wall, preferred_element_type=jnp.float32) + ball  # (BN, 5*128)

        # Stack the 2E message slabs on sublanes (lane-aligned 128-wide copies)
        # so the whole aggregation is ONE (BN, 2E*BN) @ (2E*BN, 128) matmul.
        for e in range(N_MSG_SLABS):
            msg_ref[e * BN:(e + 1) * BN, :] = base[:, e * SLAB:(e + 1) * SLAB]

        gates = (jnp.dot(Aall, msg_ref[...], preferred_element_type=jnp.float32)
                 + base[:, N_MSG_SLABS * SLAB:(N_MSG_SLABS + 1) * SLAB])        # (BN, 128)
        # gates columns: [0:S]=r-arg, [S:2S]=z-arg, [2S:3S]=h-arg (minus r*prop term)

        rz = jax.nn.sigmoid(gates[:, 0:2 * S])             # fused r and z
        r = rz[:, 0:S]
        z = rz[:, S:2 * S]
        h_hat = jnp.tanh(gates[:, 2 * S:3 * S]
                         + jnp.dot(r * prop, Whp, preferred_element_type=jnp.float32))
        prop = (1.0 - z) * prop + z * h_hat

    # ---- output head: Linear -> Tanh -> Linear, no K=40 concat --------------
    bo1 = tail_ref[:, 0:S]                                 # (1, S)
    wo2 = tail_ref[:, S:2 * S]                             # (1, S) == Wo2^T
    bo2 = tail_ref[:, 2 * S:2 * S + 1]                     # (1, 1)
    h1 = jnp.tanh(jnp.dot(prop, Wo1s_ref[...], preferred_element_type=jnp.float32)
                  + jnp.dot(ann_ref[...], Wo1a_ref[...], preferred_element_type=jnp.float32)
                  + bo1)
    out_ref[...] = jnp.sum(h1 * wo2, axis=1, keepdims=True) + bo2


# ---------------------------------------------------------------------------
# Wrapper-side layout plumbing (no per-call arithmetic beyond folding constant
# weight products once): flatten batch, build lane-concatenated block-diagonal
# adjacency, fold gate weights into per-edge slabs, pad slabs to 128 lanes.
# ---------------------------------------------------------------------------
def _pad_lanes(x, width=SLAB):
    return jnp.pad(x, ((0, 0), (0, width - x.shape[1])))


def pack_adjacency(A):
    """A: (B, N, 2*N*E) -> (B*N, 2*E*B*N)  [Ain_0|..|Ain_E-1|Aout_0|..|Aout_E-1],
    each block block-diagonal over the batch."""
    B = A.shape[0]
    BN = B * N_NODE
    mats = []
    for d in range(2):                       # 0 = in, 1 = out
        for e in range(N_EDGE_TYPES):
            col0 = (d * N_EDGE_TYPES + e) * N_NODE
            bd = jnp.zeros((BN, BN), jnp.float32)
            for b in range(B):
                blk = A[b, :, col0:col0 + N_NODE]
                bd = bd.at[b * N_NODE:(b + 1) * N_NODE,
                           b * N_NODE:(b + 1) * N_NODE].set(blk)
            mats.append(bd)
    return jnp.concatenate(mats, axis=1)     # (BN, 2*E*BN)


def pack_params(params):
    (W_in, b_in, W_out, b_out, Wr, br, Wz, bz, Wh, bh, Wo1, bo1, Wo2, bo2) = params
    S = STATE_DIM
    E = N_EDGE_TYPES
    # Gate weights (rows acting on a_in / a_out), columns = [r | z | h].
    G_in = jnp.concatenate([Wr[0:S], Wz[0:S], Wh[0:S]], axis=1)          # (S, 3S)
    G_out = jnp.concatenate([Wr[S:2 * S], Wz[S:2 * S], Wh[S:2 * S]], axis=1)

    w_slabs, b_slabs = [], []
    for e in range(E):                       # incoming-edge slabs (gate space)
        w_slabs.append(_pad_lanes(W_in[e] @ G_in))
        b_slabs.append(_pad_lanes(b_in[e] @ G_in))
    for e in range(E):                       # outgoing-edge slabs (gate space)
        w_slabs.append(_pad_lanes(W_out[e] @ G_out))
        b_slabs.append(_pad_lanes(b_out[e] @ G_out))
    # prop-direct slab: r/z contributions from prop, plus bh riding in the bias.
    w_pd = jnp.concatenate([Wr[2 * S:], Wz[2 * S:], jnp.zeros((S, S), jnp.float32)], axis=1)
    b_pd = jnp.concatenate([br, bz, bh], axis=1)
    w_slabs.append(_pad_lanes(w_pd))
    b_slabs.append(_pad_lanes(b_pd))

    W_all = jnp.concatenate(w_slabs, axis=1)      # (S, (2E+1)*128)
    b_all = jnp.concatenate(b_slabs, axis=1)      # (1, (2E+1)*128)

    Wh_p = Wh[2 * S:]                             # (S, S)
    Wo1_state = Wo1[:S]                           # (S, S)
    Wo1_ann = Wo1[S:]                             # (annot, S)
    tail = jnp.concatenate(
        [bo1, Wo2.T, bo2, jnp.zeros((1, SLAB - (2 * S + 1)), jnp.float32)], axis=1)  # (1, 128)
    return W_all, b_all, Wh_p, Wo1_state, Wo1_ann, tail


def ggnn_forward(prop_state, annotation, A, params):
    B, n_node, S = prop_state.shape
    BN = B * n_node
    prop_flat = prop_state.reshape(BN, S)
    ann_flat = annotation.reshape(BN, ANNOT_DIM)
    A_all = pack_adjacency(A)
    W_all, b_all, Wh_p, Wo1_state, Wo1_ann, tail = pack_params(params)

    out = pl.pallas_call(
        ggnn_kernel,
        out_shape=jax.ShapeDtypeStruct((BN, 1), jnp.float32),
        scratch_shapes=[pltpu.VMEM((N_MSG_SLABS * BN, SLAB), jnp.float32)],
    )(prop_flat, ann_flat, A_all, W_all, b_all, Wh_p, Wo1_state, Wo1_ann, tail)
    return out.reshape(B, n_node)   # matches torch output.sum(2)


# ---------------------------------------------------------------------------
# Deterministic parameter init (Linear weights ~ N(0, 0.02), biases = 0),
# stored pre-transposed as (in_dim, out_dim).
# ---------------------------------------------------------------------------
def init_params(key):
    ks = jax.random.split(key, 7)
    std = 0.02
    W_in = jax.random.normal(ks[0], (N_EDGE_TYPES, STATE_DIM, STATE_DIM), jnp.float32) * std
    b_in = jnp.zeros((N_EDGE_TYPES, 1, STATE_DIM), jnp.float32)
    W_out = jax.random.normal(ks[1], (N_EDGE_TYPES, STATE_DIM, STATE_DIM), jnp.float32) * std
    b_out = jnp.zeros((N_EDGE_TYPES, 1, STATE_DIM), jnp.float32)
    Wr = jax.random.normal(ks[2], (3 * STATE_DIM, STATE_DIM), jnp.float32) * std
    br = jnp.zeros((1, STATE_DIM), jnp.float32)
    Wz = jax.random.normal(ks[3], (3 * STATE_DIM, STATE_DIM), jnp.float32) * std
    bz = jnp.zeros((1, STATE_DIM), jnp.float32)
    Wh = jax.random.normal(ks[4], (3 * STATE_DIM, STATE_DIM), jnp.float32) * std
    bh = jnp.zeros((1, STATE_DIM), jnp.float32)
    Wo1 = jax.random.normal(ks[5], (STATE_DIM + ANNOT_DIM, STATE_DIM), jnp.float32) * std
    bo1 = jnp.zeros((1, STATE_DIM), jnp.float32)
    Wo2 = jax.random.normal(ks[6], (STATE_DIM, 1), jnp.float32) * std
    bo2 = jnp.zeros((1, 1), jnp.float32)
    return [W_in, b_in, W_out, b_out, Wr, br, Wz, bz, Wh, bh, Wo1, bo1, Wo2, bo2]


# ---------------------------------------------------------------------------
# Pure-JAX reference (mirrors the PyTorch forward) for correctness checking.
# ---------------------------------------------------------------------------
def ggnn_reference(prop_state, annotation, A, params):
    (W_in, b_in, W_out, b_out, Wr, br, Wz, bz, Wh, bh, Wo1, bo1, Wo2, bo2) = params
    ne = N_NODE * N_EDGE_TYPES
    prop = prop_state
    for _ in range(N_STEPS):
        ins = [prop @ W_in[e] + b_in[e] for e in range(N_EDGE_TYPES)]
        outs = [prop @ W_out[e] + b_out[e] for e in range(N_EDGE_TYPES)]
        in_states = jnp.concatenate(ins, axis=1)
        out_states = jnp.concatenate(outs, axis=1)
        a_in = jnp.einsum('bij,bjd->bid', A[:, :, :ne], in_states)
        a_out = jnp.einsum('bij,bjd->bid', A[:, :, ne:], out_states)
        a = jnp.concatenate([a_in, a_out, prop], axis=2)
        r = jax.nn.sigmoid(a @ Wr + br)
        z = jax.nn.sigmoid(a @ Wz + bz)
        joined = jnp.concatenate([a_in, a_out, r * prop], axis=2)
        h_hat = jnp.tanh(joined @ Wh + bh)
        prop = (1.0 - z) * prop + z * h_hat
    join_state = jnp.concatenate([prop, annotation], axis=2)
    h1 = jnp.tanh(join_state @ Wo1 + bo1)
    score = h1 @ Wo2 + bo2
    return score[:, :, 0]


if __name__ == "__main__":
    key = jax.random.PRNGKey(0)
    ka, kA, kw = jax.random.split(key, 3)

    annotation = jax.random.normal(ka, (BATCH, N_NODE, ANNOT_DIM), jnp.float32)
    pad = jnp.zeros((BATCH, N_NODE, STATE_DIM - ANNOT_DIM), jnp.float32)
    prop_state = jnp.concatenate([annotation, pad], axis=2)          # (B, n_node, state_dim)
    A = (jax.random.uniform(kA, (BATCH, N_NODE, 2 * N_NODE * N_EDGE_TYPES)) > 0.7
         ).astype(jnp.float32)                                       # (B, n_node, 2*n_node*E)

    params = init_params(kw)

    out = ggnn_forward(prop_state, annotation, A, params)
    out = jax.block_until_ready(out)

    ref = ggnn_reference(prop_state, annotation, A, params)
    assert out.shape == (BATCH, N_NODE)
    assert jnp.allclose(out, ref, atol=1e-4, rtol=1e-4), (out, ref)

    print("KERNEL_OK")
</pallas_src>

<mosaic_0001>
module attributes {stable_mosaic.version = 11 : i64} {
  func.func @ggnn_kernel(%arg0: memref<16x32xf32, #tpu.memory_space<vmem>>, %arg1: memref<16x8xf32, #tpu.memory_space<vmem>>, %arg2: memref<16x64xf32, #tpu.memory_space<vmem>>, %arg3: memref<32x640xf32, #tpu.memory_space<vmem>>, %arg4: memref<1x640xf32, #tpu.memory_space<vmem>>, %arg5: memref<32x32xf32, #tpu.memory_space<vmem>>, %arg6: memref<32x32xf32, #tpu.memory_space<vmem>>, %arg7: memref<8x32xf32, #tpu.memory_space<vmem>>, %arg8: memref<1x128xf32, #tpu.memory_space<vmem>>, %arg9: memref<16x1xf32, #tpu.memory_space<vmem>>, %arg10: memref<64x128xf32, #tpu.memory_space<vmem>>) attributes {dimension_semantics = [], scalar_prefetch = 0 : i64, scratch_operands = 1 : i64, tpu.core_type = #tpu.core_type<tc>} {
    %c0 = arith.constant 0 : index
    %c0_0 = arith.constant 0 : index
    %0 = vector.load %arg0[%c0, %c0_0] : memref<16x32xf32, #tpu.memory_space<vmem>>, vector<16x32xf32>
    %c0_1 = arith.constant 0 : index
    %c0_2 = arith.constant 0 : index
    %1 = vector.load %arg3[%c0_1, %c0_2] : memref<32x640xf32, #tpu.memory_space<vmem>>, vector<32x640xf32>
    %c0_3 = arith.constant 0 : index
    %c0_4 = arith.constant 0 : index
    %2 = vector.load %arg4[%c0_3, %c0_4] : memref<1x640xf32, #tpu.memory_space<vmem>>, vector<1x640xf32>
    %c0_5 = arith.constant 0 : index
    %c0_6 = arith.constant 0 : index
    %3 = vector.load %arg2[%c0_5, %c0_6] : memref<16x64xf32, #tpu.memory_space<vmem>>, vector<16x64xf32>
    %c0_7 = arith.constant 0 : index
    %c0_8 = arith.constant 0 : index
    %4 = vector.load %arg5[%c0_7, %c0_8] : memref<32x32xf32, #tpu.memory_space<vmem>>, vector<32x32xf32>
    %cst = arith.constant dense<0.000000e+00> : vector<16x640xf32>
    %5 = tpu.matmul %0, %1, %cst {dimension_numbers = #tpu.dot_dimension_numbers<[1], [0], [0], [1], [0, 0, 1, 1], [], []>} : vector<16x32xf32>, vector<32x640xf32>, vector<16x640xf32> -> vector<16x640xf32>
    %6 = vector.broadcast %2 : vector<1x640xf32> to vector<16x640xf32>
    %7 = arith.addf %5, %6 : vector<16x640xf32>
    %8 = vector.extract_strided_slice %7 {offsets = [0, 0], sizes = [16, 128], strides = [1, 1]} : vector<16x640xf32> to vector<16x128xf32>
    %c0_9 = arith.constant 0 : index
    %c0_10 = arith.constant 0 : index
    %9 = vector.load %arg10[%c0_9, %c0_10] : memref<64x128xf32, #tpu.memory_space<vmem>>, vector<16x128xf32>
    tpu.vector_store %arg10[%c0_9, %c0_10], %8 {strides = array<i32>} : memref<64x128xf32, #tpu.memory_space<vmem>>, vector<16x128xf32>,
    %10 = vector.extract_strided_slice %7 {offsets = [0, 128], sizes = [16, 128], strides = [1, 1]} : vector<16x640xf32> to vector<16x128xf32>
    %c16 = arith.constant 16 : index
    %c0_11 = arith.constant 0 : index
    %11 = vector.load %arg10[%c16, %c0_11] : memref<64x128xf32, #tpu.memory_space<vmem>>, vector<16x128xf32>
    tpu.vector_store %arg10[%c16, %c0_11], %10 {strides = array<i32>} : memref<64x128xf32, #tpu.memory_space<vmem>>, vector<16x128xf32>,
    %12 = vector.extract_strided_slice %7 {offsets = [0, 256], sizes = [16, 128], strides = [1, 1]} : vector<16x640xf32> to vector<16x128xf32>
    %c32 = arith.constant 32 : index
    %c0_12 = arith.constant 0 : index
    %13 = vector.load %arg10[%c32, %c0_12] : memref<64x128xf32, #tpu.memory_space<vmem>>, vector<16x128xf32>
    tpu.vector_store %arg10[%c32, %c0_12], %12 {strides = array<i32>} : memref<64x128xf32, #tpu.memory_space<vmem>>, vector<16x128xf32>,
    %14 = vector.extract_strided_slice %7 {offsets = [0, 384], sizes = [16, 128], strides = [1, 1]} : vector<16x640xf32> to vector<16x128xf32>
    %c48 = arith.constant 48 : index
    %c0_13 = arith.constant 0 : index
    %15 = vector.load %arg10[%c48, %c0_13] : memref<64x128xf32, #tpu.memory_space<vmem>>, vector<16x128xf32>
    tpu.vector_store %arg10[%c48, %c0_13], %14 {strides = array<i32>} : memref<64x128xf32, #tpu.memory_space<vmem>>, vector<16x128xf32>,
    %c0_14 = arith.constant 0 : index
    %c0_15 = arith.constant 0 : index
    %16 = vector.load %arg10[%c0_14, %c0_15] : memref<64x128xf32, #tpu.memory_space<vmem>>, vector<64x128xf32>
    %cst_16 = arith.constant dense<0.000000e+00> : vector<16x128xf32>
    %17 = tpu.matmul %3, %16, %cst_16 {dimension_numbers = #tpu.dot_dimension_numbers<[1], [0], [0], [1], [0, 0, 1, 1], [], []>} : vector<16x64xf32>, vector<64x128xf32>, vector<16x128xf32> -> vector<16x128xf32>
    %18 = vector.extract_strided_slice %7 {offsets = [0, 512], sizes = [16, 128], strides = [1, 1]} : vector<16x640xf32> to vector<16x128xf32>
    %19 = arith.addf %17, %18 : vector<16x128xf32>
    %20 = vector.extract_strided_slice %19 {offsets = [0, 0], sizes = [16, 64], strides = [1, 1]} : vector<16x128xf32> to vector<16x64xf32>
    %21 = arith.negf %20 : vector<16x64xf32>
    %22 = math.exp %21 : vector<16x64xf32>
    %cst_17 = arith.constant 1.000000e+00 : f32
    %23 = vector.broadcast %cst_17 : f32 to vector<16x64xf32>
    %24 = arith.addf %23, %22 : vector<16x64xf32>
    %25 = arith.divf %23, %24 : vector<16x64xf32>
    %26 = vector.extract_strided_slice %25 {offsets = [0, 0], sizes = [16, 32], strides = [1, 1]} : vector<16x64xf32> to vector<16x32xf32>
    %27 = vector.extract_strided_slice %25 {offsets = [0, 32], sizes = [16, 32], strides = [1, 1]} : vector<16x64xf32> to vector<16x32xf32>
    %28 = vector.extract_strided_slice %19 {offsets = [0, 64], sizes = [16, 32], strides = [1, 1]} : vector<16x128xf32> to vector<16x32xf32>
    %29 = arith.mulf %26, %0 : vector<16x32xf32>
    %cst_18 = arith.constant dense<0.000000e+00> : vector<16x32xf32>
    %30 = tpu.matmul %29, %4, %cst_18 {dimension_numbers = #tpu.dot_dimension_numbers<[1], [0], [0], [1], [0, 0, 1, 1], [], []>} : vector<16x32xf32>, vector<32x32xf32>, vector<16x32xf32> -> vector<16x32xf32>
    %31 = arith.addf %28, %30 : vector<16x32xf32>
    %32 = math.tanh %31 : vector<16x32xf32>
    %cst_19 = arith.constant 1.000000e+00 : f32
    %33 = vector.broadcast %cst_19 : f32 to vector<16x32xf32>
    %34 = arith.subf %33, %27 : vector<16x32xf32>
    %35 = arith.mulf %34, %0 : vector<16x32xf32>
    %36 = arith.mulf %27, %32 : vector<16x32xf32>
    %37 = arith.addf %35, %36 : vector<16x32xf32>
    %cst_20 = arith.constant dense<0.000000e+00> : vector<16x640xf32>
    %38 = tpu.matmul %37, %1, %cst_20 {dimension_numbers = #tpu.dot_dimension_numbers<[1], [0], [0], [1], [0, 0, 1, 1], [], []>} : vector<16x32xf32>, vector<32x640xf32>, vector<16x640xf32> -> vector<16x640xf32>
    %39 = vector.broadcast %2 : vector<1x640xf32> to vector<16x640xf32>
    %40 = arith.addf %38, %39 : vector<16x640xf32>
    %41 = vector.extract_strided_slice %40 {offsets = [0, 0], sizes = [16, 128], strides = [1, 1]} : vector<16x640xf32> to vector<16x128xf32>
    %c0_21 = arith.constant 0 : index
    %c0_22 = arith.constant 0 : index
    %42 = vector.load %arg10[%c0_21, %c0_22] : memref<64x128xf32, #tpu.memory_space<vmem>>, vector<16x128xf32>
    tpu.vector_store %arg10[%c0_21, %c0_22], %41 {strides = array<i32>} : memref<64x128xf32, #tpu.memory_space<vmem>>, vector<16x128xf32>,
    %43 = vector.extract_strided_slice %40 {offsets = [0, 128], sizes = [16, 128], strides = [1, 1]} : vector<16x640xf32> to vector<16x128xf32>
    %c16_23 = arith.constant 16 : index
    %c0_24 = arith.constant 0 : index
    %44 = vector.load %arg10[%c16_23, %c0_24] : memref<64x128xf32, #tpu.memory_space<vmem>>, vector<16x128xf32>
    tpu.vector_store %arg10[%c16_23, %c0_24], %43 {strides = array<i32>} : memref<64x128xf32, #tpu.memory_space<vmem>>, vector<16x128xf32>,
    %45 = vector.extract_strided_slice %40 {offsets = [0, 256], sizes = [16, 128], strides = [1, 1]} : vector<16x640xf32> to vector<16x128xf32>
    %c32_25 = arith.constant 32 : index
    %c0_26 = arith.constant 0 : index
    %46 = vector.load %arg10[%c32_25, %c0_26] : memref<64x128xf32, #tpu.memory_space<vmem>>, vector<16x128xf32>
    tpu.vector_store %arg10[%c32_25, %c0_26], %45 {strides = array<i32>} : memref<64x128xf32, #tpu.memory_space<vmem>>, vector<16x128xf32>,
    %47 = vector.extract_strided_slice %40 {offsets = [0, 384], sizes = [16, 128], strides = [1, 1]} : vector<16x640xf32> to vector<16x128xf32>
    %c48_27 = arith.constant 48 : index
    %c0_28 = arith.constant 0 : index
    %48 = vector.load %arg10[%c48_27, %c0_28] : memref<64x128xf32, #tpu.memory_space<vmem>>, vector<16x128xf32>
    tpu.vector_store %arg10[%c48_27, %c0_28], %47 {strides = array<i32>} : memref<64x128xf32, #tpu.memory_space<vmem>>, vector<16x128xf32>,
    %c0_29 = arith.constant 0 : index
    %c0_30 = arith.constant 0 : index
    %49 = vector.load %arg10[%c0_29, %c0_30] : memref<64x128xf32, #tpu.memory_space<vmem>>, vector<64x128xf32>
    %cst_31 = arith.constant dense<0.000000e+00> : vector<16x128xf32>
    %50 = tpu.matmul %3, %49, %cst_31 {dimension_numbers = #tpu.dot_dimension_numbers<[1], [0], [0], [1], [0, 0, 1, 1], [], []>} : vector<16x64xf32>, vector<64x128xf32>, vector<16x128xf32> -> vector<16x128xf32>
    %51 = vector.extract_strided_slice %40 {offsets = [0, 512], sizes = [16, 128], strides = [1, 1]} : vector<16x640xf32> to vector<16x128xf32>
    %52 = arith.addf %50, %51 : vector<16x128xf32>
    %53 = vector.extract_strided_slice %52 {offsets = [0, 0], sizes = [16, 64], strides = [1, 1]} : vector<16x128xf32> to vector<16x64xf32>
    %54 = arith.negf %53 : vector<16x64xf32>
    %55 = math.exp %54 : vector<16x64xf32>
    %cst_32 = arith.constant 1.000000e+00 : f32
    %56 = vector.broadcast %cst_32 : f32 to vector<16x64xf32>
    %57 = arith.addf %56, %55 : vector<16x64xf32>
    %58 = arith.divf %56, %57 : vector<16x64xf32>
    %59 = vector.extract_strided_slice %58 {offsets = [0, 0], sizes = [16, 32], strides = [1, 1]} : vector<16x64xf32> to vector<16x32xf32>
    %60 = vector.extract_strided_slice %58 {offsets = [0, 32], sizes = [16, 32], strides = [1, 1]} : vector<16x64xf32> to vector<16x32xf32>
    %61 = vector.extract_strided_slice %52 {offsets = [0, 64], sizes = [16, 32], strides = [1, 1]} : vector<16x128xf32> to vector<16x32xf32>
    %62 = arith.mulf %59, %37 : vector<16x32xf32>
    %cst_33 = arith.constant dense<0.000000e+00> : vector<16x32xf32>
    %63 = tpu.matmul %62, %4, %cst_33 {dimension_numbers = #tpu.dot_dimension_numbers<[1], [0], [0], [1], [0, 0, 1, 1], [], []>} : vector<16x32xf32>, vector<32x32xf32>, vector<16x32xf32> -> vector<16x32xf32>
    %64 = arith.addf %61, %63 : vector<16x32xf32>
    %65 = math.tanh %64 : vector<16x32xf32>
    %cst_34 = arith.constant 1.000000e+00 : f32
    %66 = vector.broadcast %cst_34 : f32 to vector<16x32xf32>
    %67 = arith.subf %66, %60 : vector<16x32xf32>
    %68 = arith.mulf %67, %37 : vector<16x32xf32>
    %69 = arith.mulf %60, %65 : vector<16x32xf32>
    %70 = arith.addf %68, %69 : vector<16x32xf32>
    %cst_35 = arith.constant dense<0.000000e+00> : vector<16x640xf32>
    %71 = tpu.matmul %70, %1, %cst_35 {dimension_numbers = #tpu.dot_dimension_numbers<[1], [0], [0], [1], [0, 0, 1, 1], [], []>} : vector<16x32xf32>, vector<32x640xf32>, vector<16x640xf32> -> vector<16x640xf32>
    %72 = vector.broadcast %2 : vector<1x640xf32> to vector<16x640xf32>
    %73 = arith.addf %71, %72 : vector<16x640xf32>
    %74 = vector.extract_strided_slice %73 {offsets = [0, 0], sizes = [16, 128], strides = [1, 1]} : vector<16x640xf32> to vector<16x128xf32>
    %c0_36 = arith.constant 0 : index
    %c0_37 = arith.constant 0 : index
    %75 = vector.load %arg10[%c0_36, %c0_37] : memref<64x128xf32, #tpu.memory_space<vmem>>, vector<16x128xf32>
    tpu.vector_store %arg10[%c0_36, %c0_37], %74 {strides = array<i32>} : memref<64x128xf32, #tpu.memory_space<vmem>>, vector<16x128xf32>,
    %76 = vector.extract_strided_slice %73 {offsets = [0, 128], sizes = [16, 128], strides = [1, 1]} : vector<16x640xf32> to vector<16x128xf32>
    %c16_38 = arith.constant 16 : index
    %c0_39 = arith.constant 0 : index
    %77 = vector.load %arg10[%c16_38, %c0_39] : memref<64x128xf32, #tpu.memory_space<vmem>>, vector<16x128xf32>
    tpu.vector_store %arg10[%c16_38, %c0_39], %76 {strides = array<i32>} : memref<64x128xf32, #tpu.memory_space<vmem>>, vector<16x128xf32>,
    %78 = vector.extract_strided_slice %73 {offsets = [0, 256], sizes = [16, 128], strides = [1, 1]} : vector<16x640xf32> to vector<16x128xf32>
    %c32_40 = arith.constant 32 : index
    %c0_41 = arith.constant 0 : index
    %79 = vector.load %arg10[%c32_40, %c0_41] : memref<64x128xf32, #tpu.memory_space<vmem>>, vector<16x128xf32>
    tpu.vector_store %arg10[%c32_40, %c0_41], %78 {strides = array<i32>} : memref<64x128xf32, #tpu.memory_space<vmem>>, vector<16x128xf32>,
    %80 = vector.extract_strided_slice %73 {offsets = [0, 384], sizes = [16, 128], strides = [1, 1]} : vector<16x640xf32> to vector<16x128xf32>
    %c48_42 = arith.constant 48 : index
    %c0_43 = arith.constant 0 : index
    %81 = vector.load %arg10[%c48_42, %c0_43] : memref<64x128xf32, #tpu.memory_space<vmem>>, vector<16x128xf32>
    tpu.vector_store %arg10[%c48_42, %c0_43], %80 {strides = array<i32>} : memref<64x128xf32, #tpu.memory_space<vmem>>, vector<16x128xf32>,
    %c0_44 = arith.constant 0 : index
    %c0_45 = arith.constant 0 : index
    %82 = vector.load %arg10[%c0_44, %c0_45] : memref<64x128xf32, #tpu.memory_space<vmem>>, vector<64x128xf32>
    %cst_46 = arith.constant dense<0.000000e+00> : vector<16x128xf32>
    %83 = tpu.matmul %3, %82, %cst_46 {dimension_numbers = #tpu.dot_dimension_numbers<[1], [0], [0], [1], [0, 0, 1, 1], [], []>} : vector<16x64xf32>, vector<64x128xf32>, vector<16x128xf32> -> vector<16x128xf32>
    %84 = vector.extract_strided_slice %73 {offsets = [0, 512], sizes = [16, 128], strides = [1, 1]} : vector<16x640xf32> to vector<16x128xf32>
    %85 = arith.addf %83, %84 : vector<16x128xf32>
    %86 = vector.extract_strided_slice %85 {offsets = [0, 0], sizes = [16, 64], strides = [1, 1]} : vector<16x128xf32> to vector<16x64xf32>
    %87 = arith.negf %86 : vector<16x64xf32>
    %88 = math.exp %87 : vector<16x64xf32>
    %cst_47 = arith.constant 1.000000e+00 : f32
    %89 = vector.broadcast %cst_47 : f32 to vector<16x64xf32>
    %90 = arith.addf %89, %88 : vector<16x64xf32>
    %91 = arith.divf %89, %90 : vector<16x64xf32>
    %92 = vector.extract_strided_slice %91 {offsets = [0, 0], sizes = [16, 32], strides = [1, 1]} : vector<16x64xf32> to vector<16x32xf32>
    %93 = vector.extract_strided_slice %91 {offsets = [0, 32], sizes = [16, 32], strides = [1, 1]} : vector<16x64xf32> to vector<16x32xf32>
    %94 = vector.extract_strided_slice %85 {offsets = [0, 64], sizes = [16, 32], strides = [1, 1]} : vector<16x128xf32> to vector<16x32xf32>
    %95 = arith.mulf %92, %70 : vector<16x32xf32>
    %cst_48 = arith.constant dense<0.000000e+00> : vector<16x32xf32>
    %96 = tpu.matmul %95, %4, %cst_48 {dimension_numbers = #tpu.dot_dimension_numbers<[1], [0], [0], [1], [0, 0, 1, 1], [], []>} : vector<16x32xf32>, vector<32x32xf32>, vector<16x32xf32> -> vector<16x32xf32>
    %97 = arith.addf %94, %96 : vector<16x32xf32>
    %98 = math.tanh %97 : vector<16x32xf32>
    %cst_49 = arith.constant 1.000000e+00 : f32
    %99 = vector.broadcast %cst_49 : f32 to vector<16x32xf32>
    %100 = arith.subf %99, %93 : vector<16x32xf32>
    %101 = arith.mulf %100, %70 : vector<16x32xf32>
    %102 = arith.mulf %93, %98 : vector<16x32xf32>
    %103 = arith.addf %101, %102 : vector<16x32xf32>
    %cst_50 = arith.constant dense<0.000000e+00> : vector<16x640xf32>
    %104 = tpu.matmul %103, %1, %cst_50 {dimension_numbers = #tpu.dot_dimension_numbers<[1], [0], [0], [1], [0, 0, 1, 1], [], []>} : vector<16x32xf32>, vector<32x640xf32>, vector<16x640xf32> -> vector<16x640xf32>
    %105 = vector.broadcast %2 : vector<1x640xf32> to vector<16x640xf32>
    %106 = arith.addf %104, %105 : vector<16x640xf32>
    %107 = vector.extract_strided_slice %106 {offsets = [0, 0], sizes = [16, 128], strides = [1, 1]} : vector<16x640xf32> to vector<16x128xf32>
    %c0_51 = arith.constant 0 : index
    %c0_52 = arith.constant 0 : index
    %108 = vector.load %arg10[%c0_51, %c0_52] : memref<64x128xf32, #tpu.memory_space<vmem>>, vector<16x128xf32>
    tpu.vector_store %arg10[%c0_51, %c0_52], %107 {strides = array<i32>} : memref<64x128xf32, #tpu.memory_space<vmem>>, vector<16x128xf32>,
    %109 = vector.extract_strided_slice %106 {offsets = [0, 128], sizes = [16, 128], strides = [1, 1]} : vector<16x640xf32> to vector<16x128xf32>
    %c16_53 = arith.constant 16 : index
    %c0_54 = arith.constant 0 : index
    %110 = vector.load %arg10[%c16_53, %c0_54] : memref<64x128xf32, #tpu.memory_space<vmem>>, vector<16x128xf32>
    tpu.vector_store %arg10[%c16_53, %c0_54], %109 {strides = array<i32>} : memref<64x128xf32, #tpu.memory_space<vmem>>, vector<16x128xf32>,
    %111 = vector.extract_strided_slice %106 {offsets = [0, 256], sizes = [16, 128], strides = [1, 1]} : vector<16x640xf32> to vector<16x128xf32>
    %c32_55 = arith.constant 32 : index
    %c0_56 = arith.constant 0 : index
    %112 = vector.load %arg10[%c32_55, %c0_56] : memref<64x128xf32, #tpu.memory_space<vmem>>, vector<16x128xf32>
    tpu.vector_store %arg10[%c32_55, %c0_56], %111 {strides = array<i32>} : memref<64x128xf32, #tpu.memory_space<vmem>>, vector<16x128xf32>,
    %113 = vector.extract_strided_slice %106 {offsets = [0, 384], sizes = [16, 128], strides = [1, 1]} : vector<16x640xf32> to vector<16x128xf32>
    %c48_57 = arith.constant 48 : index
    %c0_58 = arith.constant 0 : index
    %114 = vector.load %arg10[%c48_57, %c0_58] : memref<64x128xf32, #tpu.memory_space<vmem>>, vector<16x128xf32>
    tpu.vector_store %arg10[%c48_57, %c0_58], %113 {strides = array<i32>} : memref<64x128xf32, #tpu.memory_space<vmem>>, vector<16x128xf32>,
    %c0_59 = arith.constant 0 : index
    %c0_60 = arith.constant 0 : index
    %115 = vector.load %arg10[%c0_59, %c0_60] : memref<64x128xf32, #tpu.memory_space<vmem>>, vector<64x128xf32>
    %cst_61 = arith.constant dense<0.000000e+00> : vector<16x128xf32>
    %116 = tpu.matmul %3, %115, %cst_61 {dimension_numbers = #tpu.dot_dimension_numbers<[1], [0], [0], [1], [0, 0, 1, 1], [], []>} : vector<16x64xf32>, vector<64x128xf32>, vector<16x128xf32> -> vector<16x128xf32>
    %117 = vector.extract_strided_slice %106 {offsets = [0, 512], sizes = [16, 128], strides = [1, 1]} : vector<16x640xf32> to vector<16x128xf32>
    %118 = arith.addf %116, %117 : vector<16x128xf32>
    %119 = vector.extract_strided_slice %118 {offsets = [0, 0], sizes = [16, 64], strides = [1, 1]} : vector<16x128xf32> to vector<16x64xf32>
    %120 = arith.negf %119 : vector<16x64xf32>
    %121 = math.exp %120 : vector<16x64xf32>
    %cst_62 = arith.constant 1.000000e+00 : f32
    %122 = vector.broadcast %cst_62 : f32 to vector<16x64xf32>
    %123 = arith.addf %122, %121 : vector<16x64xf32>
    %124 = arith.divf %122, %123 : vector<16x64xf32>
    %125 = vector.extract_strided_slice %124 {offsets = [0, 0], sizes = [16, 32], strides = [1, 1]} : vector<16x64xf32> to vector<16x32xf32>
    %126 = vector.extract_strided_slice %124 {offsets = [0, 32], sizes = [16, 32], strides = [1, 1]} : vector<16x64xf32> to vector<16x32xf32>
    %127 = vector.extract_strided_slice %118 {offsets = [0, 64], sizes = [16, 32], strides = [1, 1]} : vector<16x128xf32> to vector<16x32xf32>
    %128 = arith.mulf %125, %103 : vector<16x32xf32>
    %cst_63 = arith.constant dense<0.000000e+00> : vector<16x32xf32>
    %129 = tpu.matmul %128, %4, %cst_63 {dimension_numbers = #tpu.dot_dimension_numbers<[1], [0], [0], [1], [0, 0, 1, 1], [], []>} : vector<16x32xf32>, vector<32x32xf32>, vector<16x32xf32> -> vector<16x32xf32>
    %130 = arith.addf %127, %129 : vector<16x32xf32>
    %131 = math.tanh %130 : vector<16x32xf32>
    %cst_64 = arith.constant 1.000000e+00 : f32
    %132 = vector.broadcast %cst_64 : f32 to vector<16x32xf32>
    %133 = arith.subf %132, %126 : vector<16x32xf32>
    %134 = arith.mulf %133, %103 : vector<16x32xf32>
    %135 = arith.mulf %126, %131 : vector<16x32xf32>
    %136 = arith.addf %134, %135 : vector<16x32xf32>
    %cst_65 = arith.constant dense<0.000000e+00> : vector<16x640xf32>
    %137 = tpu.matmul %136, %1, %cst_65 {dimension_numbers = #tpu.dot_dimension_numbers<[1], [0], [0], [1], [0, 0, 1, 1], [], []>} : vector<16x32xf32>, vector<32x640xf32>, vector<16x640xf32> -> vector<16x640xf32>
    %138 = vector.broadcast %2 : vector<1x640xf32> to vector<16x640xf32>
    %139 = arith.addf %137, %138 : vector<16x640xf32>
    %140 = vector.extract_strided_slice %139 {offsets = [0, 0], sizes = [16, 128], strides = [1, 1]} : vector<16x640xf32> to vector<16x128xf32>
    %c0_66 = arith.constant 0 : index
    %c0_67 = arith.constant 0 : index
    %141 = vector.load %arg10[%c0_66, %c0_67] : memref<64x128xf32, #tpu.memory_space<vmem>>, vector<16x128xf32>
    tpu.vector_store %arg10[%c0_66, %c0_67], %140 {strides = array<i32>} : memref<64x128xf32, #tpu.memory_space<vmem>>, vector<16x128xf32>,
    %142 = vector.extract_strided_slice %139 {offsets = [0, 128], sizes = [16, 128], strides = [1, 1]} : vector<16x640xf32> to vector<16x128xf32>
    %c16_68 = arith.constant 16 : index
    %c0_69 = arith.constant 0 : index
    %143 = vector.load %arg10[%c16_68, %c0_69] : memref<64x128xf32, #tpu.memory_space<vmem>>, vector<16x128xf32>
    tpu.vector_store %arg10[%c16_68, %c0_69], %142 {strides = array<i32>} : memref<64x128xf32, #tpu.memory_space<vmem>>, vector<16x128xf32>,
    %144 = vector.extract_strided_slice %139 {offsets = [0, 256], sizes = [16, 128], strides = [1, 1]} : vector<16x640xf32> to vector<16x128xf32>
    %c32_70 = arith.constant 32 : index
    %c0_71 = arith.constant 0 : index
    %145 = vector.load %arg10[%c32_70, %c0_71] : memref<64x128xf32, #tpu.memory_space<vmem>>, vector<16x128xf32>
    tpu.vector_store %arg10[%c32_70, %c0_71], %144 {strides = array<i32>} : memref<64x128xf32, #tpu.memory_space<vmem>>, vector<16x128xf32>,
    %146 = vector.extract_strided_slice %139 {offsets = [0, 384], sizes = [16, 128], strides = [1, 1]} : vector<16x640xf32> to vector<16x128xf32>
    %c48_72 = arith.constant 48 : index
    %c0_73 = arith.constant 0 : index
    %147 = vector.load %arg10[%c48_72, %c0_73] : memref<64x128xf32, #tpu.memory_space<vmem>>, vector<16x128xf32>
    tpu.vector_store %arg10[%c48_72, %c0_73], %146 {strides = array<i32>} : memref<64x128xf32, #tpu.memory_space<vmem>>, vector<16x128xf32>,
    %c0_74 = arith.constant 0 : index
    %c0_75 = arith.constant 0 : index
    %148 = vector.load %arg10[%c0_74, %c0_75] : memref<64x128xf32, #tpu.memory_space<vmem>>, vector<64x128xf32>
    %cst_76 = arith.constant dense<0.000000e+00> : vector<16x128xf32>
    %149 = tpu.matmul %3, %148, %cst_76 {dimension_numbers = #tpu.dot_dimension_numbers<[1], [0], [0], [1], [0, 0, 1, 1], [], []>} : vector<16x64xf32>, vector<64x128xf32>, vector<16x128xf32> -> vector<16x128xf32>
    %150 = vector.extract_strided_slice %139 {offsets = [0, 512], sizes = [16, 128], strides = [1, 1]} : vector<16x640xf32> to vector<16x128xf32>
    %151 = arith.addf %149, %150 : vector<16x128xf32>
    %152 = vector.extract_strided_slice %151 {offsets = [0, 0], sizes = [16, 64], strides = [1, 1]} : vector<16x128xf32> to vector<16x64xf32>
    %153 = arith.negf %152 : vector<16x64xf32>
    %154 = math.exp %153 : vector<16x64xf32>
    %cst_77 = arith.constant 1.000000e+00 : f32
    %155 = vector.broadcast %cst_77 : f32 to vector<16x64xf32>
    %156 = arith.addf %155, %154 : vector<16x64xf32>
    %157 = arith.divf %155, %156 : vector<16x64xf32>
    %158 = vector.extract_strided_slice %157 {offsets = [0, 0], sizes = [16, 32], strides = [1, 1]} : vector<16x64xf32> to vector<16x32xf32>
    %159 = vector.extract_strided_slice %157 {offsets = [0, 32], sizes = [16, 32], strides = [1, 1]} : vector<16x64xf32> to vector<16x32xf32>
    %160 = vector.extract_strided_slice %151 {offsets = [0, 64], sizes = [16, 32], strides = [1, 1]} : vector<16x128xf32> to vector<16x32xf32>
    %161 = arith.mulf %158, %136 : vector<16x32xf32>
    %cst_78 = arith.constant dense<0.000000e+00> : vector<16x32xf32>
    %162 = tpu.matmul %161, %4, %cst_78 {dimension_numbers = #tpu.dot_dimension_numbers<[1], [0], [0], [1], [0, 0, 1, 1], [], []>} : vector<16x32xf32>, vector<32x32xf32>, vector<16x32xf32> -> vector<16x32xf32>
    %163 = arith.addf %160, %162 : vector<16x32xf32>
    %164 = math.tanh %163 : vector<16x32xf32>
    %cst_79 = arith.constant 1.000000e+00 : f32
    %165 = vector.broadcast %cst_79 : f32 to vector<16x32xf32>
    %166 = arith.subf %165, %159 : vector<16x32xf32>
    %167 = arith.mulf %166, %136 : vector<16x32xf32>
    %168 = arith.mulf %159, %164 : vector<16x32xf32>
    %169 = arith.addf %167, %168 : vector<16x32xf32>
    %c0_80 = arith.constant 0 : index
    %c0_81 = arith.constant 0 : index
    %170 = vector.load %arg8[%c0_80, %c0_81] : memref<1x128xf32, #tpu.memory_space<vmem>>, vector<1x32xf32>
    %c0_82 = arith.constant 0 : index
    %c32_83 = arith.constant 32 : index
    %171 = vector.load %arg8[%c0_82, %c32_83] : memref<1x128xf32, #tpu.memory_space<vmem>>, vector<1x32xf32>
    %c0_84 = arith.constant 0 : index
    %c64 = arith.constant 64 : index
    %172 = vector.load %arg8[%c0_84, %c64] : memref<1x128xf32, #tpu.memory_space<vmem>>, vector<1x1xf32>
    %c0_85 = arith.constant 0 : index
    %c0_86 = arith.constant 0 : index
    %173 = vector.load %arg6[%c0_85, %c0_86] : memref<32x32xf32, #tpu.memory_space<vmem>>, vector<32x32xf32>
    %cst_87 = arith.constant dense<0.000000e+00> : vector<16x32xf32>
    %174 = tpu.matmul %169, %173, %cst_87 {dimension_numbers = #tpu.dot_dimension_numbers<[1], [0], [0], [1], [0, 0, 1, 1], [], []>} : vector<16x32xf32>, vector<32x32xf32>, vector<16x32xf32> -> vector<16x32xf32>
    %c0_88 = arith.constant 0 : index
    %c0_89 = arith.constant 0 : index
    %175 = vector.load %arg1[%c0_88, %c0_89] : memref<16x8xf32, #tpu.memory_space<vmem>>, vector<16x8xf32>
    %c0_90 = arith.constant 0 : index
    %c0_91 = arith.constant 0 : index
    %176 = vector.load %arg7[%c0_90, %c0_91] : memref<8x32xf32, #tpu.memory_space<vmem>>, vector<8x32xf32>
    %cst_92 = arith.constant dense<0.000000e+00> : vector<16x32xf32>
    %177 = tpu.matmul %175, %176, %cst_92 {dimension_numbers = #tpu.dot_dimension_numbers<[1], [0], [0], [1], [0, 0, 1, 1], [], []>} : vector<16x8xf32>, vector<8x32xf32>, vector<16x32xf32> -> vector<16x32xf32>
    %178 = arith.addf %174, %177 : vector<16x32xf32>
    %179 = vector.broadcast %170 : vector<1x32xf32> to vector<16x32xf32>
    %180 = arith.addf %178, %179 : vector<16x32xf32>
    %181 = math.tanh %180 : vector<16x32xf32>
    %182 = vector.broadcast %171 : vector<1x32xf32> to vector<16x32xf32>
    %183 = arith.mulf %181, %182 : vector<16x32xf32>
    %cst_93 = arith.constant dense<0.000000e+00> : vector<16xf32>
    %184 = vector.multi_reduction <add>, %183, %cst_93 [1] : vector<16x32xf32> to vector<16xf32>
    %185 = vector.shape_cast %184 : vector<16xf32> to vector<16x1xf32>
    %186 = vector.broadcast %172 : vector<1x1xf32> to vector<16x1xf32>
    %187 = arith.addf %185, %186 : vector<16x1xf32>
    %c0_94 = arith.constant 0 : index
    %c0_95 = arith.constant 0 : index
    %188 = vector.load %arg9[%c0_94, %c0_95] : memref<16x1xf32, #tpu.memory_space<vmem>>, vector<16x1xf32>
    tpu.vector_store %arg9[%c0_94, %c0_95], %187 {strides = array<i32>} : memref<16x1xf32, #tpu.memory_space<vmem>>, vector<16x1xf32>,
    return
  }
}

</mosaic_0001>

<llo_original>
// kernel: tpu_custom_call.1
$region0: #{tpu_custom_call.1}
  #allocation0 [shape = 'u32[]', space=smem, size = 0x4, offset = 0x4, fixed_abs, tag = 'smem constant byte address 0x4 - core index']
  #allocation1 [shape = 'u32[144,128]{1,0:T(1,128)}', space=vmem, size = 0x12000, scoped, tag = 'internal scratch']
  #allocation2 [shape = 'f32[64,128]{1,0:T(8,128)}', space=vmem, size = 0x8000, scoped, tag = 'scratch operand']
  %s0 = inlined_call_operand.hbm [shape: f32[16,32], index: 0, kind: input, shape index: {}]
  %s1 = inlined_call_operand.vmem [shape: f32[16,8], index: 1, kind: input, shape index: {}]
  %s2 = inlined_call_operand.hbm [shape: f32[16,64], index: 2, kind: input, shape index: {}]
  %s3 = inlined_call_operand.hbm [shape: f32[32,640], index: 3, kind: input, shape index: {}]
  %s4 = inlined_call_operand.hbm [shape: f32[1,640], index: 4, kind: input, shape index: {}]
  %s5 = inlined_call_operand.vmem [shape: f32[32,32], index: 5, kind: input, shape index: {}]
  %s6 = inlined_call_operand.hbm [shape: f32[32,32], index: 6, kind: input, shape index: {}]
  %s7 = inlined_call_operand.vmem [shape: f32[8,32], index: 7, kind: input, shape index: {}]
  %s8 = inlined_call_operand.vmem [shape: f32[1,128], index: 8, kind: input, shape index: {}]
  %s9 = inlined_call_operand.vmem [shape: f32[16,1], index: 9, kind: output, shape index: {}]
  %s10 = sld [smem:[#allocation0]]
  $region66: #{tpu_custom_call.1} parent=0
    _
  %s12 = ssub.s32 1, %s10
  %s13 = scalar_select 0, %s12, %s10
  $region1: #{tpu_custom_call.1} parent=0
    #allocation3 [shape = 'u8[8192]{0}', space=vmem, size = 0x2000, scoped, tag = 'input window, operand 0, single buffered']
    #allocation4 [shape = 's32[1]{0}', space=sflag, size = 0x4, scoped, tag = 'scoped memory for tpu_custom_call.1']
    #allocation5 [shape = 'u8[8192]{0}', space=vmem, size = 0x2000, scoped, tag = 'input window, operand 2, single buffered']
    #allocation6 [shape = 's32[1]{0}', space=sflag, size = 0x4, scoped, tag = 'scoped memory for tpu_custom_call.1']
    #allocation7 [shape = 'u8[81920]{0}', space=vmem, size = 0x14000, scoped, tag = 'input window, operand 3, single buffered']
    #allocation8 [shape = 'u8[2560]{0}', space=vmem, size = 0xc00, scoped, tag = 'input window, operand 4, single buffered']
    #allocation9 [shape = 's32[1]{0}', space=sflag, size = 0x4, scoped, tag = 'scoped memory for tpu_custom_call.1']
    #allocation10 [shape = 'u8[16384]{0}', space=vmem, size = 0x4000, scoped, tag = 'input window, operand 6, single buffered']
    %14 = vsyncpa [#allocation4], 0
    %15 = vsyncpa [#allocation6], 0
    %16 = vsyncpa [#allocation9], 0
    // Predicated region
    $region2: #{tpu_custom_call.1} parent=1 // pred_check
      _
    $region3: #{tpu_custom_call.1} parent=1 // pred_check_branch
      %18 = sbr.rel (0) target = $region5
    $region4: #{tpu_custom_call.1} parent=1 // pred_region
      %s20 = ssub.s32 256, 256
      %21 = vsyncadd [#allocation4], %s20
      %s22 = sshll.u32 [#allocation3], 4
      %s23 = int_to_ptr.vmem [resolvable:$true] %s22
      %28 = dma.hbm_to_vmem [thread:$0]  %s0, 256, %s23, [#allocation4], 128, 128, 8
    $region5: #{tpu_custom_call.1} parent=1 // pred_fallthru
      _
    // Predicated region
    $region6: #{tpu_custom_call.1} parent=1 // pred_check
      _
    $region7: #{tpu_custom_call.1} parent=1 // pred_check_branch
      %30 = sbr.rel (0) target = $region9
    $region8: #{tpu_custom_call.1} parent=1 // pred_region
      _
    $region9: #{tpu_custom_call.1} parent=1 // pred_fallthru
      _
    // Predicated region
    $region10: #{tpu_custom_call.1} parent=1 // pred_check
      _
    $region11: #{tpu_custom_call.1} parent=1 // pred_check_branch
      %32 = sbr.rel (0) target = $region13
    $region12: #{tpu_custom_call.1} parent=1 // pred_region
      %s34 = ssub.s32 256, 256
      %35 = vsyncadd [#allocation6], %s34
      %s36 = sshll.u32 [#allocation5], 4
      %s37 = int_to_ptr.vmem [resolvable:$true] %s36
      %42 = dma.hbm_to_vmem [thread:$0]  %s2, 256, %s37, [#allocation6], 128, 128, 8
    $region13: #{tpu_custom_call.1} parent=1 // pred_fallthru
      _
    // Predicated region
    $region14: #{tpu_custom_call.1} parent=1 // pred_check
      _
    $region15: #{tpu_custom_call.1} parent=1 // pred_check_branch
      %44 = sbr.rel (0) target = $region17
    $region16: #{tpu_custom_call.1} parent=1 // pred_region
      %s46 = ssub.s32 2560, 2560
      %47 = vsyncadd [#allocation6], %s46
      %s48 = sshll.u32 [#allocation7], 4
      %s49 = int_to_ptr.vmem [resolvable:$true] %s48
      %54 = dma.hbm_to_vmem [thread:$0]  %s3, 2560, %s49, [#allocation6], 640, 640, 40
    $region17: #{tpu_custom_call.1} parent=1 // pred_fallthru
      _
    // Predicated region
    $region18: #{tpu_custom_call.1} parent=1 // pred_check
      _
    $region19: #{tpu_custom_call.1} parent=1 // pred_check_branch
      %56 = sbr.rel (0) target = $region21
    $region20: #{tpu_custom_call.1} parent=1 // pred_region
      %s58 = ssub.s32 80, 80
      %59 = vsyncadd [#allocation9], %s58
      %s61 = sshll.u32 [#allocation8], 4
      %s62 = int_to_ptr.vmem [resolvable:$true] %s61
      %64 = dma.hbm_to_vmem [thread:$0]  %s4, 80, %s62, [#allocation9]
    $region21: #{tpu_custom_call.1} parent=1 // pred_fallthru
      _
    // Predicated region
    $region22: #{tpu_custom_call.1} parent=1 // pred_check
      _
    $region23: #{tpu_custom_call.1} parent=1 // pred_check_branch
      %66 = sbr.rel (0) target = $region25
    $region24: #{tpu_custom_call.1} parent=1 // pred_region
      _
    $region25: #{tpu_custom_call.1} parent=1 // pred_fallthru
      _
    // Predicated region
    $region26: #{tpu_custom_call.1} parent=1 // pred_check
      _
    $region27: #{tpu_custom_call.1} parent=1 // pred_check_branch
      %68 = sbr.rel (0) target = $region29
    $region28: #{tpu_custom_call.1} parent=1 // pred_region
      %s70 = ssub.s32 512, 512
      %71 = vsyncadd [#allocation9], %s70
      %s72 = sshll.u32 [#allocation10], 4
      %s73 = int_to_ptr.vmem [resolvable:$true] %s72
      %78 = dma.hbm_to_vmem [thread:$0]  %s6, 512, %s73, [#allocation9], 128, 128, 8
    $region29: #{tpu_custom_call.1} parent=1 // pred_fallthru
      _
    // Predicated region
    $region30: #{tpu_custom_call.1} parent=1 // pred_check
      _
    $region31: #{tpu_custom_call.1} parent=1 // pred_check_branch
      %80 = sbr.rel (0) target = $region33
    $region32: #{tpu_custom_call.1} parent=1 // pred_region
      _
    $region33: #{tpu_custom_call.1} parent=1 // pred_fallthru
      _
    // Predicated region
    $region34: #{tpu_custom_call.1} parent=1 // pred_check
      _
    $region35: #{tpu_custom_call.1} parent=1 // pred_check_branch
      %82 = sbr.rel (0) target = $region37
    $region36: #{tpu_custom_call.1} parent=1 // pred_region
      _
    $region37: #{tpu_custom_call.1} parent=1 // pred_fallthru
      _
    // Predicated region
    $region38: #{tpu_custom_call.1} parent=1 // pred_check
      _
    $region39: #{tpu_custom_call.1} parent=1 // pred_check_branch
      %84 = sbr.rel (0) target = $region41
    $region40: #{tpu_custom_call.1} parent=1 // pred_region
      %85 = dma.done [#allocation4], 256
    $region41: #{tpu_custom_call.1} parent=1 // pred_fallthru
      _
    // Predicated region
    $region42: #{tpu_custom_call.1} parent=1 // pred_check
      _
    $region43: #{tpu_custom_call.1} parent=1 // pred_check_branch
      %87 = sbr.rel (0) target = $region45
    $region44: #{tpu_custom_call.1} parent=1 // pred_region
      %88 = dma.done [#allocation6], 256
    $region45: #{tpu_custom_call.1} parent=1 // pred_fallthru
      _
    // Predicated region
    $region46: #{tpu_custom_call.1} parent=1 // pred_check
      _
    $region47: #{tpu_custom_call.1} parent=1 // pred_check_branch
      %90 = sbr.rel (0) target = $region49
    $region48: #{tpu_custom_call.1} parent=1 // pred_region
      %91 = dma.done [#allocation6], 2560
    $region49: #{tpu_custom_call.1} parent=1 // pred_fallthru
      _
    // Predicated region
    $region50: #{tpu_custom_call.1} parent=1 // pred_check
      _
    $region51: #{tpu_custom_call.1} parent=1 // pred_check_branch
      %93 = sbr.rel (0) target = $region53
    $region52: #{tpu_custom_call.1} parent=1 // pred_region
      %94 = dma.done [#allocation9], 80
    $region53: #{tpu_custom_call.1} parent=1 // pred_fallthru
      _
    // Predicated region
    $region54: #{tpu_custom_call.1} parent=1 // pred_check
      _
    $region55: #{tpu_custom_call.1} parent=1 // pred_check_branch
      %96 = sbr.rel (0) target = $region57
    $region56: #{tpu_custom_call.1} parent=1 // pred_region
      %97 = dma.done [#allocation9], 512
    $region57: #{tpu_custom_call.1} parent=1 // pred_fallthru
      _
    %v98 = vld [vmem:[#allocation3] sm:$0xff]
    %v99 = vld [vmem:[#allocation3 + $0x8] sm:$0xff]
    %v100 = vld [vmem:[#allocation7] sm:$0xff]
    %v101 = vld [vmem:[#allocation7 + $0x8] sm:$0xff]
    %v102 = vld [vmem:[#allocation7 + $0x10] sm:$0xff]
    %v103 = vld [vmem:[#allocation7 + $0x18] sm:$0xff]
    %v104 = vld [vmem:[#allocation7 + $0x20] sm:$0xff]
    %v105 = vld [vmem:[#allocation7 + $0x28] sm:$0xff]
    %v106 = vld [vmem:[#allocation7 + $0x30] sm:$0xff]
    %v107 = vld [vmem:[#allocation7 + $0x38] sm:$0xff]
    %v108 = vld [vmem:[#allocation7 + $0x40] sm:$0xff]
    %v109 = vld [vmem:[#allocation7 + $0x48] sm:$0xff]
    %v110 = vld [vmem:[#allocation7 + $0x50] sm:$0xff]
    %v111 = vld [vmem:[#allocation7 + $0x58] sm:$0xff]
    %v112 = vld [vmem:[#allocation7 + $0x60] sm:$0xff]
    %v113 = vld [vmem:[#allocation7 + $0x68] sm:$0xff]
    %v114 = vld [vmem:[#allocation7 + $0x70] sm:$0xff]
    %v115 = vld [vmem:[#allocation7 + $0x78] sm:$0xff]
    %v116 = vld [vmem:[#allocation7 + $0x80] sm:$0xff]
    %v117 = vld [vmem:[#allocation7 + $0x88] sm:$0xff]
    %v118 = vld [vmem:[#allocation7 + $0x90] sm:$0xff]
    %v119 = vld [vmem:[#allocation7 + $0x98] sm:$0xff]
    %v120 = vld [vmem:[#allocation8] sm:$0x1f]
    %v121 = vld [vmem:[#allocation5] sm:$0xff]
    %v122 = vld [vmem:[#allocation5 + $0x8] sm:$0xff]
    %v123 = vld [vmem:[%s5] sm:$0xff]
    %v124 = vld [vmem:[%s5 + $0x8] sm:$0xff]
    %v125 = vld [vmem:[%s5 + $0x10] sm:$0xff]
    %v126 = vld [vmem:[%s5 + $0x18] sm:$0xff]
    %v128 = vlaneseq
    %v129 = vshrl.u32 %v128, 7
    %v130 = vsub.s32 0, %v129
    %v131 = vrot.slane %v120, %v130
    %v132 = vlaneseq
    %v133 = vshrl.u32 %v132, 7
    %v134 = vsub.s32 1, %v133
    %v135 = vrot.slane %v120, %v134
    %v136 = vlaneseq
    %v137 = vshrl.u32 %v136, 7
    %v138 = vsub.s32 2, %v137
    %v139 = vrot.slane %v120, %v138
    %v140 = vlaneseq
    %v141 = vshrl.u32 %v140, 7
    %v142 = vsub.s32 3, %v141
    %v143 = vrot.slane %v120, %v142
    %v144 = vlaneseq
    %v145 = vshrl.u32 %v144, 7
    %v146 = vsub.s32 4, %v145
    %v147 = vrot.slane %v120, %v146
    %vm153 = vcmask 261120
    %v155 = vsel %vm153, %v98, 0
    %v158 = vsel %vm153, %v99, 0
    %160 = vmatprep.subr.mxu0 %v101
    %161 = vmatpush1.msra.mxu0 %v100
    %162 = vmatprep.subr.mxu0 %v106
    %163 = vmatpush1.msra.mxu0 %v105
    %164 = vmatprep.subr.mxu0 %v111
    %165 = vmatpush1.msra.mxu0 %v110
    %166 = vmatprep.subr.mxu0 %v116
    %167 = vmatpush1.msra.mxu0 %v115
    %168 = vmatprep.subr.mxu0 0.0
    %169 = vmatpush1.msra.mxu0 0.0
    %170 = vmatprep.subr.mxu0 0.0
    %171 = vmatpush1.msra.mxu0 0.0
    %172 = vmatprep.subr.mxu0 0.0
    %173 = vmatpush1.msra.mxu0 0.0
    %174 = vmatprep.subr.mxu0 0.0
    %175 = vmatpush1.msra.mxu0 0.0
    %176 = vmatprep.subr.mxu0 0.0
    %177 = vmatpush1.msra.mxu0 0.0
    %178 = vmatprep.subr.mxu0 0.0
    %179 = vmatpush1.msra.mxu0 0.0
    %180 = vmatprep.subr.mxu0 0.0
    %181 = vmatpush1.msra.mxu0 0.0
    %182 = vmatprep.subr.mxu0 0.0
    %183 = vmatpush1.msra.mxu0 0.0
    %184 = vmatprep.subr.mxu0 0.0
    %185 = vmatpush1.msra.mxu0 0.0
    %186 = vmatprep.subr.mxu0 0.0
    %187 = vmatpush1.msra.mxu0 0.0
    %188 = vmatprep.subr.mxu0 0.0
    %189 = vmatpush1.msra.mxu0 0.0
    %190 = vmatprep.subr.mxu0 0.0
    %191 = vmatpush1.msra.mxu0 0.0
    %192 = vmatprep.subr.mxu0 0.0
    %193 = vmatpush1.msra.mxu0 0.0
    %194 = vmatprep.subr.mxu0 0.0
    %195 = vmatpush1.msra.mxu0 0.0
    %196 = vmatprep.subr.mxu0 0.0
    %197 = vmatpush1.msra.mxu0 0.0
    %198 = vmatprep.subr.mxu0 0.0
    %199 = vmatpush1.msra.mxu0 0.0
    %200 = vmatprep.subr.mxu0 0.0
    %201 = vmatpush1.msra.mxu0 0.0
    %202 = vmatprep.subr.mxu0 0.0
    %203 = vmatpush1.msra.mxu0 0.0
    %204 = vmatprep.subr.mxu0 0.0
    %205 = vmatpush1.msra.mxu0 0.0
    %206 = vmatprep.subr.mxu0 0.0
    %207 = vmatpush1.msra.mxu0 0.0
    %208 = vmatprep.subr.mxu0 0.0
    %209 = vmatpush1.msra.mxu0 0.0
    %210 = vmatprep.subr.mxu0 0.0
    %211 = vmatpush1.msra.mxu0 0.0
    %212 = vmatprep.subr.mxu0 0.0
    %213 = vmatpush1.msra.mxu0 0.0
    %214 = vmatprep.subr.mxu0 0.0
    %215 = vmatpush1.msra.mxu0 0.0
    %216 = vmatprep.subr.mxu0 0.0
    %217 = vmatpush1.msra.mxu0 0.0
    %218 = vmatprep.subr.mxu0 0.0
    %219 = vmatpush1.msra.mxu0 0.0
    %220 = vmatprep.subr.mxu0 0.0
    %221 = vmatpush1.msra.mxu0 0.0
    %222 = vmatprep.subr.mxu0 0.0
    %223 = vmatpush1.msra.mxu0 0.0
    %224 = vmatprep.mubr.f32.mxu0 0.0
    %225 = vmatmul.mubr.f32.gmra.mrb[0].mxu0 %v155
    %v226 = vpop.f32.mrb[0].mxu0
    %v227 = vadd.f32 %v131, %v226
    %v228 = vpop.f32.mrb[0].mxu0
    %v229 = vadd.f32 %v135, %v228
    %230 = vmatprep.mubr.f32.mxu0 0.0
    %231 = vmatmul.mubr.f32.gmra.mrb[0].mxu0 %v158
    %v232 = vpop.f32.mrb[0].mxu0
    %v233 = vadd.f32 %v131, %v232
    %v234 = vpop.f32.mrb[0].mxu0
    %v235 = vadd.f32 %v135, %v234
    %236 = vdwg.mxu0
    %237 = vmatprep.subr.mxu0 %v103
    %238 = vmatpush1.msra.mxu0 %v102
    %239 = vmatprep.subr.mxu0 %v108
    %240 = vmatpush1.msra.mxu0 %v107
    %241 = vmatprep.subr.mxu0 %v113
    %242 = vmatpush1.msra.mxu0 %v112
    %243 = vmatprep.subr.mxu0 %v118
    %244 = vmatpush1.msra.mxu0 %v117
    %245 = vmatprep.subr.mxu0 0.0
    %246 = vmatpush1.msra.mxu0 0.0
    %247 = vmatprep.subr.mxu0 0.0
    %248 = vmatpush1.msra.mxu0 0.0
    %249 = vmatprep.subr.mxu0 0.0
    %250 = vmatpush1.msra.mxu0 0.0
    %251 = vmatprep.subr.mxu0 0.0
    %252 = vmatpush1.msra.mxu0 0.0
    %253 = vmatprep.subr.mxu0 0.0
    %254 = vmatpush1.msra.mxu0 0.0
    %255 = vmatprep.subr.mxu0 0.0
    %256 = vmatpush1.msra.mxu0 0.0
    %257 = vmatprep.subr.mxu0 0.0
    %258 = vmatpush1.msra.mxu0 0.0
    %259 = vmatprep.subr.mxu0 0.0
    %260 = vmatpush1.msra.mxu0 0.0
    %261 = vmatprep.subr.mxu0 0.0
    %262 = vmatpush1.msra.mxu0 0.0
    %263 = vmatprep.subr.mxu0 0.0
    %264 = vmatpush1.msra.mxu0 0.0
    %265 = vmatprep.subr.mxu0 0.0
    %266 = vmatpush1.msra.mxu0 0.0
    %267 = vmatprep.subr.mxu0 0.0
    %268 = vmatpush1.msra.mxu0 0.0
    %269 = vmatprep.subr.mxu0 0.0
    %270 = vmatpush1.msra.mxu0 0.0
    %271 = vmatprep.subr.mxu0 0.0
    %272 = vmatpush1.msra.mxu0 0.0
    %273 = vmatprep.subr.mxu0 0.0
    %274 = vmatpush1.msra.mxu0 0.0
    %275 = vmatprep.subr.mxu0 0.0
    %276 = vmatpush1.msra.mxu0 0.0
    %277 = vmatprep.subr.mxu0 0.0
    %278 = vmatpush1.msra.mxu0 0.0
    %279 = vmatprep.subr.mxu0 0.0
    %280 = vmatpush1.msra.mxu0 0.0
    %281 = vmatprep.subr.mxu0 0.0
    %282 = vmatpush1.msra.mxu0 0.0
    %283 = vmatprep.subr.mxu0 0.0
    %284 = vmatpush1.msra.mxu0 0.0
    %285 = vmatprep.subr.mxu0 0.0
    %286 = vmatpush1.msra.mxu0 0.0
    %287 = vmatprep.subr.mxu0 0.0
    %288 = vmatpush1.msra.mxu0 0.0
    %289 = vmatprep.subr.mxu0 0.0
    %290 = vmatpush1.msra.mxu0 0.0
    %291 = vmatprep.subr.mxu0 0.0
    %292 = vmatpush1.msra.mxu0 0.0
    %293 = vmatprep.subr.mxu0 0.0
    %294 = vmatpush1.msra.mxu0 0.0
    %295 = vmatprep.subr.mxu0 0.0
    %296 = vmatpush1.msra.mxu0 0.0
    %297 = vmatprep.subr.mxu0 0.0
    %298 = vmatpush1.msra.mxu0 0.0
    %299 = vmatprep.subr.mxu0 0.0
    %300 = vmatpush1.msra.mxu0 0.0
    %301 = vmatprep.mubr.f32.mxu0 0.0
    %302 = vmatmul.mubr.f32.gmra.mrb[0].mxu0 %v155
    %v303 = vpop.f32.mrb[0].mxu0
    %v304 = vadd.f32 %v139, %v303
    %v305 = vpop.f32.mrb[0].mxu0
    %v306 = vadd.f32 %v143, %v305
    %307 = vmatprep.mubr.f32.mxu0 0.0
    %308 = vmatmul.mubr.f32.gmra.mrb[0].mxu0 %v158
    %v309 = vpop.f32.mrb[0].mxu0
    %v310 = vadd.f32 %v139, %v309
    %v311 = vpop.f32.mrb[0].mxu0
    %v312 = vadd.f32 %v143, %v311
    %313 = vdwg.mxu0
    %314 = vmatprep.subr.mxu0 0.0
    %315 = vmatpush1.msra.mxu0 %v104
    %316 = vmatprep.subr.mxu0 0.0
    %317 = vmatpush1.msra.mxu0 %v109
    %318 = vmatprep.subr.mxu0 0.0
    %319 = vmatpush1.msra.mxu0 %v114
    %320 = vmatprep.subr.mxu0 0.0
    %321 = vmatpush1.msra.mxu0 %v119
    %322 = vmatprep.subr.mxu0 0.0
    %323 = vmatpush1.msra.mxu0 0.0
    %324 = vmatprep.subr.mxu0 0.0
    %325 = vmatpush1.msra.mxu0 0.0
    %326 = vmatprep.subr.mxu0 0.0
    %327 = vmatpush1.msra.mxu0 0.0
    %328 = vmatprep.subr.mxu0 0.0
    %329 = vmatpush1.msra.mxu0 0.0
    %330 = vmatprep.subr.mxu0 0.0
    %331 = vmatpush1.msra.mxu0 0.0
    %332 = vmatprep.subr.mxu0 0.0
    %333 = vmatpush1.msra.mxu0 0.0
    %334 = vmatprep.subr.mxu0 0.0
    %335 = vmatpush1.msra.mxu0 0.0
    %336 = vmatprep.subr.mxu0 0.0
    %337 = vmatpush1.msra.mxu0 0.0
    %338 = vmatprep.subr.mxu0 0.0
    %339 = vmatpush1.msra.mxu0 0.0
    %340 = vmatprep.subr.mxu0 0.0
    %341 = vmatpush1.msra.mxu0 0.0
    %342 = vmatprep.subr.mxu0 0.0
    %343 = vmatpush1.msra.mxu0 0.0
    %344 = vmatprep.subr.mxu0 0.0
    %345 = vmatpush1.msra.mxu0 0.0
    %346 = vmatprep.subr.mxu0 0.0
    %347 = vmatpush1.msra.mxu0 0.0
    %348 = vmatprep.subr.mxu0 0.0
    %349 = vmatpush1.msra.mxu0 0.0
    %350 = vmatprep.subr.mxu0 0.0
    %351 = vmatpush1.msra.mxu0 0.0
    %352 = vmatprep.subr.mxu0 0.0
    %353 = vmatpush1.msra.mxu0 0.0
    %354 = vmatprep.subr.mxu0 0.0
    %355 = vmatpush1.msra.mxu0 0.0
    %356 = vmatprep.subr.mxu0 0.0
    %357 = vmatpush1.msra.mxu0 0.0
    %358 = vmatprep.subr.mxu0 0.0
    %359 = vmatpush1.msra.mxu0 0.0
    %360 = vmatprep.subr.mxu0 0.0
    %361 = vmatpush1.msra.mxu0 0.0
    %362 = vmatprep.subr.mxu0 0.0
    %363 = vmatpush1.msra.mxu0 0.0
    %364 = vmatprep.subr.mxu0 0.0
    %365 = vmatpush1.msra.mxu0 0.0
    %366 = vmatprep.subr.mxu0 0.0
    %367 = vmatpush1.msra.mxu0 0.0
    %368 = vmatprep.subr.mxu0 0.0
    %369 = vmatpush1.msra.mxu0 0.0
    %370 = vmatprep.subr.mxu0 0.0
    %371 = vmatpush1.msra.mxu0 0.0
    %372 = vmatprep.subr.mxu0 0.0
    %373 = vmatpush1.msra.mxu0 0.0
    %374 = vmatprep.subr.mxu0 0.0
    %375 = vmatpush1.msra.mxu0 0.0
    %376 = vmatprep.subr.mxu0 0.0
    %377 = vmatpush1.msra.mxu0 0.0
    %378 = vmatprep.mubr.f32.mxu0 0.0
    %379 = vmatmul.mubr.f32.gmra.mrb[0].mxu0 %v155
    %v380 = vpop.f32.mrb[0].mxu0
    %v381 = vadd.f32 %v147, %v380
    %v382 = vpop.f32.mrb[0].mxu0
    %383 = vmatprep.mubr.f32.mxu0 0.0
    %384 = vmatmul.mubr.f32.gmra.mrb[0].mxu0 %v158
    %v385 = vpop.f32.mrb[0].mxu0
    %v386 = vadd.f32 %v147, %v385
    %v387 = vpop.f32.mrb[0].mxu0
    %388 = vdwg.mxu0
    %389 = vst [vmem:[#allocation2] sm:$0xff] %v227
    %390 = vst [vmem:[#allocation2 + $0x8] sm:$0xff] %v233
    %391 = vst [vmem:[#allocation2 + $0x10] sm:$0xff] %v229
    %392 = vst [vmem:[#allocation2 + $0x18] sm:$0xff] %v235
    %393 = vst [vmem:[#allocation2 + $0x20] sm:$0xff] %v304
    %394 = vst [vmem:[#allocation2 + $0x28] sm:$0xff] %v310
    %395 = vst [vmem:[#allocation2 + $0x30] sm:$0xff] %v306
    %396 = vst [vmem:[#allocation2 + $0x38] sm:$0xff] %v312
    %v397 = vld [vmem:[#allocation2] sm:$0xff]
    %v398 = vld [vmem:[#allocation2 + $0x8] sm:$0xff]
    %v399 = vld [vmem:[#allocation2 + $0x10] sm:$0xff]
    %v400 = vld [vmem:[#allocation2 + $0x18] sm:$0xff]
    %v401 = vld [vmem:[#allocation2 + $0x20] sm:$0xff]
    %v402 = vld [vmem:[#allocation2 + $0x28] sm:$0xff]
    %v403 = vld [vmem:[#allocation2 + $0x30] sm:$0xff]
    %v404 = vld [vmem:[#allocation2 + $0x38] sm:$0xff]
    %vm405 = vcmask 523264
    %v407 = vsel %vm405, %v121, 0
    %v410 = vsel %vm405, %v122, 0
    %412 = vmatprep.subr.mxu0 0.0
    %413 = vmatpush1.msra.mxu0 %v397
    %414 = vmatprep.subr.mxu0 0.0
    %415 = vmatpush1.msra.mxu0 %v398
    %416 = vmatprep.subr.mxu0 0.0
    %417 = vmatpush1.msra.mxu0 %v399
    %418 = vmatprep.subr.mxu0 0.0
    %419 = vmatpush1.msra.mxu0 %v400
    %420 = vmatprep.subr.mxu0 0.0
    %421 = vmatpush1.msra.mxu0 %v401
    %422 = vmatprep.subr.mxu0 0.0
    %423 = vmatpush1.msra.mxu0 %v402
    %424 = vmatprep.subr.mxu0 0.0
    %425 = vmatpush1.msra.mxu0 %v403
    %426 = vmatprep.subr.mxu0 0.0
    %427 = vmatpush1.msra.mxu0 %v404
    %428 = vmatprep.subr.mxu0 0.0
    %429 = vmatpush1.msra.mxu0 0.0
    %430 = vmatprep.subr.mxu0 0.0
    %431 = vmatpush1.msra.mxu0 0.0
    %432 = vmatprep.subr.mxu0 0.0
    %433 = vmatpush1.msra.mxu0 0.0
    %434 = vmatprep.subr.mxu0 0.0
    %435 = vmatpush1.msra.mxu0 0.0
    %436 = vmatprep.subr.mxu0 0.0
    %437 = vmatpush1.msra.mxu0 0.0
    %438 = vmatprep.subr.mxu0 0.0
    %439 = vmatpush1.msra.mxu0 0.0
    %440 = vmatprep.subr.mxu0 0.0
    %441 = vmatpush1.msra.mxu0 0.0
    %442 = vmatprep.subr.mxu0 0.0
    %443 = vmatpush1.msra.mxu0 0.0
    %444 = vmatprep.subr.mxu0 0.0
    %445 = vmatpush1.msra.mxu0 0.0
    %446 = vmatprep.subr.mxu0 0.0
    %447 = vmatpush1.msra.mxu0 0.0
    %448 = vmatprep.subr.mxu0 0.0
    %449 = vmatpush1.msra.mxu0 0.0
    %450 = vmatprep.subr.mxu0 0.0
    %451 = vmatpush1.msra.mxu0 0.0
    %452 = vmatprep.subr.mxu0 0.0
    %453 = vmatpush1.msra.mxu0 0.0
    %454 = vmatprep.subr.mxu0 0.0
    %455 = vmatpush1.msra.mxu0 0.0
    %456 = vmatprep.subr.mxu0 0.0
    %457 = vmatpush1.msra.mxu0 0.0
    %458 = vmatprep.subr.mxu0 0.0
    %459 = vmatpush1.msra.mxu0 0.0
    %460 = vmatprep.subr.mxu0 0.0
    %461 = vmatpush1.msra.mxu0 0.0
    %462 = vmatprep.subr.mxu0 0.0
    %463 = vmatpush1.msra.mxu0 0.0
    %464 = vmatprep.subr.mxu0 0.0
    %465 = vmatpush1.msra.mxu0 0.0
    %466 = vmatprep.subr.mxu0 0.0
    %467 = vmatpush1.msra.mxu0 0.0
    %468 = vmatprep.subr.mxu0 0.0
    %469 = vmatpush1.msra.mxu0 0.0
    %470 = vmatprep.subr.mxu0 0.0
    %471 = vmatpush1.msra.mxu0 0.0
    %472 = vmatprep.subr.mxu0 0.0
    %473 = vmatpush1.msra.mxu0 0.0
    %474 = vmatprep.subr.mxu0 0.0
    %475 = vmatpush1.msra.mxu0 0.0
    %476 = vmatprep.mubr.f32.mxu0 0.0
    %477 = vmatmul.mubr.f32.gmra.mrb[0].mxu0 %v407
    %v478 = vpop.f32.mrb[0].mxu0
    %v479 = vadd.f32 %v381, %v478
    %v480 = vpop.f32.mrb[0].mxu0
    %481 = vmatprep.mubr.f32.mxu0 0.0
    %482 = vmatmul.mubr.f32.gmra.mrb[0].mxu0 %v410
    %v483 = vpop.f32.mrb[0].mxu0
    %v484 = vadd.f32 %v386, %v483
    %v485 = vpop.f32.mrb[0].mxu0
    %486 = vdwg.mxu0
    %v487 = vxor.u32 %v479, 2147483648
    %v488 = vxor.u32 %v484, 2147483648
    %v489 = vmul.f32 %v487, 1.442695
    %v490 = vpow.pop %v489
    %v491 = vmul.f32 %v488, 1.442695
    %v492 = vpow.pop %v491
    %v493 = vadd.f32 %v490, 1.0
    %v494 = vadd.f32 %v492, 1.0
    %v495 = vrcp.pop %v493
    %v496 = vmul.f32 1.0, %v495
    %v497 = vrcp.pop %v494
    %v498 = vmul.f32 1.0, %v497
    %v499 = vmul.f32 %v496, %v98
    %v500 = vmul.f32 %v498, %v99
    %v502 = vsel %vm153, %v499, 0
    %v505 = vsel %vm153, %v500, 0
    %507 = vmatprep.subr.mxu0 0.0
    %508 = vmatpush1.msra.mxu0 %v123
    %509 = vmatprep.subr.mxu0 0.0
    %510 = vmatpush1.msra.mxu0 %v124
    %511 = vmatprep.subr.mxu0 0.0
    %512 = vmatpush1.msra.mxu0 %v125
    %513 = vmatprep.subr.mxu0 0.0
    %514 = vmatpush1.msra.mxu0 %v126
    %515 = vmatprep.subr.mxu0 0.0
    %516 = vmatpush1.msra.mxu0 0.0
    %517 = vmatprep.subr.mxu0 0.0
    %518 = vmatpush1.msra.mxu0 0.0
    %519 = vmatprep.subr.mxu0 0.0
    %520 = vmatpush1.msra.mxu0 0.0
    %521 = vmatprep.subr.mxu0 0.0
    %522 = vmatpush1.msra.mxu0 0.0
    %523 = vmatprep.subr.mxu0 0.0
    %524 = vmatpush1.msra.mxu0 0.0
    %525 = vmatprep.subr.mxu0 0.0
    %526 = vmatpush1.msra.mxu0 0.0
    %527 = vmatprep.subr.mxu0 0.0
    %528 = vmatpush1.msra.mxu0 0.0
    %529 = vmatprep.subr.mxu0 0.0
    %530 = vmatpush1.msra.mxu0 0.0
    %531 = vmatprep.subr.mxu0 0.0
    %532 = vmatpush1.msra.mxu0 0.0
    %533 = vmatprep.subr.mxu0 0.0
    %534 = vmatpush1.msra.mxu0 0.0
    %535 = vmatprep.subr.mxu0 0.0
    %536 = vmatpush1.msra.mxu0 0.0
    %537 = vmatprep.subr.mxu0 0.0
    %538 = vmatpush1.msra.mxu0 0.0
    %539 = vmatprep.subr.mxu0 0.0
    %540 = vmatpush1.msra.mxu0 0.0
    %541 = vmatprep.subr.mxu0 0.0
    %542 = vmatpush1.msra.mxu0 0.0
    %543 = vmatprep.subr.mxu0 0.0
    %544 = vmatpush1.msra.mxu0 0.0
    %545 = vmatprep.subr.mxu0 0.0
    %546 = vmatpush1.msra.mxu0 0.0
    %547 = vmatprep.subr.mxu0 0.0
    %548 = vmatpush1.msra.mxu0 0.0
    %549 = vmatprep.subr.mxu0 0.0
    %550 = vmatpush1.msra.mxu0 0.0
    %551 = vmatprep.subr.mxu0 0.0
    %552 = vmatpush1.msra.mxu0 0.0
    %553 = vmatprep.subr.mxu0 0.0
    %554 = vmatpush1.msra.mxu0 0.0
    %555 = vmatprep.subr.mxu0 0.0
    %556 = vmatpush1.msra.mxu0 0.0
    %557 = vmatprep.subr.mxu0 0.0
    %558 = vmatpush1.msra.mxu0 0.0
    %559 = vmatprep.subr.mxu0 0.0
    %560 = vmatpush1.msra.mxu0 0.0
    %561 = vmatprep.subr.mxu0 0.0
    %562 = vmatpush1.msra.mxu0 0.0
    %563 = vmatprep.subr.mxu0 0.0
    %564 = vmatpush1.msra.mxu0 0.0
    %565 = vmatprep.subr.mxu0 0.0
    %566 = vmatpush1.msra.mxu0 0.0
    %567 = vmatprep.subr.mxu0 0.0
    %568 = vmatpush1.msra.mxu0 0.0
    %569 = vmatprep.subr.mxu0 0.0
    %570 = vmatpush1.msra.mxu0 0.0
    %571 = vmatprep.mubr.f32.mxu0 0.0
    %572 = vmatmul.mubr.f32.gmra.mrb[0].mxu0 %v502
    %v573 = vpop.f32.mrb[0].mxu0
    %v574 = vadd.f32 0.0, %v573
    %v575 = vpop.f32.mrb[0].mxu0
    %576 = vmatprep.mubr.f32.mxu0 0.0
    %577 = vmatmul.mubr.f32.gmra.mrb[0].mxu0 %v505
    %v578 = vpop.f32.mrb[0].mxu0
    %v579 = vadd.f32 0.0, %v578
    %v580 = vpop.f32.mrb[0].mxu0
    %581 = vdwg.mxu0
    %584 = vrot.lane.b32.xlu0 %v574, 64
    %v585 = vpop.permute.xlu0 %584
    %586 = vrot.lane.b32.xlu0 %v579, 64
    %v587 = vpop.permute.xlu0 %586
    %v590 = vadd.f32 %v479, %v585
    %v591 = vadd.f32 %v484, %v587
    %v592 = vtanh.pop %v590
    %v593 = vtanh.pop %v591
    %v594 = vsub.f32 1.0, %v496
    %v595 = vsub.f32 1.0, %v498
    %596 = vrot.lane.b32.xlu0 %v98, 32
    %v597 = vpop.permute.xlu0 %596
    %598 = vrot.lane.b32.xlu0 %v99, 32
    %v599 = vpop.permute.xlu0 %598
    %v602 = vmul.f32 %v594, %v597
    %v603 = vmul.f32 %v595, %v599
    %606 = vrot.lane.b32.xlu0 %v592, 96
    %v607 = vpop.permute.xlu0 %606
    %608 = vrot.lane.b32.xlu0 %v593, 96
    %v609 = vpop.permute.xlu0 %608
    %v612 = vmul.f32 %v496, %v607
    %v613 = vmul.f32 %v498, %v609
    %v614 = vadd.f32 %v602, %v612
    %v615 = vadd.f32 %v603, %v613
    %618 = vrot.lane.b32.xlu0 %v614, 96
    %v619 = vpop.permute.xlu0 %618
    %620 = vrot.lane.b32.xlu0 %v615, 96
    %v621 = vpop.permute.xlu0 %620
    %v622 = vsel %vm153, %v619, 0
    %v624 = vsel %vm153, %v621, 0
    %626 = vmatprep.subr.mxu0 %v101
    %627 = vmatpush1.msra.mxu0 %v100
    %628 = vmatprep.subr.mxu0 %v106
    %629 = vmatpush1.msra.mxu0 %v105
    %630 = vmatprep.subr.mxu0 %v111
    %631 = vmatpush1.msra.mxu0 %v110
    %632 = vmatprep.subr.mxu0 %v116
    %633 = vmatpush1.msra.mxu0 %v115
    %634 = vmatprep.subr.mxu0 0.0
    %635 = vmatpush1.msra.mxu0 0.0
    %636 = vmatprep.subr.mxu0 0.0
    %637 = vmatpush1.msra.mxu0 0.0
    %638 = vmatprep.subr.mxu0 0.0
    %639 = vmatpush1.msra.mxu0 0.0
    %640 = vmatprep.subr.mxu0 0.0
    %641 = vmatpush1.msra.mxu0 0.0
    %642 = vmatprep.subr.mxu0 0.0
    %643 = vmatpush1.msra.mxu0 0.0
    %644 = vmatprep.subr.mxu0 0.0
    %645 = vmatpush1.msra.mxu0 0.0
    %646 = vmatprep.subr.mxu0 0.0
    %647 = vmatpush1.msra.mxu0 0.0
    %648 = vmatprep.subr.mxu0 0.0
    %649 = vmatpush1.msra.mxu0 0.0
    %650 = vmatprep.subr.mxu0 0.0
    %651 = vmatpush1.msra.mxu0 0.0
    %652 = vmatprep.subr.mxu0 0.0
    %653 = vmatpush1.msra.mxu0 0.0
    %654 = vmatprep.subr.mxu0 0.0
    %655 = vmatpush1.msra.mxu0 0.0
    %656 = vmatprep.subr.mxu0 0.0
    %657 = vmatpush1.msra.mxu0 0.0
    %658 = vmatprep.subr.mxu0 0.0
    %659 = vmatpush1.msra.mxu0 0.0
    %660 = vmatprep.subr.mxu0 0.0
    %661 = vmatpush1.msra.mxu0 0.0
    %662 = vmatprep.subr.mxu0 0.0
    %663 = vmatpush1.msra.mxu0 0.0
    %664 = vmatprep.subr.mxu0 0.0
    %665 = vmatpush1.msra.mxu0 0.0
    %666 = vmatprep.subr.mxu0 0.0
    %667 = vmatpush1.msra.mxu0 0.0
    %668 = vmatprep.subr.mxu0 0.0
    %669 = vmatpush1.msra.mxu0 0.0
    %670 = vmatprep.subr.mxu0 0.0
    %671 = vmatpush1.msra.mxu0 0.0
    %672 = vmatprep.subr.mxu0 0.0
    %673 = vmatpush1.msra.mxu0 0.0
    %674 = vmatprep.subr.mxu0 0.0
    %675 = vmatpush1.msra.mxu0 0.0
    %676 = vmatprep.subr.mxu0 0.0
    %677 = vmatpush1.msra.mxu0 0.0
    %678 = vmatprep.subr.mxu0 0.0
    %679 = vmatpush1.msra.mxu0 0.0
    %680 = vmatprep.subr.mxu0 0.0
    %681 = vmatpush1.msra.mxu0 0.0
    %682 = vmatprep.subr.mxu0 0.0
    %683 = vmatpush1.msra.mxu0 0.0
    %684 = vmatprep.subr.mxu0 0.0
    %685 = vmatpush1.msra.mxu0 0.0
    %686 = vmatprep.subr.mxu0 0.0
    %687 = vmatpush1.msra.mxu0 0.0
    %688 = vmatprep.subr.mxu0 0.0
    %689 = vmatpush1.msra.mxu0 0.0
    %690 = vmatprep.mubr.f32.mxu0 0.0
    %691 = vmatmul.mubr.f32.gmra.mrb[0].mxu0 %v622
    %v692 = vpop.f32.mrb[0].mxu0
    %v693 = vadd.f32 %v131, %v692
    %v694 = vpop.f32.mrb[0].mxu0
    %v695 = vadd.f32 %v135, %v694
    %696 = vmatprep.mubr.f32.mxu0 0.0
    %697 = vmatmul.mubr.f32.gmra.mrb[0].mxu0 %v624
    %v698 = vpop.f32.mrb[0].mxu0
    %v699 = vadd.f32 %v131, %v698
    %v700 = vpop.f32.mrb[0].mxu0
    %v701 = vadd.f32 %v135, %v700
    %702 = vdwg.mxu0
    %703 = vmatprep.subr.mxu0 %v103
    %704 = vmatpush1.msra.mxu0 %v102
    %705 = vmatprep.subr.mxu0 %v108
    %706 = vmatpush1.msra.mxu0 %v107
    %707 = vmatprep.subr.mxu0 %v113
    %708 = vmatpush1.msra.mxu0 %v112
    %709 = vmatprep.subr.mxu0 %v118
    %710 = vmatpush1.msra.mxu0 %v117
    %711 = vmatprep.subr.mxu0 0.0
    %712 = vmatpush1.msra.mxu0 0.0
    %713 = vmatprep.subr.mxu0 0.0
    %714 = vmatpush1.msra.mxu0 0.0
    %715 = vmatprep.subr.mxu0 0.0
    %716 = vmatpush1.msra.mxu0 0.0
    %717 = vmatprep.subr.mxu0 0.0
    %718 = vmatpush1.msra.mxu0 0.0
    %719 = vmatprep.subr.mxu0 0.0
    %720 = vmatpush1.msra.mxu0 0.0
    %721 = vmatprep.subr.mxu0 0.0
    %722 = vmatpush1.msra.mxu0 0.0
    %723 = vmatprep.subr.mxu0 0.0
    %724 = vmatpush1.msra.mxu0 0.0
    %725 = vmatprep.subr.mxu0 0.0
    %726 = vmatpush1.msra.mxu0 0.0
    %727 = vmatprep.subr.mxu0 0.0
    %728 = vmatpush1.msra.mxu0 0.0
    %729 = vmatprep.subr.mxu0 0.0
    %730 = vmatpush1.msra.mxu0 0.0
    %731 = vmatprep.subr.mxu0 0.0
    %732 = vmatpush1.msra.mxu0 0.0
    %733 = vmatprep.subr.mxu0 0.0
    %734 = vmatpush1.msra.mxu0 0.0
    %735 = vmatprep.subr.mxu0 0.0
    %736 = vmatpush1.msra.mxu0 0.0
    %737 = vmatprep.subr.mxu0 0.0
    %738 = vmatpush1.msra.mxu0 0.0
    %739 = vmatprep.subr.mxu0 0.0
    %740 = vmatpush1.msra.mxu0 0.0
    %741 = vmatprep.subr.mxu0 0.0
    %742 = vmatpush1.msra.mxu0 0.0
    %743 = vmatprep.subr.mxu0 0.0
    %744 = vmatpush1.msra.mxu0 0.0
    %745 = vmatprep.subr.mxu0 0.0
    %746 = vmatpush1.msra.mxu0 0.0
    %747 = vmatprep.subr.mxu0 0.0
    %748 = vmatpush1.msra.mxu0 0.0
    %749 = vmatprep.subr.mxu0 0.0
    %750 = vmatpush1.msra.mxu0 0.0
    %751 = vmatprep.subr.mxu0 0.0
    %752 = vmatpush1.msra.mxu0 0.0
    %753 = vmatprep.subr.mxu0 0.0
    %754 = vmatpush1.msra.mxu0 0.0
    %755 = vmatprep.subr.mxu0 0.0
    %756 = vmatpush1.msra.mxu0 0.0
    %757 = vmatprep.subr.mxu0 0.0
    %758 = vmatpush1.msra.mxu0 0.0
    %759 = vmatprep.subr.mxu0 0.0
    %760 = vmatpush1.msra.mxu0 0.0
    %761 = vmatprep.subr.mxu0 0.0
    %762 = vmatpush1.msra.mxu0 0.0
    %763 = vmatprep.subr.mxu0 0.0
    %764 = vmatpush1.msra.mxu0 0.0
    %765 = vmatprep.subr.mxu0 0.0
    %766 = vmatpush1.msra.mxu0 0.0
    %767 = vmatprep.mubr.f32.mxu0 0.0
    %768 = vmatmul.mubr.f32.gmra.mrb[0].mxu0 %v622
    %v769 = vpop.f32.mrb[0].mxu0
    %v770 = vadd.f32 %v139, %v769
    %v771 = vpop.f32.mrb[0].mxu0
    %v772 = vadd.f32 %v143, %v771
    %773 = vmatprep.mubr.f32.mxu0 0.0
    %774 = vmatmul.mubr.f32.gmra.mrb[0].mxu0 %v624
    %v775 = vpop.f32.mrb[0].mxu0
    %v776 = vadd.f32 %v139, %v775
    %v777 = vpop.f32.mrb[0].mxu0
    %v778 = vadd.f32 %v143, %v777
    %779 = vdwg.mxu0
    %780 = vmatprep.subr.mxu0 0.0
    %781 = vmatpush1.msra.mxu0 %v104
    %782 = vmatprep.subr.mxu0 0.0
    %783 = vmatpush1.msra.mxu0 %v109
    %784 = vmatprep.subr.mxu0 0.0
    %785 = vmatpush1.msra.mxu0 %v114
    %786 = vmatprep.subr.mxu0 0.0
    %787 = vmatpush1.msra.mxu0 %v119
    %788 = vmatprep.subr.mxu0 0.0
    %789 = vmatpush1.msra.mxu0 0.0
    %790 = vmatprep.subr.mxu0 0.0
    %791 = vmatpush1.msra.mxu0 0.0
    %792 = vmatprep.subr.mxu0 0.0
    %793 = vmatpush1.msra.mxu0 0.0
    %794 = vmatprep.subr.mxu0 0.0
    %795 = vmatpush1.msra.mxu0 0.0
    %796 = vmatprep.subr.mxu0 0.0
    %797 = vmatpush1.msra.mxu0 0.0
    %798 = vmatprep.subr.mxu0 0.0
    %799 = vmatpush1.msra.mxu0 0.0
    %800 = vmatprep.subr.mxu0 0.0
    %801 = vmatpush1.msra.mxu0 0.0
    %802 = vmatprep.subr.mxu0 0.0
    %803 = vmatpush1.msra.mxu0 0.0
    %804 = vmatprep.subr.mxu0 0.0
    %805 = vmatpush1.msra.mxu0 0.0
    %806 = vmatprep.subr.mxu0 0.0
    %807 = vmatpush1.msra.mxu0 0.0
    %808 = vmatprep.subr.mxu0 0.0
    %809 = vmatpush1.msra.mxu0 0.0
    %810 = vmatprep.subr.mxu0 0.0
    %811 = vmatpush1.msra.mxu0 0.0
    %812 = vmatprep.subr.mxu0 0.0
    %813 = vmatpush1.msra.mxu0 0.0
    %814 = vmatprep.subr.mxu0 0.0
    %815 = vmatpush1.msra.mxu0 0.0
    %816 = vmatprep.subr.mxu0 0.0
    %817 = vmatpush1.msra.mxu0 0.0
    %818 = vmatprep.subr.mxu0 0.0
    %819 = vmatpush1.msra.mxu0 0.0
    %820 = vmatprep.subr.mxu0 0.0
    %821 = vmatpush1.msra.mxu0 0.0
    %822 = vmatprep.subr.mxu0 0.0
    %823 = vmatpush1.msra.mxu0 0.0
    %824 = vmatprep.subr.mxu0 0.0
    %825 = vmatpush1.msra.mxu0 0.0
    %826 = vmatprep.subr.mxu0 0.0
    %827 = vmatpush1.msra.mxu0 0.0
    %828 = vmatprep.subr.mxu0 0.0
    %829 = vmatpush1.msra.mxu0 0.0
    %830 = vmatprep.subr.mxu0 0.0
    %831 = vmatpush1.msra.mxu0 0.0
    %832 = vmatprep.subr.mxu0 0.0
    %833 = vmatpush1.msra.mxu0 0.0
    %834 = vmatprep.subr.mxu0 0.0
    %835 = vmatpush1.msra.mxu0 0.0
    %836 = vmatprep.subr.mxu0 0.0
    %837 = vmatpush1.msra.mxu0 0.0
    %838 = vmatprep.subr.mxu0 0.0
    %839 = vmatpush1.msra.mxu0 0.0
    %840 = vmatprep.subr.mxu0 0.0
    %841 = vmatpush1.msra.mxu0 0.0
    %842 = vmatprep.subr.mxu0 0.0
    %843 = vmatpush1.msra.mxu0 0.0
    %844 = vmatprep.mubr.f32.mxu0 0.0
    %845 = vmatmul.mubr.f32.gmra.mrb[0].mxu0 %v622
    %v846 = vpop.f32.mrb[0].mxu0
    %v847 = vadd.f32 %v147, %v846
    %v848 = vpop.f32.mrb[0].mxu0
    %849 = vmatprep.mubr.f32.mxu0 0.0
    %850 = vmatmul.mubr.f32.gmra.mrb[0].mxu0 %v624
    %v851 = vpop.f32.mrb[0].mxu0
    %v852 = vadd.f32 %v147, %v851
    %v853 = vpop.f32.mrb[0].mxu0
    %854 = vdwg.mxu0
    %855 = vst [vmem:[#allocation2] sm:$0xff] %v693
    %856 = vst [vmem:[#allocation2 + $0x8] sm:$0xff] %v699
    %857 = vst [vmem:[#allocation2 + $0x10] sm:$0xff] %v695
    %858 = vst [vmem:[#allocation2 + $0x18] sm:$0xff] %v701
    %859 = vst [vmem:[#allocation2 + $0x20] sm:$0xff] %v770
    %860 = vst [vmem:[#allocation2 + $0x28] sm:$0xff] %v776
    %861 = vst [vmem:[#allocation2 + $0x30] sm:$0xff] %v772
    %862 = vst [vmem:[#allocation2 + $0x38] sm:$0xff] %v778
    %v863 = vld [vmem:[#allocation2] sm:$0xff]
    %v864 = vld [vmem:[#allocation2 + $0x8] sm:$0xff]
    %v865 = vld [vmem:[#allocation2 + $0x10] sm:$0xff]
    %v866 = vld [vmem:[#allocation2 + $0x18] sm:$0xff]
    %v867 = vld [vmem:[#allocation2 + $0x20] sm:$0xff]
    %v868 = vld [vmem:[#allocation2 + $0x28] sm:$0xff]
    %v869 = vld [vmem:[#allocation2 + $0x30] sm:$0xff]
    %v870 = vld [vmem:[#allocation2 + $0x38] sm:$0xff]
    %871 = vmatprep.subr.mxu0 0.0
    %872 = vmatpush1.msra.mxu0 %v863
    %873 = vmatprep.subr.mxu0 0.0
    %874 = vmatpush1.msra.mxu0 %v864
    %875 = vmatprep.subr.mxu0 0.0
    %876 = vmatpush1.msra.mxu0 %v865
    %877 = vmatprep.subr.mxu0 0.0
    %878 = vmatpush1.msra.mxu0 %v866
    %879 = vmatprep.subr.mxu0 0.0
    %880 = vmatpush1.msra.mxu0 %v867
    %881 = vmatprep.subr.mxu0 0.0
    %882 = vmatpush1.msra.mxu0 %v868
    %883 = vmatprep.subr.mxu0 0.0
    %884 = vmatpush1.msra.mxu0 %v869
    %885 = vmatprep.subr.mxu0 0.0
    %886 = vmatpush1.msra.mxu0 %v870
    %887 = vmatprep.subr.mxu0 0.0
    %888 = vmatpush1.msra.mxu0 0.0
    %889 = vmatprep.subr.mxu0 0.0
    %890 = vmatpush1.msra.mxu0 0.0
    %891 = vmatprep.subr.mxu0 0.0
    %892 = vmatpush1.msra.mxu0 0.0
    %893 = vmatprep.subr.mxu0 0.0
    %894 = vmatpush1.msra.mxu0 0.0
    %895 = vmatprep.subr.mxu0 0.0
    %896 = vmatpush1.msra.mxu0 0.0
    %897 = vmatprep.subr.mxu0 0.0
    %898 = vmatpush1.msra.mxu0 0.0
    %899 = vmatprep.subr.mxu0 0.0
    %900 = vmatpush1.msra.mxu0 0.0
    %901 = vmatprep.subr.mxu0 0.0
    %902 = vmatpush1.msra.mxu0 0.0
    %903 = vmatprep.subr.mxu0 0.0
    %904 = vmatpush1.msra.mxu0 0.0
    %905 = vmatprep.subr.mxu0 0.0
    %906 = vmatpush1.msra.mxu0 0.0
    %907 = vmatprep.subr.mxu0 0.0
    %908 = vmatpush1.msra.mxu0 0.0
    %909 = vmatprep.subr.mxu0 0.0
    %910 = vmatpush1.msra.mxu0 0.0
    %911 = vmatprep.subr.mxu0 0.0
    %912 = vmatpush1.msra.mxu0 0.0
    %913 = vmatprep.subr.mxu0 0.0
    %914 = vmatpush1.msra.mxu0 0.0
    %915 = vmatprep.subr.mxu0 0.0
    %916 = vmatpush1.msra.mxu0 0.0
    %917 = vmatprep.subr.mxu0 0.0
    %918 = vmatpush1.msra.mxu0 0.0
    %919 = vmatprep.subr.mxu0 0.0
    %920 = vmatpush1.msra.mxu0 0.0
    %921 = vmatprep.subr.mxu0 0.0
    %922 = vmatpush1.msra.mxu0 0.0
    %923 = vmatprep.subr.mxu0 0.0
    %924 = vmatpush1.msra.mxu0 0.0
    %925 = vmatprep.subr.mxu0 0.0
    %926 = vmatpush1.msra.mxu0 0.0
    %927 = vmatprep.subr.mxu0 0.0
    %928 = vmatpush1.msra.mxu0 0.0
    %929 = vmatprep.subr.mxu0 0.0
    %930 = vmatpush1.msra.mxu0 0.0
    %931 = vmatprep.subr.mxu0 0.0
    %932 = vmatpush1.msra.mxu0 0.0
    %933 = vmatprep.subr.mxu0 0.0
    %934 = vmatpush1.msra.mxu0 0.0
    %935 = vmatprep.mubr.f32.mxu0 0.0
    %936 = vmatmul.mubr.f32.gmra.mrb[0].mxu0 %v407
    %v937 = vpop.f32.mrb[0].mxu0
    %v938 = vadd.f32 %v847, %v937
    %v939 = vpop.f32.mrb[0].mxu0
    %940 = vmatprep.mubr.f32.mxu0 0.0
    %941 = vmatmul.mubr.f32.gmra.mrb[0].mxu0 %v410
    %v942 = vpop.f32.mrb[0].mxu0
    %v943 = vadd.f32 %v852, %v942
    %v944 = vpop.f32.mrb[0].mxu0
    %945 = vdwg.mxu0
    %v946 = vxor.u32 %v938, 2147483648
    %v947 = vxor.u32 %v943, 2147483648
    %v948 = vmul.f32 %v946, 1.442695
    %v949 = vpow.pop %v948
    %v950 = vmul.f32 %v947, 1.442695
    %v951 = vpow.pop %v950
    %v952 = vadd.f32 %v949, 1.0
    %v953 = vadd.f32 %v951, 1.0
    %v954 = vrcp.pop %v952
    %v955 = vmul.f32 1.0, %v954
    %v956 = vrcp.pop %v953
    %v957 = vmul.f32 1.0, %v956
    %v960 = vmul.f32 %v955, %v619
    %v961 = vmul.f32 %v957, %v621
    %v963 = vsel %vm153, %v960, 0
    %v966 = vsel %vm153, %v961, 0
    %968 = vmatprep.subr.mxu0 0.0
    %969 = vmatpush1.msra.mxu0 %v123
    %970 = vmatprep.subr.mxu0 0.0
    %971 = vmatpush1.msra.mxu0 %v124
    %972 = vmatprep.subr.mxu0 0.0
    %973 = vmatpush1.msra.mxu0 %v125
    %974 = vmatprep.subr.mxu0 0.0
    %975 = vmatpush1.msra.mxu0 %v126
    %976 = vmatprep.subr.mxu0 0.0
    %977 = vmatpush1.msra.mxu0 0.0
    %978 = vmatprep.subr.mxu0 0.0
    %979 = vmatpush1.msra.mxu0 0.0
    %980 = vmatprep.subr.mxu0 0.0
    %981 = vmatpush1.msra.mxu0 0.0
    %982 = vmatprep.subr.mxu0 0.0
    %983 = vmatpush1.msra.mxu0 0.0
    %984 = vmatprep.subr.mxu0 0.0
    %985 = vmatpush1.msra.mxu0 0.0
    %986 = vmatprep.subr.mxu0 0.0
    %987 = vmatpush1.msra.mxu0 0.0
    %988 = vmatprep.subr.mxu0 0.0
    %989 = vmatpush1.msra.mxu0 0.0
    %990 = vmatprep.subr.mxu0 0.0
    %991 = vmatpush1.msra.mxu0 0.0
    %992 = vmatprep.subr.mxu0 0.0
    %993 = vmatpush1.msra.mxu0 0.0
    %994 = vmatprep.subr.mxu0 0.0
    %995 = vmatpush1.msra.mxu0 0.0
    %996 = vmatprep.subr.mxu0 0.0
    %997 = vmatpush1.msra.mxu0 0.0
    %998 = vmatprep.subr.mxu0 0.0
    %999 = vmatpush1.msra.mxu0 0.0
    %1000 = vmatprep.subr.mxu0 0.0
    %1001 = vmatpush1.msra.mxu0 0.0
    %1002 = vmatprep.subr.mxu0 0.0
    %1003 = vmatpush1.msra.mxu0 0.0
    %1004 = vmatprep.subr.mxu0 0.0
    %1005 = vmatpush1.msra.mxu0 0.0
    %1006 = vmatprep.subr.mxu0 0.0
    %1007 = vmatpush1.msra.mxu0 0.0
    %1008 = vmatprep.subr.mxu0 0.0
    %1009 = vmatpush1.msra.mxu0 0.0
    %1010 = vmatprep.subr.mxu0 0.0
    %1011 = vmatpush1.msra.mxu0 0.0
    %1012 = vmatprep.subr.mxu0 0.0
    %1013 = vmatpush1.msra.mxu0 0.0
    %1014 = vmatprep.subr.mxu0 0.0
    %1015 = vmatpush1.msra.mxu0 0.0
    %1016 = vmatprep.subr.mxu0 0.0
    %1017 = vmatpush1.msra.mxu0 0.0
    %1018 = vmatprep.subr.mxu0 0.0
    %1019 = vmatpush1.msra.mxu0 0.0
    %1020 = vmatprep.subr.mxu0 0.0
    %1021 = vmatpush1.msra.mxu0 0.0
    %1022 = vmatprep.subr.mxu0 0.0
    %1023 = vmatpush1.msra.mxu0 0.0
    %1024 = vmatprep.subr.mxu0 0.0
    %1025 = vmatpush1.msra.mxu0 0.0
    %1026 = vmatprep.subr.mxu0 0.0
    %1027 = vmatpush1.msra.mxu0 0.0
    %1028 = vmatprep.subr.mxu0 0.0
    %1029 = vmatpush1.msra.mxu0 0.0
    %1030 = vmatprep.subr.mxu0 0.0
    %1031 = vmatpush1.msra.mxu0 0.0
    %1032 = vmatprep.mubr.f32.mxu0 0.0
    %1033 = vmatmul.mubr.f32.gmra.mrb[0].mxu0 %v963
    %v1034 = vpop.f32.mrb[0].mxu0
    %v1035 = vadd.f32 0.0, %v1034
    %v1036 = vpop.f32.mrb[0].mxu0
    %1037 = vmatprep.mubr.f32.mxu0 0.0
    %1038 = vmatmul.mubr.f32.gmra.mrb[0].mxu0 %v966
    %v1039 = vpop.f32.mrb[0].mxu0
    %v1040 = vadd.f32 0.0, %v1039
    %v1041 = vpop.f32.mrb[0].mxu0
    %1042 = vdwg.mxu0
    %1045 = vrot.lane.b32.xlu0 %v1035, 64
    %v1046 = vpop.permute.xlu0 %1045
    %1047 = vrot.lane.b32.xlu0 %v1040, 64
    %v1048 = vpop.permute.xlu0 %1047
    %v1051 = vadd.f32 %v938, %v1046
    %v1052 = vadd.f32 %v943, %v1048
    %v1053 = vtanh.pop %v1051
    %v1054 = vtanh.pop %v1052
    %v1055 = vsub.f32 1.0, %v955
    %v1056 = vsub.f32 1.0, %v957
    %v1057 = vmul.f32 %v1055, %v614
    %v1058 = vmul.f32 %v1056, %v615
    %1061 = vrot.lane.b32.xlu0 %v1053, 96
    %v1062 = vpop.permute.xlu0 %1061
    %1063 = vrot.lane.b32.xlu0 %v1054, 96
    %v1064 = vpop.permute.xlu0 %1063
    %v1067 = vmul.f32 %v955, %v1062
    %v1068 = vmul.f32 %v957, %v1064
    %v1069 = vadd.f32 %v1057, %v1067
    %v1070 = vadd.f32 %v1058, %v1068
    %1073 = vrot.lane.b32.xlu0 %v1069, 96
    %v1074 = vpop.permute.xlu0 %1073
    %1075 = vrot.lane.b32.xlu0 %v1070, 96
    %v1076 = vpop.permute.xlu0 %1075
    %v1077 = vsel %vm153, %v1074, 0
    %v1079 = vsel %vm153, %v1076, 0
    %1081 = vmatprep.subr.mxu0 %v101
    %1082 = vmatpush1.msra.mxu0 %v100
    %1083 = vmatprep.subr.mxu0 %v106
    %1084 = vmatpush1.msra.mxu0 %v105
    %1085 = vmatprep.subr.mxu0 %v111
    %1086 = vmatpush1.msra.mxu0 %v110
    %1087 = vmatprep.subr.mxu0 %v116
    %1088 = vmatpush1.msra.mxu0 %v115
    %1089 = vmatprep.subr.mxu0 0.0
    %1090 = vmatpush1.msra.mxu0 0.0
    %1091 = vmatprep.subr.mxu0 0.0
    %1092 = vmatpush1.msra.mxu0 0.0
    %1093 = vmatprep.subr.mxu0 0.0
    %1094 = vmatpush1.msra.mxu0 0.0
    %1095 = vmatprep.subr.mxu0 0.0
    %1096 = vmatpush1.msra.mxu0 0.0
    %1097 = vmatprep.subr.mxu0 0.0
    %1098 = vmatpush1.msra.mxu0 0.0
    %1099 = vmatprep.subr.mxu0 0.0
    %1100 = vmatpush1.msra.mxu0 0.0
    %1101 = vmatprep.subr.mxu0 0.0
    %1102 = vmatpush1.msra.mxu0 0.0
    %1103 = vmatprep.subr.mxu0 0.0
    %1104 = vmatpush1.msra.mxu0 0.0
    %1105 = vmatprep.subr.mxu0 0.0
    %1106 = vmatpush1.msra.mxu0 0.0
    %1107 = vmatprep.subr.mxu0 0.0
    %1108 = vmatpush1.msra.mxu0 0.0
    %1109 = vmatprep.subr.mxu0 0.0
    %1110 = vmatpush1.msra.mxu0 0.0
    %1111 = vmatprep.subr.mxu0 0.0
    %1112 = vmatpush1.msra.mxu0 0.0
    %1113 = vmatprep.subr.mxu0 0.0
    %1114 = vmatpush1.msra.mxu0 0.0
    %1115 = vmatprep.subr.mxu0 0.0
    %1116 = vmatpush1.msra.mxu0 0.0
    %1117 = vmatprep.subr.mxu0 0.0
    %1118 = vmatpush1.msra.mxu0 0.0
    %1119 = vmatprep.subr.mxu0 0.0
    %1120 = vmatpush1.msra.mxu0 0.0
    %1121 = vmatprep.subr.mxu0 0.0
    %1122 = vmatpush1.msra.mxu0 0.0
    %1123 = vmatprep.subr.mxu0 0.0
    %1124 = vmatpush1.msra.mxu0 0.0
    %1125 = vmatprep.subr.mxu0 0.0
    %1126 = vmatpush1.msra.mxu0 0.0
    %1127 = vmatprep.subr.mxu0 0.0
    %1128 = vmatpush1.msra.mxu0 0.0
    %1129 = vmatprep.subr.mxu0 0.0
    %1130 = vmatpush1.msra.mxu0 0.0
    %1131 = vmatprep.subr.mxu0 0.0
    %1132 = vmatpush1.msra.mxu0 0.0
    %1133 = vmatprep.subr.mxu0 0.0
    %1134 = vmatpush1.msra.mxu0 0.0
    %1135 = vmatprep.subr.mxu0 0.0
    %1136 = vmatpush1.msra.mxu0 0.0
    %1137 = vmatprep.subr.mxu0 0.0
    %1138 = vmatpush1.msra.mxu0 0.0
    %1139 = vmatprep.subr.mxu0 0.0
    %1140 = vmatpush1.msra.mxu0 0.0
    %1141 = vmatprep.subr.mxu0 0.0
    %1142 = vmatpush1.msra.mxu0 0.0
    %1143 = vmatprep.subr.mxu0 0.0
    %1144 = vmatpush1.msra.mxu0 0.0
    %1145 = vmatprep.mubr.f32.mxu0 0.0
    %1146 = vmatmul.mubr.f32.gmra.mrb[0].mxu0 %v1077
    %v1147 = vpop.f32.mrb[0].mxu0
    %v1148 = vadd.f32 %v131, %v1147
    %v1149 = vpop.f32.mrb[0].mxu0
    %v1150 = vadd.f32 %v135, %v1149
    %1151 = vmatprep.mubr.f32.mxu0 0.0
    %1152 = vmatmul.mubr.f32.gmra.mrb[0].mxu0 %v1079
    %v1153 = vpop.f32.mrb[0].mxu0
    %v1154 = vadd.f32 %v131, %v1153
    %v1155 = vpop.f32.mrb[0].mxu0
    %v1156 = vadd.f32 %v135, %v1155
    %1157 = vdwg.mxu0
    %1158 = vmatprep.subr.mxu0 %v103
    %1159 = vmatpush1.msra.mxu0 %v102
    %1160 = vmatprep.subr.mxu0 %v108
    %1161 = vmatpush1.msra.mxu0 %v107
    %1162 = vmatprep.subr.mxu0 %v113
    %1163 = vmatpush1.msra.mxu0 %v112
    %1164 = vmatprep.subr.mxu0 %v118
    %1165 = vmatpush1.msra.mxu0 %v117
    %1166 = vmatprep.subr.mxu0 0.0
    %1167 = vmatpush1.msra.mxu0 0.0
    %1168 = vmatprep.subr.mxu0 0.0
    %1169 = vmatpush1.msra.mxu0 0.0
    %1170 = vmatprep.subr.mxu0 0.0
    %1171 = vmatpush1.msra.mxu0 0.0
    %1172 = vmatprep.subr.mxu0 0.0
    %1173 = vmatpush1.msra.mxu0 0.0
    %1174 = vmatprep.subr.mxu0 0.0
    %1175 = vmatpush1.msra.mxu0 0.0
    %1176 = vmatprep.subr.mxu0 0.0
    %1177 = vmatpush1.msra.mxu0 0.0
    %1178 = vmatprep.subr.mxu0 0.0
    %1179 = vmatpush1.msra.mxu0 0.0
    %1180 = vmatprep.subr.mxu0 0.0
    %1181 = vmatpush1.msra.mxu0 0.0
    %1182 = vmatprep.subr.mxu0 0.0
    %1183 = vmatpush1.msra.mxu0 0.0
    %1184 = vmatprep.subr.mxu0 0.0
    %1185 = vmatpush1.msra.mxu0 0.0
    %1186 = vmatprep.subr.mxu0 0.0
    %1187 = vmatpush1.msra.mxu0 0.0
    %1188 = vmatprep.subr.mxu0 0.0
    %1189 = vmatpush1.msra.mxu0 0.0
    %1190 = vmatprep.subr.mxu0 0.0
    %1191 = vmatpush1.msra.mxu0 0.0
    %1192 = vmatprep.subr.mxu0 0.0
    %1193 = vmatpush1.msra.mxu0 0.0
    %1194 = vmatprep.subr.mxu0 0.0
    %1195 = vmatpush1.msra.mxu0 0.0
    %1196 = vmatprep.subr.mxu0 0.0
    %1197 = vmatpush1.msra.mxu0 0.0
    %1198 = vmatprep.subr.mxu0 0.0
    %1199 = vmatpush1.msra.mxu0 0.0
    %1200 = vmatprep.subr.mxu0 0.0
    %1201 = vmatpush1.msra.mxu0 0.0
    %1202 = vmatprep.subr.mxu0 0.0
    %1203 = vmatpush1.msra.mxu0 0.0
    %1204 = vmatprep.subr.mxu0 0.0
    %1205 = vmatpush1.msra.mxu0 0.0
    %1206 = vmatprep.subr.mxu0 0.0
    %1207 = vmatpush1.msra.mxu0 0.0
    %1208 = vmatprep.subr.mxu0 0.0
    %1209 = vmatpush1.msra.mxu0 0.0
    %1210 = vmatprep.subr.mxu0 0.0
    %1211 = vmatpush1.msra.mxu0 0.0
    %1212 = vmatprep.subr.mxu0 0.0
    %1213 = vmatpush1.msra.mxu0 0.0
    %1214 = vmatprep.subr.mxu0 0.0
    %1215 = vmatpush1.msra.mxu0 0.0
    %1216 = vmatprep.subr.mxu0 0.0
    %1217 = vmatpush1.msra.mxu0 0.0
    %1218 = vmatprep.subr.mxu0 0.0
    %1219 = vmatpush1.msra.mxu0 0.0
    %1220 = vmatprep.subr.mxu0 0.0
    %1221 = vmatpush1.msra.mxu0 0.0
    %1222 = vmatprep.mubr.f32.mxu0 0.0
    %1223 = vmatmul.mubr.f32.gmra.mrb[0].mxu0 %v1077
    %v1224 = vpop.f32.mrb[0].mxu0
    %v1225 = vadd.f32 %v139, %v1224
    %v1226 = vpop.f32.mrb[0].mxu0
    %v1227 = vadd.f32 %v143, %v1226
    %1228 = vmatprep.mubr.f32.mxu0 0.0
    %1229 = vmatmul.mubr.f32.gmra.mrb[0].mxu0 %v1079
    %v1230 = vpop.f32.mrb[0].mxu0
    %v1231 = vadd.f32 %v139, %v1230
    %v1232 = vpop.f32.mrb[0].mxu0
    %v1233 = vadd.f32 %v143, %v1232
    %1234 = vdwg.mxu0
    %1235 = vmatprep.subr.mxu0 0.0
    %1236 = vmatpush1.msra.mxu0 %v104
    %1237 = vmatprep.subr.mxu0 0.0
    %1238 = vmatpush1.msra.mxu0 %v109
    %1239 = vmatprep.subr.mxu0 0.0
    %1240 = vmatpush1.msra.mxu0 %v114
    %1241 = vmatprep.subr.mxu0 0.0
    %1242 = vmatpush1.msra.mxu0 %v119
    %1243 = vmatprep.subr.mxu0 0.0
    %1244 = vmatpush1.msra.mxu0 0.0
    %1245 = vmatprep.subr.mxu0 0.0
    %1246 = vmatpush1.msra.mxu0 0.0
    %1247 = vmatprep.subr.mxu0 0.0
    %1248 = vmatpush1.msra.mxu0 0.0
    %1249 = vmatprep.subr.mxu0 0.0
    %1250 = vmatpush1.msra.mxu0 0.0
    %1251 = vmatprep.subr.mxu0 0.0
    %1252 = vmatpush1.msra.mxu0 0.0
    %1253 = vmatprep.subr.mxu0 0.0
    %1254 = vmatpush1.msra.mxu0 0.0
    %1255 = vmatprep.subr.mxu0 0.0
    %1256 = vmatpush1.msra.mxu0 0.0
    %1257 = vmatprep.subr.mxu0 0.0
    %1258 = vmatpush1.msra.mxu0 0.0
    %1259 = vmatprep.subr.mxu0 0.0
    %1260 = vmatpush1.msra.mxu0 0.0
    %1261 = vmatprep.subr.mxu0 0.0
    %1262 = vmatpush1.msra.mxu0 0.0
    %1263 = vmatprep.subr.mxu0 0.0
    %1264 = vmatpush1.msra.mxu0 0.0
    %1265 = vmatprep.subr.mxu0 0.0
    %1266 = vmatpush1.msra.mxu0 0.0
    %1267 = vmatprep.subr.mxu0 0.0
    %1268 = vmatpush1.msra.mxu0 0.0
    %1269 = vmatprep.subr.mxu0 0.0
    %1270 = vmatpush1.msra.mxu0 0.0
    %1271 = vmatprep.subr.mxu0 0.0
    %1272 = vmatpush1.msra.mxu0 0.0
    %1273 = vmatprep.subr.mxu0 0.0
    %1274 = vmatpush1.msra.mxu0 0.0
    %1275 = vmatprep.subr.mxu0 0.0
    %1276 = vmatpush1.msra.mxu0 0.0
    %1277 = vmatprep.subr.mxu0 0.0
    %1278 = vmatpush1.msra.mxu0 0.0
    %1279 = vmatprep.subr.mxu0 0.0
    %1280 = vmatpush1.msra.mxu0 0.0
    %1281 = vmatprep.subr.mxu0 0.0
    %1282 = vmatpush1.msra.mxu0 0.0
    %1283 = vmatprep.subr.mxu0 0.0
    %1284 = vmatpush1.msra.mxu0 0.0
    %1285 = vmatprep.subr.mxu0 0.0
    %1286 = vmatpush1.msra.mxu0 0.0
    %1287 = vmatprep.subr.mxu0 0.0
    %1288 = vmatpush1.msra.mxu0 0.0
    %1289 = vmatprep.subr.mxu0 0.0
    %1290 = vmatpush1.msra.mxu0 0.0
    %1291 = vmatprep.subr.mxu0 0.0
    %1292 = vmatpush1.msra.mxu0 0.0
    %1293 = vmatprep.subr.mxu0 0.0
    %1294 = vmatpush1.msra.mxu0 0.0
    %1295 = vmatprep.subr.mxu0 0.0
    %1296 = vmatpush1.msra.mxu0 0.0
    %1297 = vmatprep.subr.mxu0 0.0
    %1298 = vmatpush1.msra.mxu0 0.0
    %1299 = vmatprep.mubr.f32.mxu0 0.0
    %1300 = vmatmul.mubr.f32.gmra.mrb[0].mxu0 %v1077
    %v1301 = vpop.f32.mrb[0].mxu0
    %v1302 = vadd.f32 %v147, %v1301
    %v1303 = vpop.f32.mrb[0].mxu0
    %1304 = vmatprep.mubr.f32.mxu0 0.0
    %1305 = vmatmul.mubr.f32.gmra.mrb[0].mxu0 %v1079
    %v1306 = vpop.f32.mrb[0].mxu0
    %v1307 = vadd.f32 %v147, %v1306
    %v1308 = vpop.f32.mrb[0].mxu0
    %1309 = vdwg.mxu0
    %1310 = vst [vmem:[#allocation2] sm:$0xff] %v1148
    %1311 = vst [vmem:[#allocation2 + $0x8] sm:$0xff] %v1154
    %1312 = vst [vmem:[#allocation2 + $0x10] sm:$0xff] %v1150
    %1313 = vst [vmem:[#allocation2 + $0x18] sm:$0xff] %v1156
    %1314 = vst [vmem:[#allocation2 + $0x20] sm:$0xff] %v1225
    %1315 = vst [vmem:[#allocation2 + $0x28] sm:$0xff] %v1231
    %1316 = vst [vmem:[#allocation2 + $0x30] sm:$0xff] %v1227
    %1317 = vst [vmem:[#allocation2 + $0x38] sm:$0xff] %v1233
    %v1318 = vld [vmem:[#allocation2] sm:$0xff]
    %v1319 = vld [vmem:[#allocation2 + $0x8] sm:$0xff]
    %v1320 = vld [vmem:[#allocation2 + $0x10] sm:$0xff]
    %v1321 = vld [vmem:[#allocation2 + $0x18] sm:$0xff]
    %v1322 = vld [vmem:[#allocation2 + $0x20] sm:$0xff]
    %v1323 = vld [vmem:[#allocation2 + $0x28] sm:$0xff]
    %v1324 = vld [vmem:[#allocation2 + $0x30] sm:$0xff]
    %v1325 = vld [vmem:[#allocation2 + $0x38] sm:$0xff]
    %1326 = vmatprep.subr.mxu0 0.0
    %1327 = vmatpush1.msra.mxu0 %v1318
    %1328 = vmatprep.subr.mxu0 0.0
    %1329 = vmatpush1.msra.mxu0 %v1319
    %1330 = vmatprep.subr.mxu0 0.0
    %1331 = vmatpush1.msra.mxu0 %v1320
    %1332 = vmatprep.subr.mxu0 0.0
    %1333 = vmatpush1.msra.mxu0 %v1321
    %1334 = vmatprep.subr.mxu0 0.0
    %1335 = vmatpush1.msra.mxu0 %v1322
    %1336 = vmatprep.subr.mxu0 0.0
    %1337 = vmatpush1.msra.mxu0 %v1323
    %1338 = vmatprep.subr.mxu0 0.0
    %1339 = vmatpush1.msra.mxu0 %v1324
    %1340 = vmatprep.subr.mxu0 0.0
    %1341 = vmatpush1.msra.mxu0 %v1325
    %1342 = vmatprep.subr.mxu0 0.0
    %1343 = vmatpush1.msra.mxu0 0.0
    %1344 = vmatprep.subr.mxu0 0.0
    %1345 = vmatpush1.msra.mxu0 0.0
    %1346 = vmatprep.subr.mxu0 0.0
    %1347 = vmatpush1.msra.mxu0 0.0
    %1348 = vmatprep.subr.mxu0 0.0
    %1349 = vmatpush1.msra.mxu0 0.0
    %1350 = vmatprep.subr.mxu0 0.0
    %1351 = vmatpush1.msra.mxu0 0.0
    %1352 = vmatprep.subr.mxu0 0.0
    %1353 = vmatpush1.msra.mxu0 0.0
    %1354 = vmatprep.subr.mxu0 0.0
    %1355 = vmatpush1.msra.mxu0 0.0
    %1356 = vmatprep.subr.mxu0 0.0
    %1357 = vmatpush1.msra.mxu0 0.0
    %1358 = vmatprep.subr.mxu0 0.0
    %1359 = vmatpush1.msra.mxu0 0.0
    %1360 = vmatprep.subr.mxu0 0.0
    %1361 = vmatpush1.msra.mxu0 0.0
    %1362 = vmatprep.subr.mxu0 0.0
    %1363 = vmatpush1.msra.mxu0 0.0
    %1364 = vmatprep.subr.mxu0 0.0
    %1365 = vmatpush1.msra.mxu0 0.0
    %1366 = vmatprep.subr.mxu0 0.0
    %1367 = vmatpush1.msra.mxu0 0.0
    %1368 = vmatprep.subr.mxu0 0.0
    %1369 = vmatpush1.msra.mxu0 0.0
    %1370 = vmatprep.subr.mxu0 0.0
    %1371 = vmatpush1.msra.mxu0 0.0
    %1372 = vmatprep.subr.mxu0 0.0
    %1373 = vmatpush1.msra.mxu0 0.0
    %1374 = vmatprep.subr.mxu0 0.0
    %1375 = vmatpush1.msra.mxu0 0.0
    %1376 = vmatprep.subr.mxu0 0.0
    %1377 = vmatpush1.msra.mxu0 0.0
    %1378 = vmatprep.subr.mxu0 0.0
    %1379 = vmatpush1.msra.mxu0 0.0
    %1380 = vmatprep.subr.mxu0 0.0
    %1381 = vmatpush1.msra.mxu0 0.0
    %1382 = vmatprep.subr.mxu0 0.0
    %1383 = vmatpush1.msra.mxu0 0.0
    %1384 = vmatprep.subr.mxu0 0.0
    %1385 = vmatpush1.msra.mxu0 0.0
    %1386 = vmatprep.subr.mxu0 0.0
    %1387 = vmatpush1.msra.mxu0 0.0
    %1388 = vmatprep.subr.mxu0 0.0
    %1389 = vmatpush1.msra.mxu0 0.0
    %1390 = vmatprep.mubr.f32.mxu0 0.0
    %1391 = vmatmul.mubr.f32.gmra.mrb[0].mxu0 %v407
    %v1392 = vpop.f32.mrb[0].mxu0
    %v1393 = vadd.f32 %v1302, %v1392
    %v1394 = vpop.f32.mrb[0].mxu0
    %1395 = vmatprep.mubr.f32.mxu0 0.0
    %1396 = vmatmul.mubr.f32.gmra.mrb[0].mxu0 %v410
    %v1397 = vpop.f32.mrb[0].mxu0
    %v1398 = vadd.f32 %v1307, %v1397
    %v1399 = vpop.f32.mrb[0].mxu0
    %1400 = vdwg.mxu0
    %v1401 = vxor.u32 %v1393, 2147483648
    %v1402 = vxor.u32 %v1398, 2147483648
    %v1403 = vmul.f32 %v1401, 1.442695
    %v1404 = vpow.pop %v1403
    %v1405 = vmul.f32 %v1402, 1.442695
    %v1406 = vpow.pop %v1405
    %v1407 = vadd.f32 %v1404, 1.0
    %v1408 = vadd.f32 %v1406, 1.0
    %v1409 = vrcp.pop %v1407
    %v1410 = vmul.f32 1.0, %v1409
    %v1411 = vrcp.pop %v1408
    %v1412 = vmul.f32 1.0, %v1411
    %v1415 = vmul.f32 %v1410, %v1074
    %v1416 = vmul.f32 %v1412, %v1076
    %v1418 = vsel %vm153, %v1415, 0
    %v1421 = vsel %vm153, %v1416, 0
    %1423 = vmatprep.subr.mxu0 0.0
    %1424 = vmatpush1.msra.mxu0 %v123
    %1425 = vmatprep.subr.mxu0 0.0
    %1426 = vmatpush1.msra.mxu0 %v124
    %1427 = vmatprep.subr.mxu0 0.0
    %1428 = vmatpush1.msra.mxu0 %v125
    %1429 = vmatprep.subr.mxu0 0.0
    %1430 = vmatpush1.msra.mxu0 %v126
    %1431 = vmatprep.subr.mxu0 0.0
    %1432 = vmatpush1.msra.mxu0 0.0
    %1433 = vmatprep.subr.mxu0 0.0
    %1434 = vmatpush1.msra.mxu0 0.0
    %1435 = vmatprep.subr.mxu0 0.0
    %1436 = vmatpush1.msra.mxu0 0.0
    %1437 = vmatprep.subr.mxu0 0.0
    %1438 = vmatpush1.msra.mxu0 0.0
    %1439 = vmatprep.subr.mxu0 0.0
    %1440 = vmatpush1.msra.mxu0 0.0
    %1441 = vmatprep.subr.mxu0 0.0
    %1442 = vmatpush1.msra.mxu0 0.0
    %1443 = vmatprep.subr.mxu0 0.0
    %1444 = vmatpush1.msra.mxu0 0.0
    %1445 = vmatprep.subr.mxu0 0.0
    %1446 = vmatpush1.msra.mxu0 0.0
    %1447 = vmatprep.subr.mxu0 0.0
    %1448 = vmatpush1.msra.mxu0 0.0
    %1449 = vmatprep.subr.mxu0 0.0
    %1450 = vmatpush1.msra.mxu0 0.0
    %1451 = vmatprep.subr.mxu0 0.0
    %1452 = vmatpush1.msra.mxu0 0.0
    %1453 = vmatprep.subr.mxu0 0.0
    %1454 = vmatpush1.msra.mxu0 0.0
    %1455 = vmatprep.subr.mxu0 0.0
    %1456 = vmatpush1.msra.mxu0 0.0
    %1457 = vmatprep.subr.mxu0 0.0
    %1458 = vmatpush1.msra.mxu0 0.0
    %1459 = vmatprep.subr.mxu0 0.0
    %1460 = vmatpush1.msra.mxu0 0.0
    %1461 = vmatprep.subr.mxu0 0.0
    %1462 = vmatpush1.msra.mxu0 0.0
    %1463 = vmatprep.subr.mxu0 0.0
    %1464 = vmatpush1.msra.mxu0 0.0
    %1465 = vmatprep.subr.mxu0 0.0
    %1466 = vmatpush1.msra.mxu0 0.0
    %1467 = vmatprep.subr.mxu0 0.0
    %1468 = vmatpush1.msra.mxu0 0.0
    %1469 = vmatprep.subr.mxu0 0.0
    %1470 = vmatpush1.msra.mxu0 0.0
    %1471 = vmatprep.subr.mxu0 0.0
    %1472 = vmatpush1.msra.mxu0 0.0
    %1473 = vmatprep.subr.mxu0 0.0
    %1474 = vmatpush1.msra.mxu0 0.0
    %1475 = vmatprep.subr.mxu0 0.0
    %1476 = vmatpush1.msra.mxu0 0.0
    %1477 = vmatprep.subr.mxu0 0.0
    %1478 = vmatpush1.msra.mxu0 0.0
    %1479 = vmatprep.subr.mxu0 0.0
    %1480 = vmatpush1.msra.mxu0 0.0
    %1481 = vmatprep.subr.mxu0 0.0
    %1482 = vmatpush1.msra.mxu0 0.0
    %1483 = vmatprep.subr.mxu0 0.0
    %1484 = vmatpush1.msra.mxu0 0.0
    %1485 = vmatprep.subr.mxu0 0.0
    %1486 = vmatpush1.msra.mxu0 0.0
    %1487 = vmatprep.mubr.f32.mxu0 0.0
    %1488 = vmatmul.mubr.f32.gmra.mrb[0].mxu0 %v1418
    %v1489 = vpop.f32.mrb[0].mxu0
    %v1490 = vadd.f32 0.0, %v1489
    %v1491 = vpop.f32.mrb[0].mxu0
    %1492 = vmatprep.mubr.f32.mxu0 0.0
    %1493 = vmatmul.mubr.f32.gmra.mrb[0].mxu0 %v1421
    %v1494 = vpop.f32.mrb[0].mxu0
    %v1495 = vadd.f32 0.0, %v1494
    %v1496 = vpop.f32.mrb[0].mxu0
    %1497 = vdwg.mxu0
    %1500 = vrot.lane.b32.xlu0 %v1490, 64
    %v1501 = vpop.permute.xlu0 %1500
    %1502 = vrot.lane.b32.xlu0 %v1495, 64
    %v1503 = vpop.permute.xlu0 %1502
    %v1506 = vadd.f32 %v1393, %v1501
    %v1507 = vadd.f32 %v1398, %v1503
    %v1508 = vtanh.pop %v1506
    %v1509 = vtanh.pop %v1507
    %v1510 = vsub.f32 1.0, %v1410
    %v1511 = vsub.f32 1.0, %v1412
    %v1512 = vmul.f32 %v1510, %v1069
    %v1513 = vmul.f32 %v1511, %v1070
    %1516 = vrot.lane.b32.xlu0 %v1508, 96
    %v1517 = vpop.permute.xlu0 %1516
    %1518 = vrot.lane.b32.xlu0 %v1509, 96
    %v1519 = vpop.permute.xlu0 %1518
    %v1522 = vmul.f32 %v1410, %v1517
    %v1523 = vmul.f32 %v1412, %v1519
    %v1524 = vadd.f32 %v1512, %v1522
    %v1525 = vadd.f32 %v1513, %v1523
    %1528 = vrot.lane.b32.xlu0 %v1524, 96
    %v1529 = vpop.permute.xlu0 %1528
    %1530 = vrot.lane.b32.xlu0 %v1525, 96
    %v1531 = vpop.permute.xlu0 %1530
    %v1532 = vsel %vm153, %v1529, 0
    %v1534 = vsel %vm153, %v1531, 0
    %1536 = vmatprep.subr.mxu0 %v101
    %1537 = vmatpush1.msra.mxu0 %v100
    %1538 = vmatprep.subr.mxu0 %v106
    %1539 = vmatpush1.msra.mxu0 %v105
    %1540 = vmatprep.subr.mxu0 %v111
    %1541 = vmatpush1.msra.mxu0 %v110
    %1542 = vmatprep.subr.mxu0 %v116
    %1543 = vmatpush1.msra.mxu0 %v115
    %1544 = vmatprep.subr.mxu0 0.0
    %1545 = vmatpush1.msra.mxu0 0.0
    %1546 = vmatprep.subr.mxu0 0.0
    %1547 = vmatpush1.msra.mxu0 0.0
    %1548 = vmatprep.subr.mxu0 0.0
    %1549 = vmatpush1.msra.mxu0 0.0
    %1550 = vmatprep.subr.mxu0 0.0
    %1551 = vmatpush1.msra.mxu0 0.0
    %1552 = vmatprep.subr.mxu0 0.0
    %1553 = vmatpush1.msra.mxu0 0.0
    %1554 = vmatprep.subr.mxu0 0.0
    %1555 = vmatpush1.msra.mxu0 0.0
    %1556 = vmatprep.subr.mxu0 0.0
    %1557 = vmatpush1.msra.mxu0 0.0
    %1558 = vmatprep.subr.mxu0 0.0
    %1559 = vmatpush1.msra.mxu0 0.0
    %1560 = vmatprep.subr.mxu0 0.0
    %1561 = vmatpush1.msra.mxu0 0.0
    %1562 = vmatprep.subr.mxu0 0.0
    %1563 = vmatpush1.msra.mxu0 0.0
    %1564 = vmatprep.subr.mxu0 0.0
    %1565 = vmatpush1.msra.mxu0 0.0
    %1566 = vmatprep.subr.mxu0 0.0
    %1567 = vmatpush1.msra.mxu0 0.0
    %1568 = vmatprep.subr.mxu0 0.0
    %1569 = vmatpush1.msra.mxu0 0.0
    %1570 = vmatprep.subr.mxu0 0.0
    %1571 = vmatpush1.msra.mxu0 0.0
    %1572 = vmatprep.subr.mxu0 0.0
    %1573 = vmatpush1.msra.mxu0 0.0
    %1574 = vmatprep.subr.mxu0 0.0
    %1575 = vmatpush1.msra.mxu0 0.0
    %1576 = vmatprep.subr.mxu0 0.0
    %1577 = vmatpush1.msra.mxu0 0.0
    %1578 = vmatprep.subr.mxu0 0.0
    %1579 = vmatpush1.msra.mxu0 0.0
    %1580 = vmatprep.subr.mxu0 0.0
    %1581 = vmatpush1.msra.mxu0 0.0
    %1582 = vmatprep.subr.mxu0 0.0
    %1583 = vmatpush1.msra.mxu0 0.0
    %1584 = vmatprep.subr.mxu0 0.0
    %1585 = vmatpush1.msra.mxu0 0.0
    %1586 = vmatprep.subr.mxu0 0.0
    %1587 = vmatpush1.msra.mxu0 0.0
    %1588 = vmatprep.subr.mxu0 0.0
    %1589 = vmatpush1.msra.mxu0 0.0
    %1590 = vmatprep.subr.mxu0 0.0
    %1591 = vmatpush1.msra.mxu0 0.0
    %1592 = vmatprep.subr.mxu0 0.0
    %1593 = vmatpush1.msra.mxu0 0.0
    %1594 = vmatprep.subr.mxu0 0.0
    %1595 = vmatpush1.msra.mxu0 0.0
    %1596 = vmatprep.subr.mxu0 0.0
    %1597 = vmatpush1.msra.mxu0 0.0
    %1598 = vmatprep.subr.mxu0 0.0
    %1599 = vmatpush1.msra.mxu0 0.0
    %1600 = vmatprep.mubr.f32.mxu0 0.0
    %1601 = vmatmul.mubr.f32.gmra.mrb[0].mxu0 %v1532
    %v1602 = vpop.f32.mrb[0].mxu0
    %v1603 = vadd.f32 %v131, %v1602
    %v1604 = vpop.f32.mrb[0].mxu0
    %v1605 = vadd.f32 %v135, %v1604
    %1606 = vmatprep.mubr.f32.mxu0 0.0
    %1607 = vmatmul.mubr.f32.gmra.mrb[0].mxu0 %v1534
    %v1608 = vpop.f32.mrb[0].mxu0
    %v1609 = vadd.f32 %v131, %v1608
    %v1610 = vpop.f32.mrb[0].mxu0
    %v1611 = vadd.f32 %v135, %v1610
    %1612 = vdwg.mxu0
    %1613 = vmatprep.subr.mxu0 %v103
    %1614 = vmatpush1.msra.mxu0 %v102
    %1615 = vmatprep.subr.mxu0 %v108
    %1616 = vmatpush1.msra.mxu0 %v107
    %1617 = vmatprep.subr.mxu0 %v113
    %1618 = vmatpush1.msra.mxu0 %v112
    %1619 = vmatprep.subr.mxu0 %v118
    %1620 = vmatpush1.msra.mxu0 %v117
    %1621 = vmatprep.subr.mxu0 0.0
    %1622 = vmatpush1.msra.mxu0 0.0
    %1623 = vmatprep.subr.mxu0 0.0
    %1624 = vmatpush1.msra.mxu0 0.0
    %1625 = vmatprep.subr.mxu0 0.0
    %1626 = vmatpush1.msra.mxu0 0.0
    %1627 = vmatprep.subr.mxu0 0.0
    %1628 = vmatpush1.msra.mxu0 0.0
    %1629 = vmatprep.subr.mxu0 0.0
    %1630 = vmatpush1.msra.mxu0 0.0
    %1631 = vmatprep.subr.mxu0 0.0
    %1632 = vmatpush1.msra.mxu0 0.0
    %1633 = vmatprep.subr.mxu0 0.0
    %1634 = vmatpush1.msra.mxu0 0.0
    %1635 = vmatprep.subr.mxu0 0.0
    %1636 = vmatpush1.msra.mxu0 0.0
    %1637 = vmatprep.subr.mxu0 0.0
    %1638 = vmatpush1.msra.mxu0 0.0
    %1639 = vmatprep.subr.mxu0 0.0
    %1640 = vmatpush1.msra.mxu0 0.0
    %1641 = vmatprep.subr.mxu0 0.0
    %1642 = vmatpush1.msra.mxu0 0.0
    %1643 = vmatprep.subr.mxu0 0.0
    %1644 = vmatpush1.msra.mxu0 0.0
    %1645 = vmatprep.subr.mxu0 0.0
    %1646 = vmatpush1.msra.mxu0 0.0
    %1647 = vmatprep.subr.mxu0 0.0
    %1648 = vmatpush1.msra.mxu0 0.0
    %1649 = vmatprep.subr.mxu0 0.0
    %1650 = vmatpush1.msra.mxu0 0.0
    %1651 = vmatprep.subr.mxu0 0.0
    %1652 = vmatpush1.msra.mxu0 0.0
    %1653 = vmatprep.subr.mxu0 0.0
    %1654 = vmatpush1.msra.mxu0 0.0
    %1655 = vmatprep.subr.mxu0 0.0
    %1656 = vmatpush1.msra.mxu0 0.0
    %1657 = vmatprep.subr.mxu0 0.0
    %1658 = vmatpush1.msra.mxu0 0.0
    %1659 = vmatprep.subr.mxu0 0.0
    %1660 = vmatpush1.msra.mxu0 0.0
    %1661 = vmatprep.subr.mxu0 0.0
    %1662 = vmatpush1.msra.mxu0 0.0
    %1663 = vmatprep.subr.mxu0 0.0
    %1664 = vmatpush1.msra.mxu0 0.0
    %1665 = vmatprep.subr.mxu0 0.0
    %1666 = vmatpush1.msra.mxu0 0.0
    %1667 = vmatprep.subr.mxu0 0.0
    %1668 = vmatpush1.msra.mxu0 0.0
    %1669 = vmatprep.subr.mxu0 0.0
    %1670 = vmatpush1.msra.mxu0 0.0
    %1671 = vmatprep.subr.mxu0 0.0
    %1672 = vmatpush1.msra.mxu0 0.0
    %1673 = vmatprep.subr.mxu0 0.0
    %1674 = vmatpush1.msra.mxu0 0.0
    %1675 = vmatprep.subr.mxu0 0.0
    %1676 = vmatpush1.msra.mxu0 0.0
    %1677 = vmatprep.mubr.f32.mxu0 0.0
    %1678 = vmatmul.mubr.f32.gmra.mrb[0].mxu0 %v1532
    %v1679 = vpop.f32.mrb[0].mxu0
    %v1680 = vadd.f32 %v139, %v1679
    %v1681 = vpop.f32.mrb[0].mxu0
    %v1682 = vadd.f32 %v143, %v1681
    %1683 = vmatprep.mubr.f32.mxu0 0.0
    %1684 = vmatmul.mubr.f32.gmra.mrb[0].mxu0 %v1534
    %v1685 = vpop.f32.mrb[0].mxu0
    %v1686 = vadd.f32 %v139, %v1685
    %v1687 = vpop.f32.mrb[0].mxu0
    %v1688 = vadd.f32 %v143, %v1687
    %1689 = vdwg.mxu0
    %1690 = vmatprep.subr.mxu0 0.0
    %1691 = vmatpush1.msra.mxu0 %v104
    %1692 = vmatprep.subr.mxu0 0.0
    %1693 = vmatpush1.msra.mxu0 %v109
    %1694 = vmatprep.subr.mxu0 0.0
    %1695 = vmatpush1.msra.mxu0 %v114
    %1696 = vmatprep.subr.mxu0 0.0
    %1697 = vmatpush1.msra.mxu0 %v119
    %1698 = vmatprep.subr.mxu0 0.0
    %1699 = vmatpush1.msra.mxu0 0.0
    %1700 = vmatprep.subr.mxu0 0.0
    %1701 = vmatpush1.msra.mxu0 0.0
    %1702 = vmatprep.subr.mxu0 0.0
    %1703 = vmatpush1.msra.mxu0 0.0
    %1704 = vmatprep.subr.mxu0 0.0
    %1705 = vmatpush1.msra.mxu0 0.0
    %1706 = vmatprep.subr.mxu0 0.0
    %1707 = vmatpush1.msra.mxu0 0.0
    %1708 = vmatprep.subr.mxu0 0.0
    %1709 = vmatpush1.msra.mxu0 0.0
    %1710 = vmatprep.subr.mxu0 0.0
    %1711 = vmatpush1.msra.mxu0 0.0
    %1712 = vmatprep.subr.mxu0 0.0
    %1713 = vmatpush1.msra.mxu0 0.0
    %1714 = vmatprep.subr.mxu0 0.0
    %1715 = vmatpush1.msra.mxu0 0.0
    %1716 = vmatprep.subr.mxu0 0.0
    %1717 = vmatpush1.msra.mxu0 0.0
    %1718 = vmatprep.subr.mxu0 0.0
    %1719 = vmatpush1.msra.mxu0 0.0
    %1720 = vmatprep.subr.mxu0 0.0
    %1721 = vmatpush1.msra.mxu0 0.0
    %1722 = vmatprep.subr.mxu0 0.0
    %1723 = vmatpush1.msra.mxu0 0.0
    %1724 = vmatprep.subr.mxu0 0.0
    %1725 = vmatpush1.msra.mxu0 0.0
    %1726 = vmatprep.subr.mxu0 0.0
    %1727 = vmatpush1.msra.mxu0 0.0
    %1728 = vmatprep.subr.mxu0 0.0
    %1729 = vmatpush1.msra.mxu0 0.0
    %1730 = vmatprep.subr.mxu0 0.0
    %1731 = vmatpush1.msra.mxu0 0.0
    %1732 = vmatprep.subr.mxu0 0.0
    %1733 = vmatpush1.msra.mxu0 0.0
    %1734 = vmatprep.subr.mxu0 0.0
    %1735 = vmatpush1.msra.mxu0 0.0
    %1736 = vmatprep.subr.mxu0 0.0
    %1737 = vmatpush1.msra.mxu0 0.0
    %1738 = vmatprep.subr.mxu0 0.0
    %1739 = vmatpush1.msra.mxu0 0.0
    %1740 = vmatprep.subr.mxu0 0.0
    %1741 = vmatpush1.msra.mxu0 0.0
    %1742 = vmatprep.subr.mxu0 0.0
    %1743 = vmatpush1.msra.mxu0 0.0
    %1744 = vmatprep.subr.mxu0 0.0
    %1745 = vmatpush1.msra.mxu0 0.0
    %1746 = vmatprep.subr.mxu0 0.0
    %1747 = vmatpush1.msra.mxu0 0.0
    %1748 = vmatprep.subr.mxu0 0.0
    %1749 = vmatpush1.msra.mxu0 0.0
    %1750 = vmatprep.subr.mxu0 0.0
    %1751 = vmatpush1.msra.mxu0 0.0
    %1752 = vmatprep.subr.mxu0 0.0
    %1753 = vmatpush1.msra.mxu0 0.0
    %1754 = vmatprep.mubr.f32.mxu0 0.0
    %1755 = vmatmul.mubr.f32.gmra.mrb[0].mxu0 %v1532
    %v1756 = vpop.f32.mrb[0].mxu0
    %v1757 = vadd.f32 %v147, %v1756
    %v1758 = vpop.f32.mrb[0].mxu0
    %1759 = vmatprep.mubr.f32.mxu0 0.0
    %1760 = vmatmul.mubr.f32.gmra.mrb[0].mxu0 %v1534
    %v1761 = vpop.f32.mrb[0].mxu0
    %v1762 = vadd.f32 %v147, %v1761
    %v1763 = vpop.f32.mrb[0].mxu0
    %1764 = vdwg.mxu0
    %1765 = vst [vmem:[#allocation2] sm:$0xff] %v1603
    %1766 = vst [vmem:[#allocation2 + $0x8] sm:$0xff] %v1609
    %1767 = vst [vmem:[#allocation2 + $0x10] sm:$0xff] %v1605
    %1768 = vst [vmem:[#allocation2 + $0x18] sm:$0xff] %v1611
    %1769 = vst [vmem:[#allocation2 + $0x20] sm:$0xff] %v1680
    %1770 = vst [vmem:[#allocation2 + $0x28] sm:$0xff] %v1686
    %1771 = vst [vmem:[#allocation2 + $0x30] sm:$0xff] %v1682
    %1772 = vst [vmem:[#allocation2 + $0x38] sm:$0xff] %v1688
    %v1773 = vld [vmem:[#allocation2] sm:$0xff]
    %v1774 = vld [vmem:[#allocation2 + $0x8] sm:$0xff]
    %v1775 = vld [vmem:[#allocation2 + $0x10] sm:$0xff]
    %v1776 = vld [vmem:[#allocation2 + $0x18] sm:$0xff]
    %v1777 = vld [vmem:[#allocation2 + $0x20] sm:$0xff]
    %v1778 = vld [vmem:[#allocation2 + $0x28] sm:$0xff]
    %v1779 = vld [vmem:[#allocation2 + $0x30] sm:$0xff]
    %v1780 = vld [vmem:[#allocation2 + $0x38] sm:$0xff]
    %1781 = vmatprep.subr.mxu0 0.0
    %1782 = vmatpush1.msra.mxu0 %v1773
    %1783 = vmatprep.subr.mxu0 0.0
    %1784 = vmatpush1.msra.mxu0 %v1774
    %1785 = vmatprep.subr.mxu0 0.0
    %1786 = vmatpush1.msra.mxu0 %v1775
    %1787 = vmatprep.subr.mxu0 0.0
    %1788 = vmatpush1.msra.mxu0 %v1776
    %1789 = vmatprep.subr.mxu0 0.0
    %1790 = vmatpush1.msra.mxu0 %v1777
    %1791 = vmatprep.subr.mxu0 0.0
    %1792 = vmatpush1.msra.mxu0 %v1778
    %1793 = vmatprep.subr.mxu0 0.0
    %1794 = vmatpush1.msra.mxu0 %v1779
    %1795 = vmatprep.subr.mxu0 0.0
    %1796 = vmatpush1.msra.mxu0 %v1780
    %1797 = vmatprep.subr.mxu0 0.0
    %1798 = vmatpush1.msra.mxu0 0.0
    %1799 = vmatprep.subr.mxu0 0.0
    %1800 = vmatpush1.msra.mxu0 0.0
    %1801 = vmatprep.subr.mxu0 0.0
    %1802 = vmatpush1.msra.mxu0 0.0
    %1803 = vmatprep.subr.mxu0 0.0
    %1804 = vmatpush1.msra.mxu0 0.0
    %1805 = vmatprep.subr.mxu0 0.0
    %1806 = vmatpush1.msra.mxu0 0.0
    %1807 = vmatprep.subr.mxu0 0.0
    %1808 = vmatpush1.msra.mxu0 0.0
    %1809 = vmatprep.subr.mxu0 0.0
    %1810 = vmatpush1.msra.mxu0 0.0
    %1811 = vmatprep.subr.mxu0 0.0
    %1812 = vmatpush1.msra.mxu0 0.0
    %1813 = vmatprep.subr.mxu0 0.0
    %1814 = vmatpush1.msra.mxu0 0.0
    %1815 = vmatprep.subr.mxu0 0.0
    %1816 = vmatpush1.msra.mxu0 0.0
    %1817 = vmatprep.subr.mxu0 0.0
    %1818 = vmatpush1.msra.mxu0 0.0
    %1819 = vmatprep.subr.mxu0 0.0
    %1820 = vmatpush1.msra.mxu0 0.0
    %1821 = vmatprep.subr.mxu0 0.0
    %1822 = vmatpush1.msra.mxu0 0.0
    %1823 = vmatprep.subr.mxu0 0.0
    %1824 = vmatpush1.msra.mxu0 0.0
    %1825 = vmatprep.subr.mxu0 0.0
    %1826 = vmatpush1.msra.mxu0 0.0
    %1827 = vmatprep.subr.mxu0 0.0
    %1828 = vmatpush1.msra.mxu0 0.0
    %1829 = vmatprep.subr.mxu0 0.0
    %1830 = vmatpush1.msra.mxu0 0.0
    %1831 = vmatprep.subr.mxu0 0.0
    %1832 = vmatpush1.msra.mxu0 0.0
    %1833 = vmatprep.subr.mxu0 0.0
    %1834 = vmatpush1.msra.mxu0 0.0
    %1835 = vmatprep.subr.mxu0 0.0
    %1836 = vmatpush1.msra.mxu0 0.0
    %1837 = vmatprep.subr.mxu0 0.0
    %1838 = vmatpush1.msra.mxu0 0.0
    %1839 = vmatprep.subr.mxu0 0.0
    %1840 = vmatpush1.msra.mxu0 0.0
    %1841 = vmatprep.subr.mxu0 0.0
    %1842 = vmatpush1.msra.mxu0 0.0
    %1843 = vmatprep.subr.mxu0 0.0
    %1844 = vmatpush1.msra.mxu0 0.0
    %1845 = vmatprep.mubr.f32.mxu0 0.0
    %1846 = vmatmul.mubr.f32.gmra.mrb[0].mxu0 %v407
    %v1847 = vpop.f32.mrb[0].mxu0
    %v1848 = vadd.f32 %v1757, %v1847
    %v1849 = vpop.f32.mrb[0].mxu0
    %1850 = vmatprep.mubr.f32.mxu0 0.0
    %1851 = vmatmul.mubr.f32.gmra.mrb[0].mxu0 %v410
    %v1852 = vpop.f32.mrb[0].mxu0
    %v1853 = vadd.f32 %v1762, %v1852
    %v1854 = vpop.f32.mrb[0].mxu0
    %1855 = vdwg.mxu0
    %v1856 = vxor.u32 %v1848, 2147483648
    %v1857 = vxor.u32 %v1853, 2147483648
    %v1858 = vmul.f32 %v1856, 1.442695
    %v1859 = vpow.pop %v1858
    %v1860 = vmul.f32 %v1857, 1.442695
    %v1861 = vpow.pop %v1860
    %v1862 = vadd.f32 %v1859, 1.0
    %v1863 = vadd.f32 %v1861, 1.0
    %v1864 = vrcp.pop %v1862
    %v1865 = vmul.f32 1.0, %v1864
    %v1866 = vrcp.pop %v1863
    %v1867 = vmul.f32 1.0, %v1866
    %v1870 = vmul.f32 %v1865, %v1529
    %v1871 = vmul.f32 %v1867, %v1531
    %v1873 = vsel %vm153, %v1870, 0
    %v1876 = vsel %vm153, %v1871, 0
    %1878 = vmatprep.subr.mxu0 0.0
    %1879 = vmatpush1.msra.mxu0 %v123
    %1880 = vmatprep.subr.mxu0 0.0
    %1881 = vmatpush1.msra.mxu0 %v124
    %1882 = vmatprep.subr.mxu0 0.0
    %1883 = vmatpush1.msra.mxu0 %v125
    %1884 = vmatprep.subr.mxu0 0.0
    %1885 = vmatpush1.msra.mxu0 %v126
    %1886 = vmatprep.subr.mxu0 0.0
    %1887 = vmatpush1.msra.mxu0 0.0
    %1888 = vmatprep.subr.mxu0 0.0
    %1889 = vmatpush1.msra.mxu0 0.0
    %1890 = vmatprep.subr.mxu0 0.0
    %1891 = vmatpush1.msra.mxu0 0.0
    %1892 = vmatprep.subr.mxu0 0.0
    %1893 = vmatpush1.msra.mxu0 0.0
    %1894 = vmatprep.subr.mxu0 0.0
    %1895 = vmatpush1.msra.mxu0 0.0
    %1896 = vmatprep.subr.mxu0 0.0
    %1897 = vmatpush1.msra.mxu0 0.0
    %1898 = vmatprep.subr.mxu0 0.0
    %1899 = vmatpush1.msra.mxu0 0.0
    %1900 = vmatprep.subr.mxu0 0.0
    %1901 = vmatpush1.msra.mxu0 0.0
    %1902 = vmatprep.subr.mxu0 0.0
    %1903 = vmatpush1.msra.mxu0 0.0
    %1904 = vmatprep.subr.mxu0 0.0
    %1905 = vmatpush1.msra.mxu0 0.0
    %1906 = vmatprep.subr.mxu0 0.0
    %1907 = vmatpush1.msra.mxu0 0.0
    %1908 = vmatprep.subr.mxu0 0.0
    %1909 = vmatpush1.msra.mxu0 0.0
    %1910 = vmatprep.subr.mxu0 0.0
    %1911 = vmatpush1.msra.mxu0 0.0
    %1912 = vmatprep.subr.mxu0 0.0
    %1913 = vmatpush1.msra.mxu0 0.0
    %1914 = vmatprep.subr.mxu0 0.0
    %1915 = vmatpush1.msra.mxu0 0.0
    %1916 = vmatprep.subr.mxu0 0.0
    %1917 = vmatpush1.msra.mxu0 0.0
    %1918 = vmatprep.subr.mxu0 0.0
    %1919 = vmatpush1.msra.mxu0 0.0
    %1920 = vmatprep.subr.mxu0 0.0
    %1921 = vmatpush1.msra.mxu0 0.0
    %1922 = vmatprep.subr.mxu0 0.0
    %1923 = vmatpush1.msra.mxu0 0.0
    %1924 = vmatprep.subr.mxu0 0.0
    %1925 = vmatpush1.msra.mxu0 0.0
    %1926 = vmatprep.subr.mxu0 0.0
    %1927 = vmatpush1.msra.mxu0 0.0
    %1928 = vmatprep.subr.mxu0 0.0
    %1929 = vmatpush1.msra.mxu0 0.0
    %1930 = vmatprep.subr.mxu0 0.0
    %1931 = vmatpush1.msra.mxu0 0.0
    %1932 = vmatprep.subr.mxu0 0.0
    %1933 = vmatpush1.msra.mxu0 0.0
    %1934 = vmatprep.subr.mxu0 0.0
    %1935 = vmatpush1.msra.mxu0 0.0
    %1936 = vmatprep.subr.mxu0 0.0
    %1937 = vmatpush1.msra.mxu0 0.0
    %1938 = vmatprep.subr.mxu0 0.0
    %1939 = vmatpush1.msra.mxu0 0.0
    %1940 = vmatprep.subr.mxu0 0.0
    %1941 = vmatpush1.msra.mxu0 0.0
    %1942 = vmatprep.mubr.f32.mxu0 0.0
    %1943 = vmatmul.mubr.f32.gmra.mrb[0].mxu0 %v1873
    %v1944 = vpop.f32.mrb[0].mxu0
    %v1945 = vadd.f32 0.0, %v1944
    %v1946 = vpop.f32.mrb[0].mxu0
    %1947 = vmatprep.mubr.f32.mxu0 0.0
    %1948 = vmatmul.mubr.f32.gmra.mrb[0].mxu0 %v1876
    %v1949 = vpop.f32.mrb[0].mxu0
    %v1950 = vadd.f32 0.0, %v1949
    %v1951 = vpop.f32.mrb[0].mxu0
    %1952 = vdwg.mxu0
    %1955 = vrot.lane.b32.xlu0 %v1945, 64
    %v1956 = vpop.permute.xlu0 %1955
    %1957 = vrot.lane.b32.xlu0 %v1950, 64
    %v1958 = vpop.permute.xlu0 %1957
    %v1961 = vadd.f32 %v1848, %v1956
    %v1962 = vadd.f32 %v1853, %v1958
    %v1963 = vtanh.pop %v1961
    %v1964 = vtanh.pop %v1962
    %v1965 = vsub.f32 1.0, %v1865
    %v1966 = vsub.f32 1.0, %v1867
    %v1967 = vmul.f32 %v1965, %v1524
    %v1968 = vmul.f32 %v1966, %v1525
    %1971 = vrot.lane.b32.xlu0 %v1963, 96
    %v1972 = vpop.permute.xlu0 %1971
    %1973 = vrot.lane.b32.xlu0 %v1964, 96
    %v1974 = vpop.permute.xlu0 %1973
    %v1977 = vmul.f32 %v1865, %v1972
    %v1978 = vmul.f32 %v1867, %v1974
    %v1979 = vadd.f32 %v1967, %v1977
    %v1980 = vadd.f32 %v1968, %v1978
    %1983 = vrot.lane.b32.xlu0 %v1979, 96
    %v1984 = vpop.permute.xlu0 %1983
    %1985 = vrot.lane.b32.xlu0 %v1980, 96
    %v1986 = vpop.permute.xlu0 %1985
    %v1987 = vsel %vm153, %v1984, 0
    %v1989 = vsel %vm153, %v1986, 0
    %1991 = vmatprep.subr.mxu0 %v101
    %1992 = vmatpush1.msra.mxu0 %v100
    %1993 = vmatprep.subr.mxu0 %v106
    %1994 = vmatpush1.msra.mxu0 %v105
    %1995 = vmatprep.subr.mxu0 %v111
    %1996 = vmatpush1.msra.mxu0 %v110
    %1997 = vmatprep.subr.mxu0 %v116
    %1998 = vmatpush1.msra.mxu0 %v115
    %1999 = vmatprep.subr.mxu0 0.0
    %2000 = vmatpush1.msra.mxu0 0.0
    %2001 = vmatprep.subr.mxu0 0.0
    %2002 = vmatpush1.msra.mxu0 0.0
    %2003 = vmatprep.subr.mxu0 0.0
    %2004 = vmatpush1.msra.mxu0 0.0
    %2005 = vmatprep.subr.mxu0 0.0
    %2006 = vmatpush1.msra.mxu0 0.0
    %2007 = vmatprep.subr.mxu0 0.0
    %2008 = vmatpush1.msra.mxu0 0.0
    %2009 = vmatprep.subr.mxu0 0.0
    %2010 = vmatpush1.msra.mxu0 0.0
    %2011 = vmatprep.subr.mxu0 0.0
    %2012 = vmatpush1.msra.mxu0 0.0
    %2013 = vmatprep.subr.mxu0 0.0
    %2014 = vmatpush1.msra.mxu0 0.0
    %2015 = vmatprep.subr.mxu0 0.0
    %2016 = vmatpush1.msra.mxu0 0.0
    %2017 = vmatprep.subr.mxu0 0.0
    %2018 = vmatpush1.msra.mxu0 0.0
    %2019 = vmatprep.subr.mxu0 0.0
    %2020 = vmatpush1.msra.mxu0 0.0
    %2021 = vmatprep.subr.mxu0 0.0
    %2022 = vmatpush1.msra.mxu0 0.0
    %2023 = vmatprep.subr.mxu0 0.0
    %2024 = vmatpush1.msra.mxu0 0.0
    %2025 = vmatprep.subr.mxu0 0.0
    %2026 = vmatpush1.msra.mxu0 0.0
    %2027 = vmatprep.subr.mxu0 0.0
    %2028 = vmatpush1.msra.mxu0 0.0
    %2029 = vmatprep.subr.mxu0 0.0
    %2030 = vmatpush1.msra.mxu0 0.0
    %2031 = vmatprep.subr.mxu0 0.0
    %2032 = vmatpush1.msra.mxu0 0.0
    %2033 = vmatprep.subr.mxu0 0.0
    %2034 = vmatpush1.msra.mxu0 0.0
    %2035 = vmatprep.subr.mxu0 0.0
    %2036 = vmatpush1.msra.mxu0 0.0
    %2037 = vmatprep.subr.mxu0 0.0
    %2038 = vmatpush1.msra.mxu0 0.0
    %2039 = vmatprep.subr.mxu0 0.0
    %2040 = vmatpush1.msra.mxu0 0.0
    %2041 = vmatprep.subr.mxu0 0.0
    %2042 = vmatpush1.msra.mxu0 0.0
    %2043 = vmatprep.subr.mxu0 0.0
    %2044 = vmatpush1.msra.mxu0 0.0
    %2045 = vmatprep.subr.mxu0 0.0
    %2046 = vmatpush1.msra.mxu0 0.0
    %2047 = vmatprep.subr.mxu0 0.0
    %2048 = vmatpush1.msra.mxu0 0.0
    %2049 = vmatprep.subr.mxu0 0.0
    %2050 = vmatpush1.msra.mxu0 0.0
    %2051 = vmatprep.subr.mxu0 0.0
    %2052 = vmatpush1.msra.mxu0 0.0
    %2053 = vmatprep.subr.mxu0 0.0
    %2054 = vmatpush1.msra.mxu0 0.0
    %2055 = vmatprep.mubr.f32.mxu0 0.0
    %2056 = vmatmul.mubr.f32.gmra.mrb[0].mxu0 %v1987
    %v2057 = vpop.f32.mrb[0].mxu0
    %v2058 = vadd.f32 %v131, %v2057
    %v2059 = vpop.f32.mrb[0].mxu0
    %v2060 = vadd.f32 %v135, %v2059
    %2061 = vmatprep.mubr.f32.mxu0 0.0
    %2062 = vmatmul.mubr.f32.gmra.mrb[0].mxu0 %v1989
    %v2063 = vpop.f32.mrb[0].mxu0
    %v2064 = vadd.f32 %v131, %v2063
    %v2065 = vpop.f32.mrb[0].mxu0
    %v2066 = vadd.f32 %v135, %v2065
    %2067 = vdwg.mxu0
    %2068 = vmatprep.subr.mxu0 %v103
    %2069 = vmatpush1.msra.mxu0 %v102
    %2070 = vmatprep.subr.mxu0 %v108
    %2071 = vmatpush1.msra.mxu0 %v107
    %2072 = vmatprep.subr.mxu0 %v113
    %2073 = vmatpush1.msra.mxu0 %v112
    %2074 = vmatprep.subr.mxu0 %v118
    %2075 = vmatpush1.msra.mxu0 %v117
    %2076 = vmatprep.subr.mxu0 0.0
    %2077 = vmatpush1.msra.mxu0 0.0
    %2078 = vmatprep.subr.mxu0 0.0
    %2079 = vmatpush1.msra.mxu0 0.0
    %2080 = vmatprep.subr.mxu0 0.0
    %2081 = vmatpush1.msra.mxu0 0.0
    %2082 = vmatprep.subr.mxu0 0.0
    %2083 = vmatpush1.msra.mxu0 0.0
    %2084 = vmatprep.subr.mxu0 0.0
    %2085 = vmatpush1.msra.mxu0 0.0
    %2086 = vmatprep.subr.mxu0 0.0
    %2087 = vmatpush1.msra.mxu0 0.0
    %2088 = vmatprep.subr.mxu0 0.0
    %2089 = vmatpush1.msra.mxu0 0.0
    %2090 = vmatprep.subr.mxu0 0.0
    %2091 = vmatpush1.msra.mxu0 0.0
    %2092 = vmatprep.subr.mxu0 0.0
    %2093 = vmatpush1.msra.mxu0 0.0
    %2094 = vmatprep.subr.mxu0 0.0
    %2095 = vmatpush1.msra.mxu0 0.0
    %2096 = vmatprep.subr.mxu0 0.0
    %2097 = vmatpush1.msra.mxu0 0.0
    %2098 = vmatprep.subr.mxu0 0.0
    %2099 = vmatpush1.msra.mxu0 0.0
    %2100 = vmatprep.subr.mxu0 0.0
    %2101 = vmatpush1.msra.mxu0 0.0
    %2102 = vmatprep.subr.mxu0 0.0
    %2103 = vmatpush1.msra.mxu0 0.0
    %2104 = vmatprep.subr.mxu0 0.0
    %2105 = vmatpush1.msra.mxu0 0.0
    %2106 = vmatprep.subr.mxu0 0.0
    %2107 = vmatpush1.msra.mxu0 0.0
    %2108 = vmatprep.subr.mxu0 0.0
    %2109 = vmatpush1.msra.mxu0 0.0
    %2110 = vmatprep.subr.mxu0 0.0
    %2111 = vmatpush1.msra.mxu0 0.0
    %2112 = vmatprep.subr.mxu0 0.0
    %2113 = vmatpush1.msra.mxu0 0.0
    %2114 = vmatprep.subr.mxu0 0.0
    %2115 = vmatpush1.msra.mxu0 0.0
    %2116 = vmatprep.subr.mxu0 0.0
    %2117 = vmatpush1.msra.mxu0 0.0
    %2118 = vmatprep.subr.mxu0 0.0
    %2119 = vmatpush1.msra.mxu0 0.0
    %2120 = vmatprep.subr.mxu0 0.0
    %2121 = vmatpush1.msra.mxu0 0.0
    %2122 = vmatprep.subr.mxu0 0.0
    %2123 = vmatpush1.msra.mxu0 0.0
    %2124 = vmatprep.subr.mxu0 0.0
    %2125 = vmatpush1.msra.mxu0 0.0
    %2126 = vmatprep.subr.mxu0 0.0
    %2127 = vmatpush1.msra.mxu0 0.0
    %2128 = vmatprep.subr.mxu0 0.0
    %2129 = vmatpush1.msra.mxu0 0.0
    %2130 = vmatprep.subr.mxu0 0.0
    %2131 = vmatpush1.msra.mxu0 0.0
    %2132 = vmatprep.mubr.f32.mxu0 0.0
    %2133 = vmatmul.mubr.f32.gmra.mrb[0].mxu0 %v1987
    %v2134 = vpop.f32.mrb[0].mxu0
    %v2135 = vadd.f32 %v139, %v2134
    %v2136 = vpop.f32.mrb[0].mxu0
    %v2137 = vadd.f32 %v143, %v2136
    %2138 = vmatprep.mubr.f32.mxu0 0.0
    %2139 = vmatmul.mubr.f32.gmra.mrb[0].mxu0 %v1989
    %v2140 = vpop.f32.mrb[0].mxu0
    %v2141 = vadd.f32 %v139, %v2140
    %v2142 = vpop.f32.mrb[0].mxu0
    %v2143 = vadd.f32 %v143, %v2142
    %2144 = vdwg.mxu0
    %2145 = vmatprep.subr.mxu0 0.0
    %2146 = vmatpush1.msra.mxu0 %v104
    %2147 = vmatprep.subr.mxu0 0.0
    %2148 = vmatpush1.msra.mxu0 %v109
    %2149 = vmatprep.subr.mxu0 0.0
    %2150 = vmatpush1.msra.mxu0 %v114
    %2151 = vmatprep.subr.mxu0 0.0
    %2152 = vmatpush1.msra.mxu0 %v119
    %2153 = vmatprep.subr.mxu0 0.0
    %2154 = vmatpush1.msra.mxu0 0.0
    %2155 = vmatprep.subr.mxu0 0.0
    %2156 = vmatpush1.msra.mxu0 0.0
    %2157 = vmatprep.subr.mxu0 0.0
    %2158 = vmatpush1.msra.mxu0 0.0
    %2159 = vmatprep.subr.mxu0 0.0
    %2160 = vmatpush1.msra.mxu0 0.0
    %2161 = vmatprep.subr.mxu0 0.0
    %2162 = vmatpush1.msra.mxu0 0.0
    %2163 = vmatprep.subr.mxu0 0.0
    %2164 = vmatpush1.msra.mxu0 0.0
    %2165 = vmatprep.subr.mxu0 0.0
    %2166 = vmatpush1.msra.mxu0 0.0
    %2167 = vmatprep.subr.mxu0 0.0
    %2168 = vmatpush1.msra.mxu0 0.0
    %2169 = vmatprep.subr.mxu0 0.0
    %2170 = vmatpush1.msra.mxu0 0.0
    %2171 = vmatprep.subr.mxu0 0.0
    %2172 = vmatpush1.msra.mxu0 0.0
    %2173 = vmatprep.subr.mxu0 0.0
    %2174 = vmatpush1.msra.mxu0 0.0
    %2175 = vmatprep.subr.mxu0 0.0
    %2176 = vmatpush1.msra.mxu0 0.0
    %2177 = vmatprep.subr.mxu0 0.0
    %2178 = vmatpush1.msra.mxu0 0.0
    %2179 = vmatprep.subr.mxu0 0.0
    %2180 = vmatpush1.msra.mxu0 0.0
    %2181 = vmatprep.subr.mxu0 0.0
    %2182 = vmatpush1.msra.mxu0 0.0
    %2183 = vmatprep.subr.mxu0 0.0
    %2184 = vmatpush1.msra.mxu0 0.0
    %2185 = vmatprep.subr.mxu0 0.0
    %2186 = vmatpush1.msra.mxu0 0.0
    %2187 = vmatprep.subr.mxu0 0.0
    %2188 = vmatpush1.msra.mxu0 0.0
    %2189 = vmatprep.subr.mxu0 0.0
    %2190 = vmatpush1.msra.mxu0 0.0
    %2191 = vmatprep.subr.mxu0 0.0
    %2192 = vmatpush1.msra.mxu0 0.0
    %2193 = vmatprep.subr.mxu0 0.0
    %2194 = vmatpush1.msra.mxu0 0.0
    %2195 = vmatprep.subr.mxu0 0.0
    %2196 = vmatpush1.msra.mxu0 0.0
    %2197 = vmatprep.subr.mxu0 0.0
    %2198 = vmatpush1.msra.mxu0 0.0
    %2199 = vmatprep.subr.mxu0 0.0
    %2200 = vmatpush1.msra.mxu0 0.0
    %2201 = vmatprep.subr.mxu0 0.0
    %2202 = vmatpush1.msra.mxu0 0.0
    %2203 = vmatprep.subr.mxu0 0.0
    %2204 = vmatpush1.msra.mxu0 0.0
    %2205 = vmatprep.subr.mxu0 0.0
    %2206 = vmatpush1.msra.mxu0 0.0
    %2207 = vmatprep.subr.mxu0 0.0
    %2208 = vmatpush1.msra.mxu0 0.0
    %2209 = vmatprep.mubr.f32.mxu0 0.0
    %2210 = vmatmul.mubr.f32.gmra.mrb[0].mxu0 %v1987
    %v2211 = vpop.f32.mrb[0].mxu0
    %v2212 = vadd.f32 %v147, %v2211
    %v2213 = vpop.f32.mrb[0].mxu0
    %2214 = vmatprep.mubr.f32.mxu0 0.0
    %2215 = vmatmul.mubr.f32.gmra.mrb[0].mxu0 %v1989
    %v2216 = vpop.f32.mrb[0].mxu0
    %v2217 = vadd.f32 %v147, %v2216
    %v2218 = vpop.f32.mrb[0].mxu0
    %2219 = vdwg.mxu0
    %2220 = vst [vmem:[#allocation2] sm:$0xff] %v2058
    %2221 = vst [vmem:[#allocation2 + $0x8] sm:$0xff] %v2064
    %2222 = vst [vmem:[#allocation2 + $0x10] sm:$0xff] %v2060
    %2223 = vst [vmem:[#allocation2 + $0x18] sm:$0xff] %v2066
    %2224 = vst [vmem:[#allocation2 + $0x20] sm:$0xff] %v2135
    %2225 = vst [vmem:[#allocation2 + $0x28] sm:$0xff] %v2141
    %2226 = vst [vmem:[#allocation2 + $0x30] sm:$0xff] %v2137
    %2227 = vst [vmem:[#allocation2 + $0x38] sm:$0xff] %v2143
    %v2228 = vld [vmem:[#allocation2] sm:$0xff]
    %v2229 = vld [vmem:[#allocation2 + $0x8] sm:$0xff]
    %v2230 = vld [vmem:[#allocation2 + $0x10] sm:$0xff]
    %v2231 = vld [vmem:[#allocation2 + $0x18] sm:$0xff]
    %v2232 = vld [vmem:[#allocation2 + $0x20] sm:$0xff]
    %v2233 = vld [vmem:[#allocation2 + $0x28] sm:$0xff]
    %v2234 = vld [vmem:[#allocation2 + $0x30] sm:$0xff]
    %v2235 = vld [vmem:[#allocation2 + $0x38] sm:$0xff]
    %2236 = vmatprep.subr.mxu0 0.0
    %2237 = vmatpush1.msra.mxu0 %v2228
    %2238 = vmatprep.subr.mxu0 0.0
    %2239 = vmatpush1.msra.mxu0 %v2229
    %2240 = vmatprep.subr.mxu0 0.0
    %2241 = vmatpush1.msra.mxu0 %v2230
    %2242 = vmatprep.subr.mxu0 0.0
    %2243 = vmatpush1.msra.mxu0 %v2231
    %2244 = vmatprep.subr.mxu0 0.0
    %2245 = vmatpush1.msra.mxu0 %v2232
    %2246 = vmatprep.subr.mxu0 0.0
    %2247 = vmatpush1.msra.mxu0 %v2233
    %2248 = vmatprep.subr.mxu0 0.0
    %2249 = vmatpush1.msra.mxu0 %v2234
    %2250 = vmatprep.subr.mxu0 0.0
    %2251 = vmatpush1.msra.mxu0 %v2235
    %2252 = vmatprep.subr.mxu0 0.0
    %2253 = vmatpush1.msra.mxu0 0.0
    %2254 = vmatprep.subr.mxu0 0.0
    %2255 = vmatpush1.msra.mxu0 0.0
    %2256 = vmatprep.subr.mxu0 0.0
    %2257 = vmatpush1.msra.mxu0 0.0
    %2258 = vmatprep.subr.mxu0 0.0
    %2259 = vmatpush1.msra.mxu0 0.0
    %2260 = vmatprep.subr.mxu0 0.0
    %2261 = vmatpush1.msra.mxu0 0.0
    %2262 = vmatprep.subr.mxu0 0.0
    %2263 = vmatpush1.msra.mxu0 0.0
    %2264 = vmatprep.subr.mxu0 0.0
    %2265 = vmatpush1.msra.mxu0 0.0
    %2266 = vmatprep.subr.mxu0 0.0
    %2267 = vmatpush1.msra.mxu0 0.0
    %2268 = vmatprep.subr.mxu0 0.0
    %2269 = vmatpush1.msra.mxu0 0.0
    %2270 = vmatprep.subr.mxu0 0.0
    %2271 = vmatpush1.msra.mxu0 0.0
    %2272 = vmatprep.subr.mxu0 0.0
    %2273 = vmatpush1.msra.mxu0 0.0
    %2274 = vmatprep.subr.mxu0 0.0
    %2275 = vmatpush1.msra.mxu0 0.0
    %2276 = vmatprep.subr.mxu0 0.0
    %2277 = vmatpush1.msra.mxu0 0.0
    %2278 = vmatprep.subr.mxu0 0.0
    %2279 = vmatpush1.msra.mxu0 0.0
    %2280 = vmatprep.subr.mxu0 0.0
    %2281 = vmatpush1.msra.mxu0 0.0
    %2282 = vmatprep.subr.mxu0 0.0
    %2283 = vmatpush1.msra.mxu0 0.0
    %2284 = vmatprep.subr.mxu0 0.0
    %2285 = vmatpush1.msra.mxu0 0.0
    %2286 = vmatprep.subr.mxu0 0.0
    %2287 = vmatpush1.msra.mxu0 0.0
    %2288 = vmatprep.subr.mxu0 0.0
    %2289 = vmatpush1.msra.mxu0 0.0
    %2290 = vmatprep.subr.mxu0 0.0
    %2291 = vmatpush1.msra.mxu0 0.0
    %2292 = vmatprep.subr.mxu0 0.0
    %2293 = vmatpush1.msra.mxu0 0.0
    %2294 = vmatprep.subr.mxu0 0.0
    %2295 = vmatpush1.msra.mxu0 0.0
    %2296 = vmatprep.subr.mxu0 0.0
    %2297 = vmatpush1.msra.mxu0 0.0
    %2298 = vmatprep.subr.mxu0 0.0
    %2299 = vmatpush1.msra.mxu0 0.0
    %2300 = vmatprep.mubr.f32.mxu0 0.0
    %2301 = vmatmul.mubr.f32.gmra.mrb[0].mxu0 %v407
    %v2302 = vpop.f32.mrb[0].mxu0
    %v2303 = vadd.f32 %v2212, %v2302
    %v2304 = vpop.f32.mrb[0].mxu0
    %2305 = vmatprep.mubr.f32.mxu0 0.0
    %2306 = vmatmul.mubr.f32.gmra.mrb[0].mxu0 %v410
    %v2307 = vpop.f32.mrb[0].mxu0
    %v2308 = vadd.f32 %v2217, %v2307
    %v2309 = vpop.f32.mrb[0].mxu0
    %2310 = vdwg.mxu0
    %v2311 = vxor.u32 %v2303, 2147483648
    %v2312 = vxor.u32 %v2308, 2147483648
    %v2313 = vmul.f32 %v2311, 1.442695
    %v2314 = vpow.pop %v2313
    %v2315 = vmul.f32 %v2312, 1.442695
    %v2316 = vpow.pop %v2315
    %v2317 = vadd.f32 %v2314, 1.0
    %v2318 = vadd.f32 %v2316, 1.0
    %v2319 = vrcp.pop %v2317
    %v2320 = vmul.f32 1.0, %v2319
    %v2321 = vrcp.pop %v2318
    %v2322 = vmul.f32 1.0, %v2321
    %v2325 = vmul.f32 %v2320, %v1984
    %v2326 = vmul.f32 %v2322, %v1986
    %v2328 = vsel %vm153, %v2325, 0
    %v2331 = vsel %vm153, %v2326, 0
    %2333 = vmatprep.subr.mxu0 0.0
    %2334 = vmatpush1.msra.mxu0 %v123
    %2335 = vmatprep.subr.mxu0 0.0
    %2336 = vmatpush1.msra.mxu0 %v124
    %2337 = vmatprep.subr.mxu0 0.0
    %2338 = vmatpush1.msra.mxu0 %v125
    %2339 = vmatprep.subr.mxu0 0.0
    %2340 = vmatpush1.msra.mxu0 %v126
    %2341 = vmatprep.subr.mxu0 0.0
    %2342 = vmatpush1.msra.mxu0 0.0
    %2343 = vmatprep.subr.mxu0 0.0
    %2344 = vmatpush1.msra.mxu0 0.0
    %2345 = vmatprep.subr.mxu0 0.0
    %2346 = vmatpush1.msra.mxu0 0.0
    %2347 = vmatprep.subr.mxu0 0.0
    %2348 = vmatpush1.msra.mxu0 0.0
    %2349 = vmatprep.subr.mxu0 0.0
    %2350 = vmatpush1.msra.mxu0 0.0
    %2351 = vmatprep.subr.mxu0 0.0
    %2352 = vmatpush1.msra.mxu0 0.0
    %2353 = vmatprep.subr.mxu0 0.0
    %2354 = vmatpush1.msra.mxu0 0.0
    %2355 = vmatprep.subr.mxu0 0.0
    %2356 = vmatpush1.msra.mxu0 0.0
    %2357 = vmatprep.subr.mxu0 0.0
    %2358 = vmatpush1.msra.mxu0 0.0
    %2359 = vmatprep.subr.mxu0 0.0
    %2360 = vmatpush1.msra.mxu0 0.0
    %2361 = vmatprep.subr.mxu0 0.0
    %2362 = vmatpush1.msra.mxu0 0.0
    %2363 = vmatprep.subr.mxu0 0.0
    %2364 = vmatpush1.msra.mxu0 0.0
    %2365 = vmatprep.subr.mxu0 0.0
    %2366 = vmatpush1.msra.mxu0 0.0
    %2367 = vmatprep.subr.mxu0 0.0
    %2368 = vmatpush1.msra.mxu0 0.0
    %2369 = vmatprep.subr.mxu0 0.0
    %2370 = vmatpush1.msra.mxu0 0.0
    %2371 = vmatprep.subr.mxu0 0.0
    %2372 = vmatpush1.msra.mxu0 0.0
    %2373 = vmatprep.subr.mxu0 0.0
    %2374 = vmatpush1.msra.mxu0 0.0
    %2375 = vmatprep.subr.mxu0 0.0
    %2376 = vmatpush1.msra.mxu0 0.0
    %2377 = vmatprep.subr.mxu0 0.0
    %2378 = vmatpush1.msra.mxu0 0.0
    %2379 = vmatprep.subr.mxu0 0.0
    %2380 = vmatpush1.msra.mxu0 0.0
    %2381 = vmatprep.subr.mxu0 0.0
    %2382 = vmatpush1.msra.mxu0 0.0
    %2383 = vmatprep.subr.mxu0 0.0
    %2384 = vmatpush1.msra.mxu0 0.0
    %2385 = vmatprep.subr.mxu0 0.0
    %2386 = vmatpush1.msra.mxu0 0.0
    %2387 = vmatprep.subr.mxu0 0.0
    %2388 = vmatpush1.msra.mxu0 0.0
    %2389 = vmatprep.subr.mxu0 0.0
    %2390 = vmatpush1.msra.mxu0 0.0
    %2391 = vmatprep.subr.mxu0 0.0
    %2392 = vmatpush1.msra.mxu0 0.0
    %2393 = vmatprep.subr.mxu0 0.0
    %2394 = vmatpush1.msra.mxu0 0.0
    %2395 = vmatprep.subr.mxu0 0.0
    %2396 = vmatpush1.msra.mxu0 0.0
    %2397 = vmatprep.mubr.f32.mxu0 0.0
    %2398 = vmatmul.mubr.f32.gmra.mrb[0].mxu0 %v2328
    %v2399 = vpop.f32.mrb[0].mxu0
    %v2400 = vadd.f32 0.0, %v2399
    %v2401 = vpop.f32.mrb[0].mxu0
    %2402 = vmatprep.mubr.f32.mxu0 0.0
    %2403 = vmatmul.mubr.f32.gmra.mrb[0].mxu0 %v2331
    %v2404 = vpop.f32.mrb[0].mxu0
    %v2405 = vadd.f32 0.0, %v2404
    %v2406 = vpop.f32.mrb[0].mxu0
    %2407 = vdwg.mxu0
    %2410 = vrot.lane.b32.xlu0 %v2400, 64
    %v2411 = vpop.permute.xlu0 %2410
    %2412 = vrot.lane.b32.xlu0 %v2405, 64
    %v2413 = vpop.permute.xlu0 %2412
    %v2416 = vadd.f32 %v2303, %v2411
    %v2417 = vadd.f32 %v2308, %v2413
    %v2418 = vtanh.pop %v2416
    %v2419 = vtanh.pop %v2417
    %v2420 = vsub.f32 1.0, %v2320
    %v2421 = vsub.f32 1.0, %v2322
    %v2422 = vmul.f32 %v2420, %v1979
    %v2423 = vmul.f32 %v2421, %v1980
    %2426 = vrot.lane.b32.xlu0 %v2418, 96
    %v2427 = vpop.permute.xlu0 %2426
    %2428 = vrot.lane.b32.xlu0 %v2419, 96
    %v2429 = vpop.permute.xlu0 %2428
    %v2432 = vmul.f32 %v2320, %v2427
    %v2433 = vmul.f32 %v2322, %v2429
    %v2434 = vadd.f32 %v2422, %v2432
    %v2435 = vadd.f32 %v2423, %v2433
    %v2436 = vld [vmem:[%s8] sm:$0x1]
    %v2437 = vld [vmem:[#allocation10] sm:$0xff]
    %v2438 = vld [vmem:[#allocation10 + $0x8] sm:$0xff]
    %v2439 = vld [vmem:[#allocation10 + $0x10] sm:$0xff]
    %v2440 = vld [vmem:[#allocation10 + $0x18] sm:$0xff]
    %v2441 = vld [vmem:[%s1] sm:$0xff]
    %v2442 = vld [vmem:[%s1 + $0x8] sm:$0xff]
    %v2443 = vld [vmem:[%s7] sm:$0xff]
    %vm2444 = vcmask 64512
    %v2446 = vsel %vm2444, %v2441, 0
    %v2449 = vsel %vm2444, %v2442, 0
    %2451 = vmatprep.subr.mxu0 0.0
    %2452 = vmatpush1.msra.mxu0 %v2443
    %2453 = vmatprep.subr.mxu0 0.0
    %2454 = vmatpush1.msra.mxu0 0.0
    %2455 = vmatprep.subr.mxu0 0.0
    %2456 = vmatpush1.msra.mxu0 0.0
    %2457 = vmatprep.subr.mxu0 0.0
    %2458 = vmatpush1.msra.mxu0 0.0
    %2459 = vmatprep.subr.mxu0 0.0
    %2460 = vmatpush1.msra.mxu0 0.0
    %2461 = vmatprep.subr.mxu0 0.0
    %2462 = vmatpush1.msra.mxu0 0.0
    %2463 = vmatprep.subr.mxu0 0.0
    %2464 = vmatpush1.msra.mxu0 0.0
    %2465 = vmatprep.subr.mxu0 0.0
    %2466 = vmatpush1.msra.mxu0 0.0
    %2467 = vmatprep.subr.mxu0 0.0
    %2468 = vmatpush1.msra.mxu0 0.0
    %2469 = vmatprep.subr.mxu0 0.0
    %2470 = vmatpush1.msra.mxu0 0.0
    %2471 = vmatprep.subr.mxu0 0.0
    %2472 = vmatpush1.msra.mxu0 0.0
    %2473 = vmatprep.subr.mxu0 0.0
    %2474 = vmatpush1.msra.mxu0 0.0
    %2475 = vmatprep.subr.mxu0 0.0
    %2476 = vmatpush1.msra.mxu0 0.0
    %2477 = vmatprep.subr.mxu0 0.0
    %2478 = vmatpush1.msra.mxu0 0.0
    %2479 = vmatprep.subr.mxu0 0.0
    %2480 = vmatpush1.msra.mxu0 0.0
    %2481 = vmatprep.subr.mxu0 0.0
    %2482 = vmatpush1.msra.mxu0 0.0
    %2483 = vmatprep.subr.mxu0 0.0
    %2484 = vmatpush1.msra.mxu0 0.0
    %2485 = vmatprep.subr.mxu0 0.0
    %2486 = vmatpush1.msra.mxu0 0.0
    %2487 = vmatprep.subr.mxu0 0.0
    %2488 = vmatpush1.msra.mxu0 0.0
    %2489 = vmatprep.subr.mxu0 0.0
    %2490 = vmatpush1.msra.mxu0 0.0
    %2491 = vmatprep.subr.mxu0 0.0
    %2492 = vmatpush1.msra.mxu0 0.0
    %2493 = vmatprep.subr.mxu0 0.0
    %2494 = vmatpush1.msra.mxu0 0.0
    %2495 = vmatprep.subr.mxu0 0.0
    %2496 = vmatpush1.msra.mxu0 0.0
    %2497 = vmatprep.subr.mxu0 0.0
    %2498 = vmatpush1.msra.mxu0 0.0
    %2499 = vmatprep.subr.mxu0 0.0
    %2500 = vmatpush1.msra.mxu0 0.0
    %2501 = vmatprep.subr.mxu0 0.0
    %2502 = vmatpush1.msra.mxu0 0.0
    %2503 = vmatprep.subr.mxu0 0.0
    %2504 = vmatpush1.msra.mxu0 0.0
    %2505 = vmatprep.subr.mxu0 0.0
    %2506 = vmatpush1.msra.mxu0 0.0
    %2507 = vmatprep.subr.mxu0 0.0
    %2508 = vmatpush1.msra.mxu0 0.0
    %2509 = vmatprep.subr.mxu0 0.0
    %2510 = vmatpush1.msra.mxu0 0.0
    %2511 = vmatprep.subr.mxu0 0.0
    %2512 = vmatpush1.msra.mxu0 0.0
    %2513 = vmatprep.subr.mxu0 0.0
    %2514 = vmatpush1.msra.mxu0 0.0
    %2515 = vmatprep.mubr.f32.mxu0 0.0
    %2516 = vmatmul.mubr.f32.gmra.mrb[0].mxu0 %v2446
    %v2517 = vpop.f32.mrb[0].mxu0
    %v2518 = vadd.f32 0.0, %v2517
    %v2519 = vpop.f32.mrb[0].mxu0
    %2520 = vmatprep.mubr.f32.mxu0 0.0
    %2521 = vmatmul.mubr.f32.gmra.mrb[0].mxu0 %v2449
    %v2522 = vpop.f32.mrb[0].mxu0
    %v2523 = vadd.f32 0.0, %v2522
    %v2524 = vpop.f32.mrb[0].mxu0
    %2525 = vdwg.mxu0
    %2528 = vrot.lane.b32.xlu0 %v2434, 96
    %v2529 = vpop.permute.xlu0 %2528
    %2530 = vrot.lane.b32.xlu0 %v2435, 96
    %v2531 = vpop.permute.xlu0 %2530
    %v2532 = vsel %vm153, %v2529, 0
    %v2534 = vsel %vm153, %v2531, 0
    %2536 = vmatprep.subr.mxu0 0.0
    %2537 = vmatpush1.msra.mxu0 %v2437
    %2538 = vmatprep.subr.mxu0 0.0
    %2539 = vmatpush1.msra.mxu0 %v2438
    %2540 = vmatprep.subr.mxu0 0.0
    %2541 = vmatpush1.msra.mxu0 %v2439
    %2542 = vmatprep.subr.mxu0 0.0
    %2543 = vmatpush1.msra.mxu0 %v2440
    %2544 = vmatprep.subr.mxu0 0.0
    %2545 = vmatpush1.msra.mxu0 0.0
    %2546 = vmatprep.subr.mxu0 0.0
    %2547 = vmatpush1.msra.mxu0 0.0
    %2548 = vmatprep.subr.mxu0 0.0
    %2549 = vmatpush1.msra.mxu0 0.0
    %2550 = vmatprep.subr.mxu0 0.0
    %2551 = vmatpush1.msra.mxu0 0.0
    %2552 = vmatprep.subr.mxu0 0.0
    %2553 = vmatpush1.msra.mxu0 0.0
    %2554 = vmatprep.subr.mxu0 0.0
    %2555 = vmatpush1.msra.mxu0 0.0
    %2556 = vmatprep.subr.mxu0 0.0
    %2557 = vmatpush1.msra.mxu0 0.0
    %2558 = vmatprep.subr.mxu0 0.0
    %2559 = vmatpush1.msra.mxu0 0.0
    %2560 = vmatprep.subr.mxu0 0.0
    %2561 = vmatpush1.msra.mxu0 0.0
    %2562 = vmatprep.subr.mxu0 0.0
    %2563 = vmatpush1.msra.mxu0 0.0
    %2564 = vmatprep.subr.mxu0 0.0
    %2565 = vmatpush1.msra.mxu0 0.0
    %2566 = vmatprep.subr.mxu0 0.0
    %2567 = vmatpush1.msra.mxu0 0.0
    %2568 = vmatprep.subr.mxu0 0.0
    %2569 = vmatpush1.msra.mxu0 0.0
    %2570 = vmatprep.subr.mxu0 0.0
    %2571 = vmatpush1.msra.mxu0 0.0
    %2572 = vmatprep.subr.mxu0 0.0
    %2573 = vmatpush1.msra.mxu0 0.0
    %2574 = vmatprep.subr.mxu0 0.0
    %2575 = vmatpush1.msra.mxu0 0.0
    %2576 = vmatprep.subr.mxu0 0.0
    %2577 = vmatpush1.msra.mxu0 0.0
    %2578 = vmatprep.subr.mxu0 0.0
    %2579 = vmatpush1.msra.mxu0 0.0
    %2580 = vmatprep.subr.mxu0 0.0
    %2581 = vmatpush1.msra.mxu0 0.0
    %2582 = vmatprep.subr.mxu0 0.0
    %2583 = vmatpush1.msra.mxu0 0.0
    %2584 = vmatprep.subr.mxu0 0.0
    %2585 = vmatpush1.msra.mxu0 0.0
    %2586 = vmatprep.subr.mxu0 0.0
    %2587 = vmatpush1.msra.mxu0 0.0
    %2588 = vmatprep.subr.mxu0 0.0
    %2589 = vmatpush1.msra.mxu0 0.0
    %2590 = vmatprep.subr.mxu0 0.0
    %2591 = vmatpush1.msra.mxu0 0.0
    %2592 = vmatprep.subr.mxu0 0.0
    %2593 = vmatpush1.msra.mxu0 0.0
    %2594 = vmatprep.subr.mxu0 0.0
    %2595 = vmatpush1.msra.mxu0 0.0
    %2596 = vmatprep.subr.mxu0 0.0
    %2597 = vmatpush1.msra.mxu0 0.0
    %2598 = vmatprep.subr.mxu0 0.0
    %2599 = vmatpush1.msra.mxu0 0.0
    %2600 = vmatprep.mubr.f32.mxu0 0.0
    %2601 = vmatmul.mubr.f32.gmra.mrb[0].mxu0 %v2532
    %v2602 = vpop.f32.mrb[0].mxu0
    %v2603 = vadd.f32 %v2518, %v2602
    %v2604 = vpop.f32.mrb[0].mxu0
    %2605 = vmatprep.mubr.f32.mxu0 0.0
    %2606 = vmatmul.mubr.f32.gmra.mrb[0].mxu0 %v2534
    %v2607 = vpop.f32.mrb[0].mxu0
    %v2608 = vadd.f32 %v2523, %v2607
    %v2609 = vpop.f32.mrb[0].mxu0
    %2610 = vdwg.mxu0
    %v2612 = vlaneseq
    %v2613 = vshrl.u32 %v2612, 7
    %v2614 = vsub.s32 0, %v2613
    %v2615 = vrot.slane %v2436, %v2614
    %v2617 = vadd.f32 %v2603, %v2615
    %v2618 = vadd.f32 %v2608, %v2615
    %v2619 = vtanh.pop %v2617
    %v2620 = vtanh.pop %v2618
    %2621 = vrot.lane.b32.xlu0 %v2615, 96
    %v2622 = vpop.permute.xlu0 %2621
    %v2624 = vmul.f32 %v2619, %v2622
    %v2625 = vmul.f32 %v2620, %v2622
    %v2626 = vsel %vm153, %v2624, 0.0
    %2627 = vadd.xlane.f32.xlu0 %v2626
    %v2628 = vpop.xlane.xlu0 %2627
    %v2629 = vsel %vm153, %v2625, 0.0
    %2630 = vadd.xlane.f32.xlu0 %v2629
    %v2631 = vpop.xlane.xlu0 %2630
    %v2632 = vadd.f32 %v2628, %v2615
    %v2633 = vadd.f32 %v2631, %v2615
    %2636 = vrot.lane.b32.xlu0 %v2632, 64
    %v2637 = vpop.permute.xlu0 %2636
    %2638 = vrot.lane.b32.xlu0 %v2633, 64
    %v2639 = vpop.permute.xlu0 %2638
    %vm2642 = vcmask 7168
    %2643 = vst.msk [vmem:[%s9] sm:$0xff] %vm2642, %v2637
    %2644 = vst.msk [vmem:[%s9 + $0x8] sm:$0xff] %vm2642, %v2639
    // Predicated region
    $region58: #{tpu_custom_call.1} parent=1 // pred_check
      _
    $region59: #{tpu_custom_call.1} parent=1 // pred_check_branch
      %2646 = sbr.rel (0) target = $region61
    $region60: #{tpu_custom_call.1} parent=1 // pred_region
      _
    $region61: #{tpu_custom_call.1} parent=1 // pred_fallthru
      _
    // Predicated region
    $region62: #{tpu_custom_call.1} parent=1 // pred_check
      _
    $region63: #{tpu_custom_call.1} parent=1 // pred_check_branch
      %2648 = sbr.rel (0) target = $region65
    $region64: #{tpu_custom_call.1} parent=1 // pred_region
      _
    $region65: #{tpu_custom_call.1} parent=1 // pred_fallthru
      _
    %2649 = vsyncpa [#allocation4], 1
    %2650 = vsyncpa [#allocation6], 1
    %2651 = vsyncpa [#allocation9], 1

</llo_original>
